<compile_context>
chip_gen: v7x
topology: tpu7x:2x2x1
jax: 0.10.0
libtpu: 0.0.40
codegen_flags: <defaults>
</compile_context>

<pallas_src>
import jax
import jax.numpy as jnp
from jax.experimental import pallas as pl
from jax.experimental.pallas import tpu as pltpu


# ----------------------------------------------------------------------------
# Fused kernel: LSTM layer 1 + LSTM layer 2 (wavefront) -> Linear head, in VMEM.
# ----------------------------------------------------------------------------
def _tls_lstm_kernel(
    x_ref,       # (T*B, I)   time-major flattened input
    wih1_ref,    # (I, 4H)
    whh1_ref,    # (H, 4H)
    b1_ref,      # (1, 4H)    b_ih + b_hh of layer 1
    w2_ref,      # (2H, 4H)   [W_ih2; W_hh2] packed (one K=2H dot per step)
    b2_ref,      # (1, 4H)    b_ih + b_hh of layer 2
    wfc_ref,     # (H, O)
    bfc_ref,     # (1, O)
    out_ref,     # (B, O)     final output
    gx_scr,      # VMEM (T*B, 4H)  precomputed layer-1 input projections
):
    TB, G = gx_scr.shape
    H = G // 4
    B = out_ref.shape[0]
    T = TB // B
    f32 = jnp.float32

    def gate_math(gates, c_prev):
        # PyTorch gate ordering: i, f, g, o (lane-aligned slices when H % 128 == 0)
        i_g = jax.nn.sigmoid(gates[:, 0 * H:1 * H])
        f_g = jax.nn.sigmoid(gates[:, 1 * H:2 * H])
        g_g = jnp.tanh(gates[:, 2 * H:3 * H])
        o_g = jax.nn.sigmoid(gates[:, 3 * H:4 * H])
        c_new = f_g * c_prev + i_g * g_g
        h_new = o_g * jnp.tanh(c_new)
        return h_new, c_new

    # ---- Layer 1 input projection: ONE batched MXU matmul, ONE scratch store ----
    gx_scr[...] = (jnp.dot(x_ref[...], wih1_ref[...], preferred_element_type=f32)
                   + b1_ref[...])

    def gx(t):
        if isinstance(t, int):
            start = t * B
        else:
            start = pl.multiple_of(t * B, B)
        return gx_scr[pl.ds(start, B), :]

    def l1_step(t, h1, c1):
        # One recurrent dot; input projection + bias already in gx.
        gates = gx(t) + jnp.dot(h1, whh1_ref[...], preferred_element_type=f32)
        return gate_math(gates, c1)

    def l2_step(h1_in, h2, c2):
        # Fused input+recurrent projection: single K=2H dot.
        cat = jnp.concatenate([h1_in, h2], axis=-1)          # (B, 2H)
        gates = (jnp.dot(cat, w2_ref[...], preferred_element_type=f32)
                 + b2_ref[...])
        return gate_math(gates, c2)

    zeros = jnp.zeros((B, H), f32)

    # ---- Wavefront-fused recurrences ----
    #   prologue : layer-1 step 0
    #   iter t   : layer-2 step t-1 (uses carried h1_{t-1})  +  layer-1 step t
    #              (the two steps are independent -> they overlap on MXU/EUP)
    #   epilogue : layer-2 step T-1
    h1, c1 = l1_step(0, zeros, zeros)
    h2, c2 = zeros, zeros

    def body(t, carry):
        h1, c1, h2, c2 = carry
        h2n, c2n = l2_step(h1, h2, c2)     # layer-2 step t-1 (reads h1_{t-1})
        h1n, c1n = l1_step(t, h1, c1)      # layer-1 step t   (independent)
        return (h1n, c1n, h2n, c2n)

    unroll = max(1, min(T - 1, 8))
    h1, c1, h2, c2 = jax.lax.fori_loop(1, T, body, (h1, c1, h2, c2),
                                       unroll=unroll)

    h2, c2 = l2_step(h1, h2, c2)           # layer-2 step T-1

    # ---- FC head on the final hidden state only (fused; no extra launch) ----
    out_ref[...] = (jnp.dot(h2, wfc_ref[...], preferred_element_type=f32)
                    + bfc_ref[...])


# ----------------------------------------------------------------------------
# Wrapper: single pallas_call, everything resident in VMEM.
# ----------------------------------------------------------------------------
def tls_lstm_forward(x_bti, params):
    """x_bti: (B, T, I) float32 -> (B, output_size) float32."""
    B, T, I = x_bti.shape
    H = params["w_hh1"].shape[0]
    O = params["w_fc"].shape[1]

    # Time-major flatten (tiny one-time op) so the kernel can do one batched
    # input-projection matmul and address per-timestep rows with pl.ds slices.
    x_flat = jnp.transpose(x_bti, (1, 0, 2)).reshape(T * B, I).astype(jnp.float32)

    # Pack layer-2 weights: gates2 = [h1_t, h2_prev] @ [[W_ih2], [W_hh2]] + b2.
    w2 = jnp.concatenate([params["w_ih2"], params["w_hh2"]], axis=0)  # (2H, 4H)

    def resident(shape):
        nd = len(shape)
        return pl.BlockSpec(shape, lambda i, _nd=nd: (0,) * _nd)

    grid_spec = pltpu.PrefetchScalarGridSpec(
        num_scalar_prefetch=0,
        grid=(1,),                                   # single fused invocation
        in_specs=[
            resident((T * B, I)),                    # x (resident)
            resident((I, 4 * H)),                    # W_ih1^T
            resident((H, 4 * H)),                    # W_hh1^T
            resident((1, 4 * H)),                    # b1
            resident((2 * H, 4 * H)),                # [W_ih2; W_hh2]^T
            resident((1, 4 * H)),                    # b2
            resident((H, O)),                        # W_fc^T
            resident((1, O)),                        # b_fc
        ],
        out_specs=pl.BlockSpec((B, O), lambda i: (0, 0)),
        scratch_shapes=[
            pltpu.VMEM((T * B, 4 * H), jnp.float32),  # layer-1 gate projections
        ],
    )

    return pl.pallas_call(
        _tls_lstm_kernel,
        out_shape=jax.ShapeDtypeStruct((B, O), jnp.float32),
        grid_spec=grid_spec,
        compiler_params=pltpu.CompilerParams(
            dimension_semantics=("arbitrary",),
            vmem_limit_bytes=48 * 1024 * 1024,
        ),
    )(x_flat,
      params["w_ih1"], params["w_hh1"], params["b1"],
      w2, params["b2"],
      params["w_fc"], params["b_fc"])


# ----------------------------------------------------------------------------
# Parameter init (deterministic, PyTorch-style uniform(-1/sqrt(H), 1/sqrt(H)))
# Weights are stored pre-transposed relative to PyTorch: (in_features, 4H)/(H, O).
# ----------------------------------------------------------------------------
def init_params(key, input_size, hidden_size, output_size):
    H = hidden_size
    k = 1.0 / jnp.sqrt(jnp.float32(H))
    keys = jax.random.split(key, 10)

    def u(k_, shape):
        return jax.random.uniform(k_, shape, jnp.float32, -k, k)

    return {
        "w_ih1": u(keys[0], (input_size, 4 * H)),
        "w_hh1": u(keys[1], (H, 4 * H)),
        "b1": u(keys[2], (1, 4 * H)) + u(keys[3], (1, 4 * H)),   # b_ih + b_hh
        "w_ih2": u(keys[4], (H, 4 * H)),
        "w_hh2": u(keys[5], (H, 4 * H)),
        "b2": u(keys[6], (1, 4 * H)) + u(keys[7], (1, 4 * H)),
        "w_fc": u(keys[8], (H, output_size)),
        "b_fc": u(keys[9], (1, output_size)),
    }


# ----------------------------------------------------------------------------
# Pure-JAX reference (same math, scan-based) for a silent correctness check.
# ----------------------------------------------------------------------------
def _reference_forward(x_bti, params):
    B, T, I = x_bti.shape
    H = params["w_hh1"].shape[0]

    def lstm(x_tbi, wih, whh, b):
        def step(carry, x_t):
            h, c = carry
            g = x_t @ wih + h @ whh + b
            i_g = jax.nn.sigmoid(g[:, :H])
            f_g = jax.nn.sigmoid(g[:, H:2 * H])
            g_g = jnp.tanh(g[:, 2 * H:3 * H])
            o_g = jax.nn.sigmoid(g[:, 3 * H:])
            c = f_g * c + i_g * g_g
            h = o_g * jnp.tanh(c)
            return (h, c), h
        init = (jnp.zeros((B, H), jnp.float32), jnp.zeros((B, H), jnp.float32))
        _, hs = jax.lax.scan(step, init, x_tbi)
        return hs

    x_tbi = jnp.transpose(x_bti, (1, 0, 2)).astype(jnp.float32)
    h1 = lstm(x_tbi, params["w_ih1"], params["w_hh1"], params["b1"])
    h2 = lstm(h1, params["w_ih2"], params["w_hh2"], params["b2"])
    return h2[-1] @ params["w_fc"] + params["b_fc"]


if __name__ == "__main__":
    # Small demo shapes: B=8 fills the f32 sublane tile, H=128 makes gate
    # slices lane-tile aligned (PyTorch default H=512 is also aligned).
    B, T, I, H, O = 8, 8, 2, 128, 1

    key = jax.random.PRNGKey(0)
    k_x, k_p = jax.random.split(key)

    x = jax.random.normal(k_x, (B, T, I), jnp.float32)
    params = init_params(k_p, input_size=I, hidden_size=H, output_size=O)

    out = jax.block_until_ready(jax.jit(tls_lstm_forward)(x, params))
    assert out.shape == (B, O), out.shape

    ref = jax.block_until_ready(_reference_forward(x, params))
    max_err = float(jnp.max(jnp.abs(out - ref)))
    assert jnp.allclose(out, ref, atol=1e-4, rtol=1e-4), max_err

    print("KERNEL_OK")
</pallas_src>

<mosaic_0001>
module attributes {stable_mosaic.version = 11 : i64} {
  func.func @_tls_lstm_kernel(%arg0: i32, %arg1: memref<64x2xf32, #tpu.memory_space<vmem>>, %arg2: memref<2x512xf32, #tpu.memory_space<vmem>>, %arg3: memref<128x512xf32, #tpu.memory_space<vmem>>, %arg4: memref<1x512xf32, #tpu.memory_space<vmem>>, %arg5: memref<256x512xf32, #tpu.memory_space<vmem>>, %arg6: memref<1x512xf32, #tpu.memory_space<vmem>>, %arg7: memref<128x1xf32, #tpu.memory_space<vmem>>, %arg8: memref<1x1xf32, #tpu.memory_space<vmem>>, %arg9: memref<8x1xf32, #tpu.memory_space<vmem>>, %arg10: memref<64x512xf32, #tpu.memory_space<vmem>>) attributes {dimension_semantics = [#tpu.dimension_semantics<arbitrary>], iteration_bounds = array<i64: 1>, scalar_prefetch = 0 : i64, scratch_operands = 1 : i64, tpu.core_type = #tpu.core_type<tc>, window_params = [{pipeline_mode = #tpu.pipeline_mode<synchronous>, transform_indices = @transform_0, window_bounds = array<i64: 64, 2>}, {pipeline_mode = #tpu.pipeline_mode<synchronous>, transform_indices = @transform_1, window_bounds = array<i64: 2, 512>}, {pipeline_mode = #tpu.pipeline_mode<synchronous>, transform_indices = @transform_2, window_bounds = array<i64: 128, 512>}, {pipeline_mode = #tpu.pipeline_mode<synchronous>, transform_indices = @transform_3, window_bounds = array<i64: 1, 512>}, {pipeline_mode = #tpu.pipeline_mode<synchronous>, transform_indices = @transform_4, window_bounds = array<i64: 256, 512>}, {pipeline_mode = #tpu.pipeline_mode<synchronous>, transform_indices = @transform_5, window_bounds = array<i64: 1, 512>}, {pipeline_mode = #tpu.pipeline_mode<synchronous>, transform_indices = @transform_6, window_bounds = array<i64: 128, 1>}, {pipeline_mode = #tpu.pipeline_mode<synchronous>, transform_indices = @transform_7, window_bounds = array<i64: 1, 1>}, {pipeline_mode = #tpu.pipeline_mode<synchronous>, transform_indices = @transform_8, window_bounds = array<i64: 8, 1>}]} {
    %c0 = arith.constant 0 : index
    %c0_0 = arith.constant 0 : index
    %0 = vector.load %arg1[%c0, %c0_0] : memref<64x2xf32, #tpu.memory_space<vmem>>, vector<64x2xf32>
    %c0_1 = arith.constant 0 : index
    %c0_2 = arith.constant 0 : index
    %1 = vector.load %arg2[%c0_1, %c0_2] : memref<2x512xf32, #tpu.memory_space<vmem>>, vector<2x512xf32>
    %cst = arith.constant dense<0.000000e+00> : vector<64x512xf32>
    %2 = tpu.matmul %0, %1, %cst {dimension_numbers = #tpu.dot_dimension_numbers<[1], [0], [0], [1], [0, 0, 1, 1], [], []>} : vector<64x2xf32>, vector<2x512xf32>, vector<64x512xf32> -> vector<64x512xf32>
    %c0_3 = arith.constant 0 : index
    %c0_4 = arith.constant 0 : index
    %3 = vector.load %arg4[%c0_3, %c0_4] : memref<1x512xf32, #tpu.memory_space<vmem>>, vector<1x512xf32>
    %4 = vector.broadcast %3 : vector<1x512xf32> to vector<64x512xf32>
    %5 = arith.addf %2, %4 : vector<64x512xf32>
    %c0_5 = arith.constant 0 : index
    %c0_6 = arith.constant 0 : index
    %6 = vector.load %arg10[%c0_5, %c0_6] : memref<64x512xf32, #tpu.memory_space<vmem>>, vector<64x512xf32>
    tpu.vector_store %arg10[%c0_5, %c0_6], %5 {strides = array<i32>} : memref<64x512xf32, #tpu.memory_space<vmem>>, vector<64x512xf32>,
    %cst_7 = arith.constant 0.000000e+00 : f32
    %7 = vector.broadcast %cst_7 : f32 to vector<8x128xf32>
    %c0_8 = arith.constant 0 : index
    %c0_9 = arith.constant 0 : index
    %8 = vector.load %arg10[%c0_8, %c0_9] : memref<64x512xf32, #tpu.memory_space<vmem>>, vector<8x512xf32>
    %c0_10 = arith.constant 0 : index
    %c0_11 = arith.constant 0 : index
    %9 = vector.load %arg3[%c0_10, %c0_11] : memref<128x512xf32, #tpu.memory_space<vmem>>, vector<128x512xf32>
    %cst_12 = arith.constant dense<0.000000e+00> : vector<8x512xf32>
    %10 = tpu.matmul %7, %9, %cst_12 {dimension_numbers = #tpu.dot_dimension_numbers<[1], [0], [0], [1], [0, 0, 1, 1], [], []>} : vector<8x128xf32>, vector<128x512xf32>, vector<8x512xf32> -> vector<8x512xf32>
    %11 = arith.addf %8, %10 : vector<8x512xf32>
    %12 = vector.extract_strided_slice %11 {offsets = [0, 0], sizes = [8, 128], strides = [1, 1]} : vector<8x512xf32> to vector<8x128xf32>
    %13 = arith.negf %12 : vector<8x128xf32>
    %14 = math.exp %13 : vector<8x128xf32>
    %cst_13 = arith.constant 1.000000e+00 : f32
    %15 = vector.broadcast %cst_13 : f32 to vector<8x128xf32>
    %16 = arith.addf %15, %14 : vector<8x128xf32>
    %17 = arith.divf %15, %16 : vector<8x128xf32>
    %18 = vector.extract_strided_slice %11 {offsets = [0, 128], sizes = [8, 128], strides = [1, 1]} : vector<8x512xf32> to vector<8x128xf32>
    %19 = arith.negf %18 : vector<8x128xf32>
    %20 = math.exp %19 : vector<8x128xf32>
    %cst_14 = arith.constant 1.000000e+00 : f32
    %21 = vector.broadcast %cst_14 : f32 to vector<8x128xf32>
    %22 = arith.addf %21, %20 : vector<8x128xf32>
    %23 = arith.divf %21, %22 : vector<8x128xf32>
    %24 = vector.extract_strided_slice %11 {offsets = [0, 256], sizes = [8, 128], strides = [1, 1]} : vector<8x512xf32> to vector<8x128xf32>
    %25 = math.tanh %24 : vector<8x128xf32>
    %26 = vector.extract_strided_slice %11 {offsets = [0, 384], sizes = [8, 128], strides = [1, 1]} : vector<8x512xf32> to vector<8x128xf32>
    %27 = arith.negf %26 : vector<8x128xf32>
    %28 = math.exp %27 : vector<8x128xf32>
    %cst_15 = arith.constant 1.000000e+00 : f32
    %29 = vector.broadcast %cst_15 : f32 to vector<8x128xf32>
    %30 = arith.addf %29, %28 : vector<8x128xf32>
    %31 = arith.divf %29, %30 : vector<8x128xf32>
    %32 = arith.mulf %23, %7 : vector<8x128xf32>
    %33 = arith.mulf %17, %25 : vector<8x128xf32>
    %34 = arith.addf %32, %33 : vector<8x128xf32>
    %35 = math.tanh %34 : vector<8x128xf32>
    %36 = arith.mulf %31, %35 : vector<8x128xf32>
    %c1_i32 = arith.constant 1 : i32
    %37 = tpu.concatenate %36, %7 in 1 : vector<8x128xf32>, vector<8x128xf32> -> vector<8x256xf32>
    %c0_16 = arith.constant 0 : index
    %c0_17 = arith.constant 0 : index
    %38 = vector.load %arg5[%c0_16, %c0_17] : memref<256x512xf32, #tpu.memory_space<vmem>>, vector<256x512xf32>
    %cst_18 = arith.constant dense<0.000000e+00> : vector<8x512xf32>
    %39 = tpu.matmul %37, %38, %cst_18 {dimension_numbers = #tpu.dot_dimension_numbers<[1], [0], [0], [1], [0, 0, 1, 1], [], []>} : vector<8x256xf32>, vector<256x512xf32>, vector<8x512xf32> -> vector<8x512xf32>
    %c0_19 = arith.constant 0 : index
    %c0_20 = arith.constant 0 : index
    %40 = vector.load %arg6[%c0_19, %c0_20] : memref<1x512xf32, #tpu.memory_space<vmem>>, vector<1x512xf32>
    %41 = vector.broadcast %40 : vector<1x512xf32> to vector<8x512xf32>
    %42 = arith.addf %39, %41 : vector<8x512xf32>
    %43 = vector.extract_strided_slice %42 {offsets = [0, 0], sizes = [8, 128], strides = [1, 1]} : vector<8x512xf32> to vector<8x128xf32>
    %44 = arith.negf %43 : vector<8x128xf32>
    %45 = math.exp %44 : vector<8x128xf32>
    %cst_21 = arith.constant 1.000000e+00 : f32
    %46 = vector.broadcast %cst_21 : f32 to vector<8x128xf32>
    %47 = arith.addf %46, %45 : vector<8x128xf32>
    %48 = arith.divf %46, %47 : vector<8x128xf32>
    %49 = vector.extract_strided_slice %42 {offsets = [0, 128], sizes = [8, 128], strides = [1, 1]} : vector<8x512xf32> to vector<8x128xf32>
    %50 = arith.negf %49 : vector<8x128xf32>
    %51 = math.exp %50 : vector<8x128xf32>
    %cst_22 = arith.constant 1.000000e+00 : f32
    %52 = vector.broadcast %cst_22 : f32 to vector<8x128xf32>
    %53 = arith.addf %52, %51 : vector<8x128xf32>
    %54 = arith.divf %52, %53 : vector<8x128xf32>
    %55 = vector.extract_strided_slice %42 {offsets = [0, 256], sizes = [8, 128], strides = [1, 1]} : vector<8x512xf32> to vector<8x128xf32>
    %56 = math.tanh %55 : vector<8x128xf32>
    %57 = vector.extract_strided_slice %42 {offsets = [0, 384], sizes = [8, 128], strides = [1, 1]} : vector<8x512xf32> to vector<8x128xf32>
    %58 = arith.negf %57 : vector<8x128xf32>
    %59 = math.exp %58 : vector<8x128xf32>
    %cst_23 = arith.constant 1.000000e+00 : f32
    %60 = vector.broadcast %cst_23 : f32 to vector<8x128xf32>
    %61 = arith.addf %60, %59 : vector<8x128xf32>
    %62 = arith.divf %60, %61 : vector<8x128xf32>
    %63 = arith.mulf %54, %7 : vector<8x128xf32>
    %64 = arith.mulf %48, %56 : vector<8x128xf32>
    %65 = arith.addf %63, %64 : vector<8x128xf32>
    %66 = math.tanh %65 : vector<8x128xf32>
    %67 = arith.mulf %62, %66 : vector<8x128xf32>
    %c8_i32 = arith.constant 8 : i32
    %68 = arith.muli %c1_i32, %c8_i32 : i32
    %69 = tpu.assume_multiple %68, 8 : i32
    %70 = arith.index_cast %69 : i32 to index
    %c0_24 = arith.constant 0 : index
    %71 = vector.load %arg10[%70, %c0_24] : memref<64x512xf32, #tpu.memory_space<vmem>>, vector<8x512xf32>
    %c0_25 = arith.constant 0 : index
    %c0_26 = arith.constant 0 : index
    %72 = vector.load %arg3[%c0_25, %c0_26] : memref<128x512xf32, #tpu.memory_space<vmem>>, vector<128x512xf32>
    %cst_27 = arith.constant dense<0.000000e+00> : vector<8x512xf32>
    %73 = tpu.matmul %36, %72, %cst_27 {dimension_numbers = #tpu.dot_dimension_numbers<[1], [0], [0], [1], [0, 0, 1, 1], [], []>} : vector<8x128xf32>, vector<128x512xf32>, vector<8x512xf32> -> vector<8x512xf32>
    %74 = arith.addf %71, %73 : vector<8x512xf32>
    %75 = vector.extract_strided_slice %74 {offsets = [0, 0], sizes = [8, 128], strides = [1, 1]} : vector<8x512xf32> to vector<8x128xf32>
    %76 = arith.negf %75 : vector<8x128xf32>
    %77 = math.exp %76 : vector<8x128xf32>
    %cst_28 = arith.constant 1.000000e+00 : f32
    %78 = vector.broadcast %cst_28 : f32 to vector<8x128xf32>
    %79 = arith.addf %78, %77 : vector<8x128xf32>
    %80 = arith.divf %78, %79 : vector<8x128xf32>
    %81 = vector.extract_strided_slice %74 {offsets = [0, 128], sizes = [8, 128], strides = [1, 1]} : vector<8x512xf32> to vector<8x128xf32>
    %82 = arith.negf %81 : vector<8x128xf32>
    %83 = math.exp %82 : vector<8x128xf32>
    %cst_29 = arith.constant 1.000000e+00 : f32
    %84 = vector.broadcast %cst_29 : f32 to vector<8x128xf32>
    %85 = arith.addf %84, %83 : vector<8x128xf32>
    %86 = arith.divf %84, %85 : vector<8x128xf32>
    %87 = vector.extract_strided_slice %74 {offsets = [0, 256], sizes = [8, 128], strides = [1, 1]} : vector<8x512xf32> to vector<8x128xf32>
    %88 = math.tanh %87 : vector<8x128xf32>
    %89 = vector.extract_strided_slice %74 {offsets = [0, 384], sizes = [8, 128], strides = [1, 1]} : vector<8x512xf32> to vector<8x128xf32>
    %90 = arith.negf %89 : vector<8x128xf32>
    %91 = math.exp %90 : vector<8x128xf32>
    %cst_30 = arith.constant 1.000000e+00 : f32
    %92 = vector.broadcast %cst_30 : f32 to vector<8x128xf32>
    %93 = arith.addf %92, %91 : vector<8x128xf32>
    %94 = arith.divf %92, %93 : vector<8x128xf32>
    %95 = arith.mulf %86, %34 : vector<8x128xf32>
    %96 = arith.mulf %80, %88 : vector<8x128xf32>
    %97 = arith.addf %95, %96 : vector<8x128xf32>
    %98 = math.tanh %97 : vector<8x128xf32>
    %99 = arith.mulf %94, %98 : vector<8x128xf32>
    %c2_i32 = arith.constant 2 : i32
    %100 = tpu.concatenate %99, %67 in 1 : vector<8x128xf32>, vector<8x128xf32> -> vector<8x256xf32>
    %c0_31 = arith.constant 0 : index
    %c0_32 = arith.constant 0 : index
    %101 = vector.load %arg5[%c0_31, %c0_32] : memref<256x512xf32, #tpu.memory_space<vmem>>, vector<256x512xf32>
    %cst_33 = arith.constant dense<0.000000e+00> : vector<8x512xf32>
    %102 = tpu.matmul %100, %101, %cst_33 {dimension_numbers = #tpu.dot_dimension_numbers<[1], [0], [0], [1], [0, 0, 1, 1], [], []>} : vector<8x256xf32>, vector<256x512xf32>, vector<8x512xf32> -> vector<8x512xf32>
    %c0_34 = arith.constant 0 : index
    %c0_35 = arith.constant 0 : index
    %103 = vector.load %arg6[%c0_34, %c0_35] : memref<1x512xf32, #tpu.memory_space<vmem>>, vector<1x512xf32>
    %104 = vector.broadcast %103 : vector<1x512xf32> to vector<8x512xf32>
    %105 = arith.addf %102, %104 : vector<8x512xf32>
    %106 = vector.extract_strided_slice %105 {offsets = [0, 0], sizes = [8, 128], strides = [1, 1]} : vector<8x512xf32> to vector<8x128xf32>
    %107 = arith.negf %106 : vector<8x128xf32>
    %108 = math.exp %107 : vector<8x128xf32>
    %cst_36 = arith.constant 1.000000e+00 : f32
    %109 = vector.broadcast %cst_36 : f32 to vector<8x128xf32>
    %110 = arith.addf %109, %108 : vector<8x128xf32>
    %111 = arith.divf %109, %110 : vector<8x128xf32>
    %112 = vector.extract_strided_slice %105 {offsets = [0, 128], sizes = [8, 128], strides = [1, 1]} : vector<8x512xf32> to vector<8x128xf32>
    %113 = arith.negf %112 : vector<8x128xf32>
    %114 = math.exp %113 : vector<8x128xf32>
    %cst_37 = arith.constant 1.000000e+00 : f32
    %115 = vector.broadcast %cst_37 : f32 to vector<8x128xf32>
    %116 = arith.addf %115, %114 : vector<8x128xf32>
    %117 = arith.divf %115, %116 : vector<8x128xf32>
    %118 = vector.extract_strided_slice %105 {offsets = [0, 256], sizes = [8, 128], strides = [1, 1]} : vector<8x512xf32> to vector<8x128xf32>
    %119 = math.tanh %118 : vector<8x128xf32>
    %120 = vector.extract_strided_slice %105 {offsets = [0, 384], sizes = [8, 128], strides = [1, 1]} : vector<8x512xf32> to vector<8x128xf32>
    %121 = arith.negf %120 : vector<8x128xf32>
    %122 = math.exp %121 : vector<8x128xf32>
    %cst_38 = arith.constant 1.000000e+00 : f32
    %123 = vector.broadcast %cst_38 : f32 to vector<8x128xf32>
    %124 = arith.addf %123, %122 : vector<8x128xf32>
    %125 = arith.divf %123, %124 : vector<8x128xf32>
    %126 = arith.mulf %117, %65 : vector<8x128xf32>
    %127 = arith.mulf %111, %119 : vector<8x128xf32>
    %128 = arith.addf %126, %127 : vector<8x128xf32>
    %129 = math.tanh %128 : vector<8x128xf32>
    %130 = arith.mulf %125, %129 : vector<8x128xf32>
    %c8_i32_39 = arith.constant 8 : i32
    %131 = arith.muli %c2_i32, %c8_i32_39 : i32
    %132 = tpu.assume_multiple %131, 8 : i32
    %133 = arith.index_cast %132 : i32 to index
    %c0_40 = arith.constant 0 : index
    %134 = vector.load %arg10[%133, %c0_40] : memref<64x512xf32, #tpu.memory_space<vmem>>, vector<8x512xf32>
    %c0_41 = arith.constant 0 : index
    %c0_42 = arith.constant 0 : index
    %135 = vector.load %arg3[%c0_41, %c0_42] : memref<128x512xf32, #tpu.memory_space<vmem>>, vector<128x512xf32>
    %cst_43 = arith.constant dense<0.000000e+00> : vector<8x512xf32>
    %136 = tpu.matmul %99, %135, %cst_43 {dimension_numbers = #tpu.dot_dimension_numbers<[1], [0], [0], [1], [0, 0, 1, 1], [], []>} : vector<8x128xf32>, vector<128x512xf32>, vector<8x512xf32> -> vector<8x512xf32>
    %137 = arith.addf %134, %136 : vector<8x512xf32>
    %138 = vector.extract_strided_slice %137 {offsets = [0, 0], sizes = [8, 128], strides = [1, 1]} : vector<8x512xf32> to vector<8x128xf32>
    %139 = arith.negf %138 : vector<8x128xf32>
    %140 = math.exp %139 : vector<8x128xf32>
    %cst_44 = arith.constant 1.000000e+00 : f32
    %141 = vector.broadcast %cst_44 : f32 to vector<8x128xf32>
    %142 = arith.addf %141, %140 : vector<8x128xf32>
    %143 = arith.divf %141, %142 : vector<8x128xf32>
    %144 = vector.extract_strided_slice %137 {offsets = [0, 128], sizes = [8, 128], strides = [1, 1]} : vector<8x512xf32> to vector<8x128xf32>
    %145 = arith.negf %144 : vector<8x128xf32>
    %146 = math.exp %145 : vector<8x128xf32>
    %cst_45 = arith.constant 1.000000e+00 : f32
    %147 = vector.broadcast %cst_45 : f32 to vector<8x128xf32>
    %148 = arith.addf %147, %146 : vector<8x128xf32>
    %149 = arith.divf %147, %148 : vector<8x128xf32>
    %150 = vector.extract_strided_slice %137 {offsets = [0, 256], sizes = [8, 128], strides = [1, 1]} : vector<8x512xf32> to vector<8x128xf32>
    %151 = math.tanh %150 : vector<8x128xf32>
    %152 = vector.extract_strided_slice %137 {offsets = [0, 384], sizes = [8, 128], strides = [1, 1]} : vector<8x512xf32> to vector<8x128xf32>
    %153 = arith.negf %152 : vector<8x128xf32>
    %154 = math.exp %153 : vector<8x128xf32>
    %cst_46 = arith.constant 1.000000e+00 : f32
    %155 = vector.broadcast %cst_46 : f32 to vector<8x128xf32>
    %156 = arith.addf %155, %154 : vector<8x128xf32>
    %157 = arith.divf %155, %156 : vector<8x128xf32>
    %158 = arith.mulf %149, %97 : vector<8x128xf32>
    %159 = arith.mulf %143, %151 : vector<8x128xf32>
    %160 = arith.addf %158, %159 : vector<8x128xf32>
    %161 = math.tanh %160 : vector<8x128xf32>
    %162 = arith.mulf %157, %161 : vector<8x128xf32>
    %c3_i32 = arith.constant 3 : i32
    %163 = tpu.concatenate %162, %130 in 1 : vector<8x128xf32>, vector<8x128xf32> -> vector<8x256xf32>
    %c0_47 = arith.constant 0 : index
    %c0_48 = arith.constant 0 : index
    %164 = vector.load %arg5[%c0_47, %c0_48] : memref<256x512xf32, #tpu.memory_space<vmem>>, vector<256x512xf32>
    %cst_49 = arith.constant dense<0.000000e+00> : vector<8x512xf32>
    %165 = tpu.matmul %163, %164, %cst_49 {dimension_numbers = #tpu.dot_dimension_numbers<[1], [0], [0], [1], [0, 0, 1, 1], [], []>} : vector<8x256xf32>, vector<256x512xf32>, vector<8x512xf32> -> vector<8x512xf32>
    %c0_50 = arith.constant 0 : index
    %c0_51 = arith.constant 0 : index
    %166 = vector.load %arg6[%c0_50, %c0_51] : memref<1x512xf32, #tpu.memory_space<vmem>>, vector<1x512xf32>
    %167 = vector.broadcast %166 : vector<1x512xf32> to vector<8x512xf32>
    %168 = arith.addf %165, %167 : vector<8x512xf32>
    %169 = vector.extract_strided_slice %168 {offsets = [0, 0], sizes = [8, 128], strides = [1, 1]} : vector<8x512xf32> to vector<8x128xf32>
    %170 = arith.negf %169 : vector<8x128xf32>
    %171 = math.exp %170 : vector<8x128xf32>
    %cst_52 = arith.constant 1.000000e+00 : f32
    %172 = vector.broadcast %cst_52 : f32 to vector<8x128xf32>
    %173 = arith.addf %172, %171 : vector<8x128xf32>
    %174 = arith.divf %172, %173 : vector<8x128xf32>
    %175 = vector.extract_strided_slice %168 {offsets = [0, 128], sizes = [8, 128], strides = [1, 1]} : vector<8x512xf32> to vector<8x128xf32>
    %176 = arith.negf %175 : vector<8x128xf32>
    %177 = math.exp %176 : vector<8x128xf32>
    %cst_53 = arith.constant 1.000000e+00 : f32
    %178 = vector.broadcast %cst_53 : f32 to vector<8x128xf32>
    %179 = arith.addf %178, %177 : vector<8x128xf32>
    %180 = arith.divf %178, %179 : vector<8x128xf32>
    %181 = vector.extract_strided_slice %168 {offsets = [0, 256], sizes = [8, 128], strides = [1, 1]} : vector<8x512xf32> to vector<8x128xf32>
    %182 = math.tanh %181 : vector<8x128xf32>
    %183 = vector.extract_strided_slice %168 {offsets = [0, 384], sizes = [8, 128], strides = [1, 1]} : vector<8x512xf32> to vector<8x128xf32>
    %184 = arith.negf %183 : vector<8x128xf32>
    %185 = math.exp %184 : vector<8x128xf32>
    %cst_54 = arith.constant 1.000000e+00 : f32
    %186 = vector.broadcast %cst_54 : f32 to vector<8x128xf32>
    %187 = arith.addf %186, %185 : vector<8x128xf32>
    %188 = arith.divf %186, %187 : vector<8x128xf32>
    %189 = arith.mulf %180, %128 : vector<8x128xf32>
    %190 = arith.mulf %174, %182 : vector<8x128xf32>
    %191 = arith.addf %189, %190 : vector<8x128xf32>
    %192 = math.tanh %191 : vector<8x128xf32>
    %193 = arith.mulf %188, %192 : vector<8x128xf32>
    %c8_i32_55 = arith.constant 8 : i32
    %194 = arith.muli %c3_i32, %c8_i32_55 : i32
    %195 = tpu.assume_multiple %194, 8 : i32
    %196 = arith.index_cast %195 : i32 to index
    %c0_56 = arith.constant 0 : index
    %197 = vector.load %arg10[%196, %c0_56] : memref<64x512xf32, #tpu.memory_space<vmem>>, vector<8x512xf32>
    %c0_57 = arith.constant 0 : index
    %c0_58 = arith.constant 0 : index
    %198 = vector.load %arg3[%c0_57, %c0_58] : memref<128x512xf32, #tpu.memory_space<vmem>>, vector<128x512xf32>
    %cst_59 = arith.constant dense<0.000000e+00> : vector<8x512xf32>
    %199 = tpu.matmul %162, %198, %cst_59 {dimension_numbers = #tpu.dot_dimension_numbers<[1], [0], [0], [1], [0, 0, 1, 1], [], []>} : vector<8x128xf32>, vector<128x512xf32>, vector<8x512xf32> -> vector<8x512xf32>
    %200 = arith.addf %197, %199 : vector<8x512xf32>
    %201 = vector.extract_strided_slice %200 {offsets = [0, 0], sizes = [8, 128], strides = [1, 1]} : vector<8x512xf32> to vector<8x128xf32>
    %202 = arith.negf %201 : vector<8x128xf32>
    %203 = math.exp %202 : vector<8x128xf32>
    %cst_60 = arith.constant 1.000000e+00 : f32
    %204 = vector.broadcast %cst_60 : f32 to vector<8x128xf32>
    %205 = arith.addf %204, %203 : vector<8x128xf32>
    %206 = arith.divf %204, %205 : vector<8x128xf32>
    %207 = vector.extract_strided_slice %200 {offsets = [0, 128], sizes = [8, 128], strides = [1, 1]} : vector<8x512xf32> to vector<8x128xf32>
    %208 = arith.negf %207 : vector<8x128xf32>
    %209 = math.exp %208 : vector<8x128xf32>
    %cst_61 = arith.constant 1.000000e+00 : f32
    %210 = vector.broadcast %cst_61 : f32 to vector<8x128xf32>
    %211 = arith.addf %210, %209 : vector<8x128xf32>
    %212 = arith.divf %210, %211 : vector<8x128xf32>
    %213 = vector.extract_strided_slice %200 {offsets = [0, 256], sizes = [8, 128], strides = [1, 1]} : vector<8x512xf32> to vector<8x128xf32>
    %214 = math.tanh %213 : vector<8x128xf32>
    %215 = vector.extract_strided_slice %200 {offsets = [0, 384], sizes = [8, 128], strides = [1, 1]} : vector<8x512xf32> to vector<8x128xf32>
    %216 = arith.negf %215 : vector<8x128xf32>
    %217 = math.exp %216 : vector<8x128xf32>
    %cst_62 = arith.constant 1.000000e+00 : f32
    %218 = vector.broadcast %cst_62 : f32 to vector<8x128xf32>
    %219 = arith.addf %218, %217 : vector<8x128xf32>
    %220 = arith.divf %218, %219 : vector<8x128xf32>
    %221 = arith.mulf %212, %160 : vector<8x128xf32>
    %222 = arith.mulf %206, %214 : vector<8x128xf32>
    %223 = arith.addf %221, %222 : vector<8x128xf32>
    %224 = math.tanh %223 : vector<8x128xf32>
    %225 = arith.mulf %220, %224 : vector<8x128xf32>
    %c4_i32 = arith.constant 4 : i32
    %226 = tpu.concatenate %225, %193 in 1 : vector<8x128xf32>, vector<8x128xf32> -> vector<8x256xf32>
    %c0_63 = arith.constant 0 : index
    %c0_64 = arith.constant 0 : index
    %227 = vector.load %arg5[%c0_63, %c0_64] : memref<256x512xf32, #tpu.memory_space<vmem>>, vector<256x512xf32>
    %cst_65 = arith.constant dense<0.000000e+00> : vector<8x512xf32>
    %228 = tpu.matmul %226, %227, %cst_65 {dimension_numbers = #tpu.dot_dimension_numbers<[1], [0], [0], [1], [0, 0, 1, 1], [], []>} : vector<8x256xf32>, vector<256x512xf32>, vector<8x512xf32> -> vector<8x512xf32>
    %c0_66 = arith.constant 0 : index
    %c0_67 = arith.constant 0 : index
    %229 = vector.load %arg6[%c0_66, %c0_67] : memref<1x512xf32, #tpu.memory_space<vmem>>, vector<1x512xf32>
    %230 = vector.broadcast %229 : vector<1x512xf32> to vector<8x512xf32>
    %231 = arith.addf %228, %230 : vector<8x512xf32>
    %232 = vector.extract_strided_slice %231 {offsets = [0, 0], sizes = [8, 128], strides = [1, 1]} : vector<8x512xf32> to vector<8x128xf32>
    %233 = arith.negf %232 : vector<8x128xf32>
    %234 = math.exp %233 : vector<8x128xf32>
    %cst_68 = arith.constant 1.000000e+00 : f32
    %235 = vector.broadcast %cst_68 : f32 to vector<8x128xf32>
    %236 = arith.addf %235, %234 : vector<8x128xf32>
    %237 = arith.divf %235, %236 : vector<8x128xf32>
    %238 = vector.extract_strided_slice %231 {offsets = [0, 128], sizes = [8, 128], strides = [1, 1]} : vector<8x512xf32> to vector<8x128xf32>
    %239 = arith.negf %238 : vector<8x128xf32>
    %240 = math.exp %239 : vector<8x128xf32>
    %cst_69 = arith.constant 1.000000e+00 : f32
    %241 = vector.broadcast %cst_69 : f32 to vector<8x128xf32>
    %242 = arith.addf %241, %240 : vector<8x128xf32>
    %243 = arith.divf %241, %242 : vector<8x128xf32>
    %244 = vector.extract_strided_slice %231 {offsets = [0, 256], sizes = [8, 128], strides = [1, 1]} : vector<8x512xf32> to vector<8x128xf32>
    %245 = math.tanh %244 : vector<8x128xf32>
    %246 = vector.extract_strided_slice %231 {offsets = [0, 384], sizes = [8, 128], strides = [1, 1]} : vector<8x512xf32> to vector<8x128xf32>
    %247 = arith.negf %246 : vector<8x128xf32>
    %248 = math.exp %247 : vector<8x128xf32>
    %cst_70 = arith.constant 1.000000e+00 : f32
    %249 = vector.broadcast %cst_70 : f32 to vector<8x128xf32>
    %250 = arith.addf %249, %248 : vector<8x128xf32>
    %251 = arith.divf %249, %250 : vector<8x128xf32>
    %252 = arith.mulf %243, %191 : vector<8x128xf32>
    %253 = arith.mulf %237, %245 : vector<8x128xf32>
    %254 = arith.addf %252, %253 : vector<8x128xf32>
    %255 = math.tanh %254 : vector<8x128xf32>
    %256 = arith.mulf %251, %255 : vector<8x128xf32>
    %c8_i32_71 = arith.constant 8 : i32
    %257 = arith.muli %c4_i32, %c8_i32_71 : i32
    %258 = tpu.assume_multiple %257, 8 : i32
    %259 = arith.index_cast %258 : i32 to index
    %c0_72 = arith.constant 0 : index
    %260 = vector.load %arg10[%259, %c0_72] : memref<64x512xf32, #tpu.memory_space<vmem>>, vector<8x512xf32>
    %c0_73 = arith.constant 0 : index
    %c0_74 = arith.constant 0 : index
    %261 = vector.load %arg3[%c0_73, %c0_74] : memref<128x512xf32, #tpu.memory_space<vmem>>, vector<128x512xf32>
    %cst_75 = arith.constant dense<0.000000e+00> : vector<8x512xf32>
    %262 = tpu.matmul %225, %261, %cst_75 {dimension_numbers = #tpu.dot_dimension_numbers<[1], [0], [0], [1], [0, 0, 1, 1], [], []>} : vector<8x128xf32>, vector<128x512xf32>, vector<8x512xf32> -> vector<8x512xf32>
    %263 = arith.addf %260, %262 : vector<8x512xf32>
    %264 = vector.extract_strided_slice %263 {offsets = [0, 0], sizes = [8, 128], strides = [1, 1]} : vector<8x512xf32> to vector<8x128xf32>
    %265 = arith.negf %264 : vector<8x128xf32>
    %266 = math.exp %265 : vector<8x128xf32>
    %cst_76 = arith.constant 1.000000e+00 : f32
    %267 = vector.broadcast %cst_76 : f32 to vector<8x128xf32>
    %268 = arith.addf %267, %266 : vector<8x128xf32>
    %269 = arith.divf %267, %268 : vector<8x128xf32>
    %270 = vector.extract_strided_slice %263 {offsets = [0, 128], sizes = [8, 128], strides = [1, 1]} : vector<8x512xf32> to vector<8x128xf32>
    %271 = arith.negf %270 : vector<8x128xf32>
    %272 = math.exp %271 : vector<8x128xf32>
    %cst_77 = arith.constant 1.000000e+00 : f32
    %273 = vector.broadcast %cst_77 : f32 to vector<8x128xf32>
    %274 = arith.addf %273, %272 : vector<8x128xf32>
    %275 = arith.divf %273, %274 : vector<8x128xf32>
    %276 = vector.extract_strided_slice %263 {offsets = [0, 256], sizes = [8, 128], strides = [1, 1]} : vector<8x512xf32> to vector<8x128xf32>
    %277 = math.tanh %276 : vector<8x128xf32>
    %278 = vector.extract_strided_slice %263 {offsets = [0, 384], sizes = [8, 128], strides = [1, 1]} : vector<8x512xf32> to vector<8x128xf32>
    %279 = arith.negf %278 : vector<8x128xf32>
    %280 = math.exp %279 : vector<8x128xf32>
    %cst_78 = arith.constant 1.000000e+00 : f32
    %281 = vector.broadcast %cst_78 : f32 to vector<8x128xf32>
    %282 = arith.addf %281, %280 : vector<8x128xf32>
    %283 = arith.divf %281, %282 : vector<8x128xf32>
    %284 = arith.mulf %275, %223 : vector<8x128xf32>
    %285 = arith.mulf %269, %277 : vector<8x128xf32>
    %286 = arith.addf %284, %285 : vector<8x128xf32>
    %287 = math.tanh %286 : vector<8x128xf32>
    %288 = arith.mulf %283, %287 : vector<8x128xf32>
    %c5_i32 = arith.constant 5 : i32
    %289 = tpu.concatenate %288, %256 in 1 : vector<8x128xf32>, vector<8x128xf32> -> vector<8x256xf32>
    %c0_79 = arith.constant 0 : index
    %c0_80 = arith.constant 0 : index
    %290 = vector.load %arg5[%c0_79, %c0_80] : memref<256x512xf32, #tpu.memory_space<vmem>>, vector<256x512xf32>
    %cst_81 = arith.constant dense<0.000000e+00> : vector<8x512xf32>
    %291 = tpu.matmul %289, %290, %cst_81 {dimension_numbers = #tpu.dot_dimension_numbers<[1], [0], [0], [1], [0, 0, 1, 1], [], []>} : vector<8x256xf32>, vector<256x512xf32>, vector<8x512xf32> -> vector<8x512xf32>
    %c0_82 = arith.constant 0 : index
    %c0_83 = arith.constant 0 : index
    %292 = vector.load %arg6[%c0_82, %c0_83] : memref<1x512xf32, #tpu.memory_space<vmem>>, vector<1x512xf32>
    %293 = vector.broadcast %292 : vector<1x512xf32> to vector<8x512xf32>
    %294 = arith.addf %291, %293 : vector<8x512xf32>
    %295 = vector.extract_strided_slice %294 {offsets = [0, 0], sizes = [8, 128], strides = [1, 1]} : vector<8x512xf32> to vector<8x128xf32>
    %296 = arith.negf %295 : vector<8x128xf32>
    %297 = math.exp %296 : vector<8x128xf32>
    %cst_84 = arith.constant 1.000000e+00 : f32
    %298 = vector.broadcast %cst_84 : f32 to vector<8x128xf32>
    %299 = arith.addf %298, %297 : vector<8x128xf32>
    %300 = arith.divf %298, %299 : vector<8x128xf32>
    %301 = vector.extract_strided_slice %294 {offsets = [0, 128], sizes = [8, 128], strides = [1, 1]} : vector<8x512xf32> to vector<8x128xf32>
    %302 = arith.negf %301 : vector<8x128xf32>
    %303 = math.exp %302 : vector<8x128xf32>
    %cst_85 = arith.constant 1.000000e+00 : f32
    %304 = vector.broadcast %cst_85 : f32 to vector<8x128xf32>
    %305 = arith.addf %304, %303 : vector<8x128xf32>
    %306 = arith.divf %304, %305 : vector<8x128xf32>
    %307 = vector.extract_strided_slice %294 {offsets = [0, 256], sizes = [8, 128], strides = [1, 1]} : vector<8x512xf32> to vector<8x128xf32>
    %308 = math.tanh %307 : vector<8x128xf32>
    %309 = vector.extract_strided_slice %294 {offsets = [0, 384], sizes = [8, 128], strides = [1, 1]} : vector<8x512xf32> to vector<8x128xf32>
    %310 = arith.negf %309 : vector<8x128xf32>
    %311 = math.exp %310 : vector<8x128xf32>
    %cst_86 = arith.constant 1.000000e+00 : f32
    %312 = vector.broadcast %cst_86 : f32 to vector<8x128xf32>
    %313 = arith.addf %312, %311 : vector<8x128xf32>
    %314 = arith.divf %312, %313 : vector<8x128xf32>
    %315 = arith.mulf %306, %254 : vector<8x128xf32>
    %316 = arith.mulf %300, %308 : vector<8x128xf32>
    %317 = arith.addf %315, %316 : vector<8x128xf32>
    %318 = math.tanh %317 : vector<8x128xf32>
    %319 = arith.mulf %314, %318 : vector<8x128xf32>
    %c8_i32_87 = arith.constant 8 : i32
    %320 = arith.muli %c5_i32, %c8_i32_87 : i32
    %321 = tpu.assume_multiple %320, 8 : i32
    %322 = arith.index_cast %321 : i32 to index
    %c0_88 = arith.constant 0 : index
    %323 = vector.load %arg10[%322, %c0_88] : memref<64x512xf32, #tpu.memory_space<vmem>>, vector<8x512xf32>
    %c0_89 = arith.constant 0 : index
    %c0_90 = arith.constant 0 : index
    %324 = vector.load %arg3[%c0_89, %c0_90] : memref<128x512xf32, #tpu.memory_space<vmem>>, vector<128x512xf32>
    %cst_91 = arith.constant dense<0.000000e+00> : vector<8x512xf32>
    %325 = tpu.matmul %288, %324, %cst_91 {dimension_numbers = #tpu.dot_dimension_numbers<[1], [0], [0], [1], [0, 0, 1, 1], [], []>} : vector<8x128xf32>, vector<128x512xf32>, vector<8x512xf32> -> vector<8x512xf32>
    %326 = arith.addf %323, %325 : vector<8x512xf32>
    %327 = vector.extract_strided_slice %326 {offsets = [0, 0], sizes = [8, 128], strides = [1, 1]} : vector<8x512xf32> to vector<8x128xf32>
    %328 = arith.negf %327 : vector<8x128xf32>
    %329 = math.exp %328 : vector<8x128xf32>
    %cst_92 = arith.constant 1.000000e+00 : f32
    %330 = vector.broadcast %cst_92 : f32 to vector<8x128xf32>
    %331 = arith.addf %330, %329 : vector<8x128xf32>
    %332 = arith.divf %330, %331 : vector<8x128xf32>
    %333 = vector.extract_strided_slice %326 {offsets = [0, 128], sizes = [8, 128], strides = [1, 1]} : vector<8x512xf32> to vector<8x128xf32>
    %334 = arith.negf %333 : vector<8x128xf32>
    %335 = math.exp %334 : vector<8x128xf32>
    %cst_93 = arith.constant 1.000000e+00 : f32
    %336 = vector.broadcast %cst_93 : f32 to vector<8x128xf32>
    %337 = arith.addf %336, %335 : vector<8x128xf32>
    %338 = arith.divf %336, %337 : vector<8x128xf32>
    %339 = vector.extract_strided_slice %326 {offsets = [0, 256], sizes = [8, 128], strides = [1, 1]} : vector<8x512xf32> to vector<8x128xf32>
    %340 = math.tanh %339 : vector<8x128xf32>
    %341 = vector.extract_strided_slice %326 {offsets = [0, 384], sizes = [8, 128], strides = [1, 1]} : vector<8x512xf32> to vector<8x128xf32>
    %342 = arith.negf %341 : vector<8x128xf32>
    %343 = math.exp %342 : vector<8x128xf32>
    %cst_94 = arith.constant 1.000000e+00 : f32
    %344 = vector.broadcast %cst_94 : f32 to vector<8x128xf32>
    %345 = arith.addf %344, %343 : vector<8x128xf32>
    %346 = arith.divf %344, %345 : vector<8x128xf32>
    %347 = arith.mulf %338, %286 : vector<8x128xf32>
    %348 = arith.mulf %332, %340 : vector<8x128xf32>
    %349 = arith.addf %347, %348 : vector<8x128xf32>
    %350 = math.tanh %349 : vector<8x128xf32>
    %351 = arith.mulf %346, %350 : vector<8x128xf32>
    %c6_i32 = arith.constant 6 : i32
    %352 = tpu.concatenate %351, %319 in 1 : vector<8x128xf32>, vector<8x128xf32> -> vector<8x256xf32>
    %c0_95 = arith.constant 0 : index
    %c0_96 = arith.constant 0 : index
    %353 = vector.load %arg5[%c0_95, %c0_96] : memref<256x512xf32, #tpu.memory_space<vmem>>, vector<256x512xf32>
    %cst_97 = arith.constant dense<0.000000e+00> : vector<8x512xf32>
    %354 = tpu.matmul %352, %353, %cst_97 {dimension_numbers = #tpu.dot_dimension_numbers<[1], [0], [0], [1], [0, 0, 1, 1], [], []>} : vector<8x256xf32>, vector<256x512xf32>, vector<8x512xf32> -> vector<8x512xf32>
    %c0_98 = arith.constant 0 : index
    %c0_99 = arith.constant 0 : index
    %355 = vector.load %arg6[%c0_98, %c0_99] : memref<1x512xf32, #tpu.memory_space<vmem>>, vector<1x512xf32>
    %356 = vector.broadcast %355 : vector<1x512xf32> to vector<8x512xf32>
    %357 = arith.addf %354, %356 : vector<8x512xf32>
    %358 = vector.extract_strided_slice %357 {offsets = [0, 0], sizes = [8, 128], strides = [1, 1]} : vector<8x512xf32> to vector<8x128xf32>
    %359 = arith.negf %358 : vector<8x128xf32>
    %360 = math.exp %359 : vector<8x128xf32>
    %cst_100 = arith.constant 1.000000e+00 : f32
    %361 = vector.broadcast %cst_100 : f32 to vector<8x128xf32>
    %362 = arith.addf %361, %360 : vector<8x128xf32>
    %363 = arith.divf %361, %362 : vector<8x128xf32>
    %364 = vector.extract_strided_slice %357 {offsets = [0, 128], sizes = [8, 128], strides = [1, 1]} : vector<8x512xf32> to vector<8x128xf32>
    %365 = arith.negf %364 : vector<8x128xf32>
    %366 = math.exp %365 : vector<8x128xf32>
    %cst_101 = arith.constant 1.000000e+00 : f32
    %367 = vector.broadcast %cst_101 : f32 to vector<8x128xf32>
    %368 = arith.addf %367, %366 : vector<8x128xf32>
    %369 = arith.divf %367, %368 : vector<8x128xf32>
    %370 = vector.extract_strided_slice %357 {offsets = [0, 256], sizes = [8, 128], strides = [1, 1]} : vector<8x512xf32> to vector<8x128xf32>
    %371 = math.tanh %370 : vector<8x128xf32>
    %372 = vector.extract_strided_slice %357 {offsets = [0, 384], sizes = [8, 128], strides = [1, 1]} : vector<8x512xf32> to vector<8x128xf32>
    %373 = arith.negf %372 : vector<8x128xf32>
    %374 = math.exp %373 : vector<8x128xf32>
    %cst_102 = arith.constant 1.000000e+00 : f32
    %375 = vector.broadcast %cst_102 : f32 to vector<8x128xf32>
    %376 = arith.addf %375, %374 : vector<8x128xf32>
    %377 = arith.divf %375, %376 : vector<8x128xf32>
    %378 = arith.mulf %369, %317 : vector<8x128xf32>
    %379 = arith.mulf %363, %371 : vector<8x128xf32>
    %380 = arith.addf %378, %379 : vector<8x128xf32>
    %381 = math.tanh %380 : vector<8x128xf32>
    %382 = arith.mulf %377, %381 : vector<8x128xf32>
    %c8_i32_103 = arith.constant 8 : i32
    %383 = arith.muli %c6_i32, %c8_i32_103 : i32
    %384 = tpu.assume_multiple %383, 8 : i32
    %385 = arith.index_cast %384 : i32 to index
    %c0_104 = arith.constant 0 : index
    %386 = vector.load %arg10[%385, %c0_104] : memref<64x512xf32, #tpu.memory_space<vmem>>, vector<8x512xf32>
    %c0_105 = arith.constant 0 : index
    %c0_106 = arith.constant 0 : index
    %387 = vector.load %arg3[%c0_105, %c0_106] : memref<128x512xf32, #tpu.memory_space<vmem>>, vector<128x512xf32>
    %cst_107 = arith.constant dense<0.000000e+00> : vector<8x512xf32>
    %388 = tpu.matmul %351, %387, %cst_107 {dimension_numbers = #tpu.dot_dimension_numbers<[1], [0], [0], [1], [0, 0, 1, 1], [], []>} : vector<8x128xf32>, vector<128x512xf32>, vector<8x512xf32> -> vector<8x512xf32>
    %389 = arith.addf %386, %388 : vector<8x512xf32>
    %390 = vector.extract_strided_slice %389 {offsets = [0, 0], sizes = [8, 128], strides = [1, 1]} : vector<8x512xf32> to vector<8x128xf32>
    %391 = arith.negf %390 : vector<8x128xf32>
    %392 = math.exp %391 : vector<8x128xf32>
    %cst_108 = arith.constant 1.000000e+00 : f32
    %393 = vector.broadcast %cst_108 : f32 to vector<8x128xf32>
    %394 = arith.addf %393, %392 : vector<8x128xf32>
    %395 = arith.divf %393, %394 : vector<8x128xf32>
    %396 = vector.extract_strided_slice %389 {offsets = [0, 128], sizes = [8, 128], strides = [1, 1]} : vector<8x512xf32> to vector<8x128xf32>
    %397 = arith.negf %396 : vector<8x128xf32>
    %398 = math.exp %397 : vector<8x128xf32>
    %cst_109 = arith.constant 1.000000e+00 : f32
    %399 = vector.broadcast %cst_109 : f32 to vector<8x128xf32>
    %400 = arith.addf %399, %398 : vector<8x128xf32>
    %401 = arith.divf %399, %400 : vector<8x128xf32>
    %402 = vector.extract_strided_slice %389 {offsets = [0, 256], sizes = [8, 128], strides = [1, 1]} : vector<8x512xf32> to vector<8x128xf32>
    %403 = math.tanh %402 : vector<8x128xf32>
    %404 = vector.extract_strided_slice %389 {offsets = [0, 384], sizes = [8, 128], strides = [1, 1]} : vector<8x512xf32> to vector<8x128xf32>
    %405 = arith.negf %404 : vector<8x128xf32>
    %406 = math.exp %405 : vector<8x128xf32>
    %cst_110 = arith.constant 1.000000e+00 : f32
    %407 = vector.broadcast %cst_110 : f32 to vector<8x128xf32>
    %408 = arith.addf %407, %406 : vector<8x128xf32>
    %409 = arith.divf %407, %408 : vector<8x128xf32>
    %410 = arith.mulf %401, %349 : vector<8x128xf32>
    %411 = arith.mulf %395, %403 : vector<8x128xf32>
    %412 = arith.addf %410, %411 : vector<8x128xf32>
    %413 = math.tanh %412 : vector<8x128xf32>
    %414 = arith.mulf %409, %413 : vector<8x128xf32>
    %c7_i32 = arith.constant 7 : i32
    %415 = tpu.concatenate %414, %382 in 1 : vector<8x128xf32>, vector<8x128xf32> -> vector<8x256xf32>
    %c0_111 = arith.constant 0 : index
    %c0_112 = arith.constant 0 : index
    %416 = vector.load %arg5[%c0_111, %c0_112] : memref<256x512xf32, #tpu.memory_space<vmem>>, vector<256x512xf32>
    %cst_113 = arith.constant dense<0.000000e+00> : vector<8x512xf32>
    %417 = tpu.matmul %415, %416, %cst_113 {dimension_numbers = #tpu.dot_dimension_numbers<[1], [0], [0], [1], [0, 0, 1, 1], [], []>} : vector<8x256xf32>, vector<256x512xf32>, vector<8x512xf32> -> vector<8x512xf32>
    %c0_114 = arith.constant 0 : index
    %c0_115 = arith.constant 0 : index
    %418 = vector.load %arg6[%c0_114, %c0_115] : memref<1x512xf32, #tpu.memory_space<vmem>>, vector<1x512xf32>
    %419 = vector.broadcast %418 : vector<1x512xf32> to vector<8x512xf32>
    %420 = arith.addf %417, %419 : vector<8x512xf32>
    %421 = vector.extract_strided_slice %420 {offsets = [0, 0], sizes = [8, 128], strides = [1, 1]} : vector<8x512xf32> to vector<8x128xf32>
    %422 = arith.negf %421 : vector<8x128xf32>
    %423 = math.exp %422 : vector<8x128xf32>
    %cst_116 = arith.constant 1.000000e+00 : f32
    %424 = vector.broadcast %cst_116 : f32 to vector<8x128xf32>
    %425 = arith.addf %424, %423 : vector<8x128xf32>
    %426 = arith.divf %424, %425 : vector<8x128xf32>
    %427 = vector.extract_strided_slice %420 {offsets = [0, 128], sizes = [8, 128], strides = [1, 1]} : vector<8x512xf32> to vector<8x128xf32>
    %428 = arith.negf %427 : vector<8x128xf32>
    %429 = math.exp %428 : vector<8x128xf32>
    %cst_117 = arith.constant 1.000000e+00 : f32
    %430 = vector.broadcast %cst_117 : f32 to vector<8x128xf32>
    %431 = arith.addf %430, %429 : vector<8x128xf32>
    %432 = arith.divf %430, %431 : vector<8x128xf32>
    %433 = vector.extract_strided_slice %420 {offsets = [0, 256], sizes = [8, 128], strides = [1, 1]} : vector<8x512xf32> to vector<8x128xf32>
    %434 = math.tanh %433 : vector<8x128xf32>
    %435 = vector.extract_strided_slice %420 {offsets = [0, 384], sizes = [8, 128], strides = [1, 1]} : vector<8x512xf32> to vector<8x128xf32>
    %436 = arith.negf %435 : vector<8x128xf32>
    %437 = math.exp %436 : vector<8x128xf32>
    %cst_118 = arith.constant 1.000000e+00 : f32
    %438 = vector.broadcast %cst_118 : f32 to vector<8x128xf32>
    %439 = arith.addf %438, %437 : vector<8x128xf32>
    %440 = arith.divf %438, %439 : vector<8x128xf32>
    %441 = arith.mulf %432, %380 : vector<8x128xf32>
    %442 = arith.mulf %426, %434 : vector<8x128xf32>
    %443 = arith.addf %441, %442 : vector<8x128xf32>
    %444 = math.tanh %443 : vector<8x128xf32>
    %445 = arith.mulf %440, %444 : vector<8x128xf32>
    %c8_i32_119 = arith.constant 8 : i32
    %446 = arith.muli %c7_i32, %c8_i32_119 : i32
    %447 = tpu.assume_multiple %446, 8 : i32
    %448 = arith.index_cast %447 : i32 to index
    %c0_120 = arith.constant 0 : index
    %449 = vector.load %arg10[%448, %c0_120] : memref<64x512xf32, #tpu.memory_space<vmem>>, vector<8x512xf32>
    %c0_121 = arith.constant 0 : index
    %c0_122 = arith.constant 0 : index
    %450 = vector.load %arg3[%c0_121, %c0_122] : memref<128x512xf32, #tpu.memory_space<vmem>>, vector<128x512xf32>
    %cst_123 = arith.constant dense<0.000000e+00> : vector<8x512xf32>
    %451 = tpu.matmul %414, %450, %cst_123 {dimension_numbers = #tpu.dot_dimension_numbers<[1], [0], [0], [1], [0, 0, 1, 1], [], []>} : vector<8x128xf32>, vector<128x512xf32>, vector<8x512xf32> -> vector<8x512xf32>
    %452 = arith.addf %449, %451 : vector<8x512xf32>
    %453 = vector.extract_strided_slice %452 {offsets = [0, 0], sizes = [8, 128], strides = [1, 1]} : vector<8x512xf32> to vector<8x128xf32>
    %454 = arith.negf %453 : vector<8x128xf32>
    %455 = math.exp %454 : vector<8x128xf32>
    %cst_124 = arith.constant 1.000000e+00 : f32
    %456 = vector.broadcast %cst_124 : f32 to vector<8x128xf32>
    %457 = arith.addf %456, %455 : vector<8x128xf32>
    %458 = arith.divf %456, %457 : vector<8x128xf32>
    %459 = vector.extract_strided_slice %452 {offsets = [0, 128], sizes = [8, 128], strides = [1, 1]} : vector<8x512xf32> to vector<8x128xf32>
    %460 = arith.negf %459 : vector<8x128xf32>
    %461 = math.exp %460 : vector<8x128xf32>
    %cst_125 = arith.constant 1.000000e+00 : f32
    %462 = vector.broadcast %cst_125 : f32 to vector<8x128xf32>
    %463 = arith.addf %462, %461 : vector<8x128xf32>
    %464 = arith.divf %462, %463 : vector<8x128xf32>
    %465 = vector.extract_strided_slice %452 {offsets = [0, 256], sizes = [8, 128], strides = [1, 1]} : vector<8x512xf32> to vector<8x128xf32>
    %466 = math.tanh %465 : vector<8x128xf32>
    %467 = vector.extract_strided_slice %452 {offsets = [0, 384], sizes = [8, 128], strides = [1, 1]} : vector<8x512xf32> to vector<8x128xf32>
    %468 = arith.negf %467 : vector<8x128xf32>
    %469 = math.exp %468 : vector<8x128xf32>
    %cst_126 = arith.constant 1.000000e+00 : f32
    %470 = vector.broadcast %cst_126 : f32 to vector<8x128xf32>
    %471 = arith.addf %470, %469 : vector<8x128xf32>
    %472 = arith.divf %470, %471 : vector<8x128xf32>
    %473 = arith.mulf %464, %412 : vector<8x128xf32>
    %474 = arith.mulf %458, %466 : vector<8x128xf32>
    %475 = arith.addf %473, %474 : vector<8x128xf32>
    %476 = math.tanh %475 : vector<8x128xf32>
    %477 = arith.mulf %472, %476 : vector<8x128xf32>
    %c7_i32_127 = arith.constant 7 : i32
    %478 = tpu.concatenate %477, %445 in 1 : vector<8x128xf32>, vector<8x128xf32> -> vector<8x256xf32>
    %c0_128 = arith.constant 0 : index
    %c0_129 = arith.constant 0 : index
    %479 = vector.load %arg5[%c0_128, %c0_129] : memref<256x512xf32, #tpu.memory_space<vmem>>, vector<256x512xf32>
    %cst_130 = arith.constant dense<0.000000e+00> : vector<8x512xf32>
    %480 = tpu.matmul %478, %479, %cst_130 {dimension_numbers = #tpu.dot_dimension_numbers<[1], [0], [0], [1], [0, 0, 1, 1], [], []>} : vector<8x256xf32>, vector<256x512xf32>, vector<8x512xf32> -> vector<8x512xf32>
    %c0_131 = arith.constant 0 : index
    %c0_132 = arith.constant 0 : index
    %481 = vector.load %arg6[%c0_131, %c0_132] : memref<1x512xf32, #tpu.memory_space<vmem>>, vector<1x512xf32>
    %482 = vector.broadcast %481 : vector<1x512xf32> to vector<8x512xf32>
    %483 = arith.addf %480, %482 : vector<8x512xf32>
    %484 = vector.extract_strided_slice %483 {offsets = [0, 0], sizes = [8, 128], strides = [1, 1]} : vector<8x512xf32> to vector<8x128xf32>
    %485 = arith.negf %484 : vector<8x128xf32>
    %486 = math.exp %485 : vector<8x128xf32>
    %cst_133 = arith.constant 1.000000e+00 : f32
    %487 = vector.broadcast %cst_133 : f32 to vector<8x128xf32>
    %488 = arith.addf %487, %486 : vector<8x128xf32>
    %489 = arith.divf %487, %488 : vector<8x128xf32>
    %490 = vector.extract_strided_slice %483 {offsets = [0, 128], sizes = [8, 128], strides = [1, 1]} : vector<8x512xf32> to vector<8x128xf32>
    %491 = arith.negf %490 : vector<8x128xf32>
    %492 = math.exp %491 : vector<8x128xf32>
    %cst_134 = arith.constant 1.000000e+00 : f32
    %493 = vector.broadcast %cst_134 : f32 to vector<8x128xf32>
    %494 = arith.addf %493, %492 : vector<8x128xf32>
    %495 = arith.divf %493, %494 : vector<8x128xf32>
    %496 = vector.extract_strided_slice %483 {offsets = [0, 256], sizes = [8, 128], strides = [1, 1]} : vector<8x512xf32> to vector<8x128xf32>
    %497 = math.tanh %496 : vector<8x128xf32>
    %498 = vector.extract_strided_slice %483 {offsets = [0, 384], sizes = [8, 128], strides = [1, 1]} : vector<8x512xf32> to vector<8x128xf32>
    %499 = arith.negf %498 : vector<8x128xf32>
    %500 = math.exp %499 : vector<8x128xf32>
    %cst_135 = arith.constant 1.000000e+00 : f32
    %501 = vector.broadcast %cst_135 : f32 to vector<8x128xf32>
    %502 = arith.addf %501, %500 : vector<8x128xf32>
    %503 = arith.divf %501, %502 : vector<8x128xf32>
    %504 = arith.mulf %495, %443 : vector<8x128xf32>
    %505 = arith.mulf %489, %497 : vector<8x128xf32>
    %506 = arith.addf %504, %505 : vector<8x128xf32>
    %507 = math.tanh %506 : vector<8x128xf32>
    %508 = arith.mulf %503, %507 : vector<8x128xf32>
    %c0_136 = arith.constant 0 : index
    %c0_137 = arith.constant 0 : index
    %509 = vector.load %arg7[%c0_136, %c0_137] : memref<128x1xf32, #tpu.memory_space<vmem>>, vector<128x1xf32>
    %cst_138 = arith.constant dense<0.000000e+00> : vector<8x1xf32>
    %510 = tpu.matmul %508, %509, %cst_138 {dimension_numbers = #tpu.dot_dimension_numbers<[1], [0], [0], [1], [0, 0, 1, 1], [], []>} : vector<8x128xf32>, vector<128x1xf32>, vector<8x1xf32> -> vector<8x1xf32>
    %c0_139 = arith.constant 0 : index
    %c0_140 = arith.constant 0 : index
    %511 = vector.load %arg8[%c0_139, %c0_140] : memref<1x1xf32, #tpu.memory_space<vmem>>, vector<1x1xf32>
    %512 = vector.broadcast %511 : vector<1x1xf32> to vector<8x1xf32>
    %513 = arith.addf %510, %512 : vector<8x1xf32>
    %c0_141 = arith.constant 0 : index
    %c0_142 = arith.constant 0 : index
    %514 = vector.load %arg9[%c0_141, %c0_142] : memref<8x1xf32, #tpu.memory_space<vmem>>, vector<8x1xf32>
    tpu.vector_store %arg9[%c0_141, %c0_142], %513 {strides = array<i32>} : memref<8x1xf32, #tpu.memory_space<vmem>>, vector<8x1xf32>,
    return
  }
  func.func @transform_0(%arg0: i32) -> (i32, i32) {
    %c0_i32 = arith.constant 0 : i32
    %c0_i32_0 = arith.constant 0 : i32
    %c0_i32_1 = arith.constant 0 : i32
    return %c0_i32, %c0_i32_0 : i32, i32
  }
  func.func @transform_1(%arg0: i32) -> (i32, i32) {
    %c0_i32 = arith.constant 0 : i32
    %c0_i32_0 = arith.constant 0 : i32
    %c0_i32_1 = arith.constant 0 : i32
    return %c0_i32, %c0_i32_0 : i32, i32
  }
  func.func @transform_2(%arg0: i32) -> (i32, i32) {
    %c0_i32 = arith.constant 0 : i32
    %c0_i32_0 = arith.constant 0 : i32
    %c0_i32_1 = arith.constant 0 : i32
    return %c0_i32, %c0_i32_0 : i32, i32
  }
  func.func @transform_3(%arg0: i32) -> (i32, i32) {
    %c0_i32 = arith.constant 0 : i32
    %c0_i32_0 = arith.constant 0 : i32
    %c0_i32_1 = arith.constant 0 : i32
    return %c0_i32, %c0_i32_0 : i32, i32
  }
  func.func @transform_4(%arg0: i32) -> (i32, i32) {
    %c0_i32 = arith.constant 0 : i32
    %c0_i32_0 = arith.constant 0 : i32
    %c0_i32_1 = arith.constant 0 : i32
    return %c0_i32, %c0_i32_0 : i32, i32
  }
  func.func @transform_5(%arg0: i32) -> (i32, i32) {
    %c0_i32 = arith.constant 0 : i32
    %c0_i32_0 = arith.constant 0 : i32
    %c0_i32_1 = arith.constant 0 : i32
    return %c0_i32, %c0_i32_0 : i32, i32
  }
  func.func @transform_6(%arg0: i32) -> (i32, i32) {
    %c0_i32 = arith.constant 0 : i32
    %c0_i32_0 = arith.constant 0 : i32
    %c0_i32_1 = arith.constant 0 : i32
    return %c0_i32, %c0_i32_0 : i32, i32
  }
  func.func @transform_7(%arg0: i32) -> (i32, i32) {
    %c0_i32 = arith.constant 0 : i32
    %c0_i32_0 = arith.constant 0 : i32
    %c0_i32_1 = arith.constant 0 : i32
    return %c0_i32, %c0_i32_0 : i32, i32
  }
  func.func @transform_8(%arg0: i32) -> (i32, i32) {
    %c0_i32 = arith.constant 0 : i32
    %c0_i32_0 = arith.constant 0 : i32
    %c0_i32_1 = arith.constant 0 : i32
    return %c0_i32, %c0_i32_0 : i32, i32
  }
}

</mosaic_0001>

<llo_original>
// kernel: tls_lstm_forward.1
$region0: #{tls_lstm_forward.1}
  #allocation0 [shape = 'u32[]', space=smem, size = 0x4, offset = 0x4, fixed_abs, tag = 'smem constant byte address 0x4 - core index']
  #allocation1 [shape = 'u32[144,128]{1,0:T(1,128)}', space=vmem, size = 0x12000, scoped, tag = 'internal scratch']
  #allocation2 [shape = 'f32[64,512]{1,0:T(8,128)}', space=vmem, size = 0x20000, scoped, tag = 'scratch operand']
  #allocation3 [shape = 'f32[1,1]{1,0:T(1,128)S(1)}', space=vmem, size = 0x200, scoped, tag = 'scoped memory for tls_lstm_forward.1']
  %s0 = inlined_call_operand.vmem [shape: f32[64,2], index: 0, kind: input, shape index: {}]
  %s1 = inlined_call_operand.vmem [shape: f32[2,512], index: 1, kind: input, shape index: {}]
  %s2 = inlined_call_operand.vmem [shape: f32[128,512], index: 2, kind: input, shape index: {}]
  %s3 = inlined_call_operand.vmem [shape: f32[1,512], index: 3, kind: input, shape index: {}]
  %s4 = inlined_call_operand.vmem [shape: f32[256,512], index: 4, kind: input, shape index: {}]
  %s5 = inlined_call_operand.vmem [shape: f32[1,512], index: 5, kind: input, shape index: {}]
  %s6 = inlined_call_operand.vmem [shape: f32[128,1], index: 6, kind: input, shape index: {}]
  %s7 = inlined_call_operand.<no memory space> [shape: f32[1,1], index: 7, kind: input, shape index: {}]
  %s8 = inlined_call_operand.vmem [shape: f32[8,1], index: 8, kind: output, shape index: {}]
  %s9 = sld [smem:[#allocation0]]
  $region42: #{tls_lstm_forward.1} parent=0
    _
  %s11 = ssub.s32 1, %s9
  %s12 = scalar_select 0, %s11, %s9
  %v13 = vstv %s7
  %14 = vst [vmem:[#allocation3] sm:$0x1] %v13
  // Predicated region
  $region2: #{tls_lstm_forward.1} parent=0 // pred_check
    _
  $region3: #{tls_lstm_forward.1} parent=0 // pred_check_branch
    %16 = sbr.rel (0) target = $region5
  $region4: #{tls_lstm_forward.1} parent=0 // pred_region
    _
  $region5: #{tls_lstm_forward.1} parent=0 // pred_fallthru
    _
  // Predicated region
  $region6: #{tls_lstm_forward.1} parent=0 // pred_check
    _
  $region7: #{tls_lstm_forward.1} parent=0 // pred_check_branch
    %18 = sbr.rel (0) target = $region9
  $region8: #{tls_lstm_forward.1} parent=0 // pred_region
    _
  $region9: #{tls_lstm_forward.1} parent=0 // pred_fallthru
    _
  // Predicated region
  $region10: #{tls_lstm_forward.1} parent=0 // pred_check
    _
  $region11: #{tls_lstm_forward.1} parent=0 // pred_check_branch
    %20 = sbr.rel (0) target = $region13
  $region12: #{tls_lstm_forward.1} parent=0 // pred_region
    _
  $region13: #{tls_lstm_forward.1} parent=0 // pred_fallthru
    _
  // Predicated region
  $region14: #{tls_lstm_forward.1} parent=0 // pred_check
    _
  $region15: #{tls_lstm_forward.1} parent=0 // pred_check_branch
    %22 = sbr.rel (0) target = $region17
  $region16: #{tls_lstm_forward.1} parent=0 // pred_region
    _
  $region17: #{tls_lstm_forward.1} parent=0 // pred_fallthru
    _
  // Predicated region
  $region18: #{tls_lstm_forward.1} parent=0 // pred_check
    _
  $region19: #{tls_lstm_forward.1} parent=0 // pred_check_branch
    %24 = sbr.rel (0) target = $region21
  $region20: #{tls_lstm_forward.1} parent=0 // pred_region
    _
  $region21: #{tls_lstm_forward.1} parent=0 // pred_fallthru
    _
  // Predicated region
  $region22: #{tls_lstm_forward.1} parent=0 // pred_check
    _
  $region23: #{tls_lstm_forward.1} parent=0 // pred_check_branch
    %26 = sbr.rel (0) target = $region25
  $region24: #{tls_lstm_forward.1} parent=0 // pred_region
    _
  $region25: #{tls_lstm_forward.1} parent=0 // pred_fallthru
    _
  // Predicated region
  $region26: #{tls_lstm_forward.1} parent=0 // pred_check
    _
  $region27: #{tls_lstm_forward.1} parent=0 // pred_check_branch
    %28 = sbr.rel (0) target = $region29
  $region28: #{tls_lstm_forward.1} parent=0 // pred_region
    _
  $region29: #{tls_lstm_forward.1} parent=0 // pred_fallthru
    _
  // Predicated region
  $region30: #{tls_lstm_forward.1} parent=0 // pred_check
    _
  $region31: #{tls_lstm_forward.1} parent=0 // pred_check_branch
    %30 = sbr.rel (0) target = $region33
  $region32: #{tls_lstm_forward.1} parent=0 // pred_region
    _
  $region33: #{tls_lstm_forward.1} parent=0 // pred_fallthru
    _
  %v31 = vld [vmem:[%s0] sm:$0xff]
  %v32 = vld [vmem:[%s0 + $0x8] sm:$0xff]
  %v33 = vld [vmem:[%s0 + $0x10] sm:$0xff]
  %v34 = vld [vmem:[%s0 + $0x18] sm:$0xff]
  %v35 = vld [vmem:[%s0 + $0x20] sm:$0xff]
  %v36 = vld [vmem:[%s0 + $0x28] sm:$0xff]
  %v37 = vld [vmem:[%s0 + $0x30] sm:$0xff]
  %v38 = vld [vmem:[%s0 + $0x38] sm:$0xff]
  %v39 = vld [vmem:[%s1] sm:$0xff]
  %v40 = vld [vmem:[%s3] sm:$0xf]
  %v42 = vlaneseq
  %v43 = vshrl.u32 %v42, 7
  %v44 = vsub.s32 0, %v43
  %v45 = vrot.slane %v40, %v44
  %v46 = vlaneseq
  %v47 = vshrl.u32 %v46, 7
  %v48 = vsub.s32 1, %v47
  %v49 = vrot.slane %v40, %v48
  %v50 = vlaneseq
  %v51 = vshrl.u32 %v50, 7
  %v52 = vsub.s32 2, %v51
  %v53 = vrot.slane %v40, %v52
  %v54 = vlaneseq
  %v55 = vshrl.u32 %v54, 7
  %v56 = vsub.s32 3, %v55
  %v57 = vrot.slane %v40, %v56
  %v63 = vcombine.high %v39, %v39
  %v65 = vunpack.c.l.s4 1983009808
  %v66 = vunpack.c.0.s8 %v65
  %v67 = vlaneseq
  %v68 = vshrl.u32 %v67, 7
  %v69 = vsub.s32 %v66, %v68
  %v70 = vrot.slane %v39, %v69
  %v72 = vunpack.c.l.s4 1983009808
  %v73 = vunpack.c.0.s8 %v72
  %v74 = vlaneseq
  %v75 = vshrl.u32 %v74, 7
  %v76 = vsub.s32 %v73, %v75
  %v77 = vrot.slane %v63, %v76
  %v78 = vcombine.high %v70, %v70
  %v79 = vcombine.high %v77, %v77
  %vm80 = vcmask 15360
  %v82 = vsel %vm80, %v31, 0
  %v85 = vsel %vm80, %v32, 0
  %v88 = vsel %vm80, %v33, 0
  %v91 = vsel %vm80, %v34, 0
  %v94 = vsel %vm80, %v35, 0
  %v97 = vsel %vm80, %v36, 0
  %v100 = vsel %vm80, %v37, 0
  %v103 = vsel %vm80, %v38, 0
  %vm105 = vcmask 1041408
  %v106 = vsel %vm105, %v70, 0
  %v108 = vsel %vm105, %v78, 0
  %v110 = vsel %vm105, %v77, 0
  %v112 = vsel %vm105, %v79, 0
  %114 = vmatprep.subr.mxu0 %v108
  %115 = vmatpush1.msra.mxu0 %v106
  %116 = vmatprep.subr.mxu0 0.0
  %117 = vmatpush1.msra.mxu0 0.0
  %118 = vmatprep.subr.mxu0 0.0
  %119 = vmatpush1.msra.mxu0 0.0
  %120 = vmatprep.subr.mxu0 0.0
  %121 = vmatpush1.msra.mxu0 0.0
  %122 = vmatprep.subr.mxu0 0.0
  %123 = vmatpush1.msra.mxu0 0.0
  %124 = vmatprep.subr.mxu0 0.0
  %125 = vmatpush1.msra.mxu0 0.0
  %126 = vmatprep.subr.mxu0 0.0
  %127 = vmatpush1.msra.mxu0 0.0
  %128 = vmatprep.subr.mxu0 0.0
  %129 = vmatpush1.msra.mxu0 0.0
  %130 = vmatprep.subr.mxu0 0.0
  %131 = vmatpush1.msra.mxu0 0.0
  %132 = vmatprep.subr.mxu0 0.0
  %133 = vmatpush1.msra.mxu0 0.0
  %134 = vmatprep.subr.mxu0 0.0
  %135 = vmatpush1.msra.mxu0 0.0
  %136 = vmatprep.subr.mxu0 0.0
  %137 = vmatpush1.msra.mxu0 0.0
  %138 = vmatprep.subr.mxu0 0.0
  %139 = vmatpush1.msra.mxu0 0.0
  %140 = vmatprep.subr.mxu0 0.0
  %141 = vmatpush1.msra.mxu0 0.0
  %142 = vmatprep.subr.mxu0 0.0
  %143 = vmatpush1.msra.mxu0 0.0
  %144 = vmatprep.subr.mxu0 0.0
  %145 = vmatpush1.msra.mxu0 0.0
  %146 = vmatprep.subr.mxu0 0.0
  %147 = vmatpush1.msra.mxu0 0.0
  %148 = vmatprep.subr.mxu0 0.0
  %149 = vmatpush1.msra.mxu0 0.0
  %150 = vmatprep.subr.mxu0 0.0
  %151 = vmatpush1.msra.mxu0 0.0
  %152 = vmatprep.subr.mxu0 0.0
  %153 = vmatpush1.msra.mxu0 0.0
  %154 = vmatprep.subr.mxu0 0.0
  %155 = vmatpush1.msra.mxu0 0.0
  %156 = vmatprep.subr.mxu0 0.0
  %157 = vmatpush1.msra.mxu0 0.0
  %158 = vmatprep.subr.mxu0 0.0
  %159 = vmatpush1.msra.mxu0 0.0
  %160 = vmatprep.subr.mxu0 0.0
  %161 = vmatpush1.msra.mxu0 0.0
  %162 = vmatprep.subr.mxu0 0.0
  %163 = vmatpush1.msra.mxu0 0.0
  %164 = vmatprep.subr.mxu0 0.0
  %165 = vmatpush1.msra.mxu0 0.0
  %166 = vmatprep.subr.mxu0 0.0
  %167 = vmatpush1.msra.mxu0 0.0
  %168 = vmatprep.subr.mxu0 0.0
  %169 = vmatpush1.msra.mxu0 0.0
  %170 = vmatprep.subr.mxu0 0.0
  %171 = vmatpush1.msra.mxu0 0.0
  %172 = vmatprep.subr.mxu0 0.0
  %173 = vmatpush1.msra.mxu0 0.0
  %174 = vmatprep.subr.mxu0 0.0
  %175 = vmatpush1.msra.mxu0 0.0
  %176 = vmatprep.subr.mxu0 0.0
  %177 = vmatpush1.msra.mxu0 0.0
  %178 = vmatprep.mubr.f32.mxu0 0.0
  %179 = vmatmul.mubr.f32.gmra.mrb[0].mxu0 %v82
  %v180 = vpop.f32.mrb[0].mxu0
  %v181 = vadd.f32 %v45, %v180
  %v182 = vpop.f32.mrb[0].mxu0
  %v183 = vadd.f32 %v49, %v182
  %184 = vmatprep.mubr.f32.mxu0 0.0
  %185 = vmatmul.mubr.f32.gmra.mrb[0].mxu0 %v85
  %v186 = vpop.f32.mrb[0].mxu0
  %v187 = vadd.f32 %v45, %v186
  %v188 = vpop.f32.mrb[0].mxu0
  %v189 = vadd.f32 %v49, %v188
  %190 = vmatprep.mubr.f32.mxu0 0.0
  %191 = vmatmul.mubr.f32.gmra.mrb[0].mxu0 %v88
  %v192 = vpop.f32.mrb[0].mxu0
  %v193 = vadd.f32 %v45, %v192
  %v194 = vpop.f32.mrb[0].mxu0
  %v195 = vadd.f32 %v49, %v194
  %196 = vmatprep.mubr.f32.mxu0 0.0
  %197 = vmatmul.mubr.f32.gmra.mrb[0].mxu0 %v91
  %v198 = vpop.f32.mrb[0].mxu0
  %v199 = vadd.f32 %v45, %v198
  %v200 = vpop.f32.mrb[0].mxu0
  %v201 = vadd.f32 %v49, %v200
  %202 = vmatprep.mubr.f32.mxu0 0.0
  %203 = vmatmul.mubr.f32.gmra.mrb[0].mxu0 %v94
  %v204 = vpop.f32.mrb[0].mxu0
  %v205 = vadd.f32 %v45, %v204
  %v206 = vpop.f32.mrb[0].mxu0
  %v207 = vadd.f32 %v49, %v206
  %208 = vmatprep.mubr.f32.mxu0 0.0
  %209 = vmatmul.mubr.f32.gmra.mrb[0].mxu0 %v97
  %v210 = vpop.f32.mrb[0].mxu0
  %v211 = vadd.f32 %v45, %v210
  %v212 = vpop.f32.mrb[0].mxu0
  %v213 = vadd.f32 %v49, %v212
  %214 = vmatprep.mubr.f32.mxu0 0.0
  %215 = vmatmul.mubr.f32.gmra.mrb[0].mxu0 %v100
  %v216 = vpop.f32.mrb[0].mxu0
  %v217 = vadd.f32 %v45, %v216
  %v218 = vpop.f32.mrb[0].mxu0
  %v219 = vadd.f32 %v49, %v218
  %220 = vmatprep.mubr.f32.mxu0 0.0
  %221 = vmatmul.mubr.f32.gmra.mrb[0].mxu0 %v103
  %v222 = vpop.f32.mrb[0].mxu0
  %v223 = vadd.f32 %v45, %v222
  %v224 = vpop.f32.mrb[0].mxu0
  %v225 = vadd.f32 %v49, %v224
  %226 = vdwg.mxu0
  %227 = vmatprep.subr.mxu0 %v112
  %228 = vmatpush1.msra.mxu0 %v110
  %229 = vmatprep.subr.mxu0 0.0
  %230 = vmatpush1.msra.mxu0 0.0
  %231 = vmatprep.subr.mxu0 0.0
  %232 = vmatpush1.msra.mxu0 0.0
  %233 = vmatprep.subr.mxu0 0.0
  %234 = vmatpush1.msra.mxu0 0.0
  %235 = vmatprep.subr.mxu0 0.0
  %236 = vmatpush1.msra.mxu0 0.0
  %237 = vmatprep.subr.mxu0 0.0
  %238 = vmatpush1.msra.mxu0 0.0
  %239 = vmatprep.subr.mxu0 0.0
  %240 = vmatpush1.msra.mxu0 0.0
  %241 = vmatprep.subr.mxu0 0.0
  %242 = vmatpush1.msra.mxu0 0.0
  %243 = vmatprep.subr.mxu0 0.0
  %244 = vmatpush1.msra.mxu0 0.0
  %245 = vmatprep.subr.mxu0 0.0
  %246 = vmatpush1.msra.mxu0 0.0
  %247 = vmatprep.subr.mxu0 0.0
  %248 = vmatpush1.msra.mxu0 0.0
  %249 = vmatprep.subr.mxu0 0.0
  %250 = vmatpush1.msra.mxu0 0.0
  %251 = vmatprep.subr.mxu0 0.0
  %252 = vmatpush1.msra.mxu0 0.0
  %253 = vmatprep.subr.mxu0 0.0
  %254 = vmatpush1.msra.mxu0 0.0
  %255 = vmatprep.subr.mxu0 0.0
  %256 = vmatpush1.msra.mxu0 0.0
  %257 = vmatprep.subr.mxu0 0.0
  %258 = vmatpush1.msra.mxu0 0.0
  %259 = vmatprep.subr.mxu0 0.0
  %260 = vmatpush1.msra.mxu0 0.0
  %261 = vmatprep.subr.mxu0 0.0
  %262 = vmatpush1.msra.mxu0 0.0
  %263 = vmatprep.subr.mxu0 0.0
  %264 = vmatpush1.msra.mxu0 0.0
  %265 = vmatprep.subr.mxu0 0.0
  %266 = vmatpush1.msra.mxu0 0.0
  %267 = vmatprep.subr.mxu0 0.0
  %268 = vmatpush1.msra.mxu0 0.0
  %269 = vmatprep.subr.mxu0 0.0
  %270 = vmatpush1.msra.mxu0 0.0
  %271 = vmatprep.subr.mxu0 0.0
  %272 = vmatpush1.msra.mxu0 0.0
  %273 = vmatprep.subr.mxu0 0.0
  %274 = vmatpush1.msra.mxu0 0.0
  %275 = vmatprep.subr.mxu0 0.0
  %276 = vmatpush1.msra.mxu0 0.0
  %277 = vmatprep.subr.mxu0 0.0
  %278 = vmatpush1.msra.mxu0 0.0
  %279 = vmatprep.subr.mxu0 0.0
  %280 = vmatpush1.msra.mxu0 0.0
  %281 = vmatprep.subr.mxu0 0.0
  %282 = vmatpush1.msra.mxu0 0.0
  %283 = vmatprep.subr.mxu0 0.0
  %284 = vmatpush1.msra.mxu0 0.0
  %285 = vmatprep.subr.mxu0 0.0
  %286 = vmatpush1.msra.mxu0 0.0
  %287 = vmatprep.subr.mxu0 0.0
  %288 = vmatpush1.msra.mxu0 0.0
  %289 = vmatprep.subr.mxu0 0.0
  %290 = vmatpush1.msra.mxu0 0.0
  %291 = vmatprep.mubr.f32.mxu0 0.0
  %292 = vmatmul.mubr.f32.gmra.mrb[0].mxu0 %v82
  %v293 = vpop.f32.mrb[0].mxu0
  %v294 = vadd.f32 %v53, %v293
  %v295 = vpop.f32.mrb[0].mxu0
  %v296 = vadd.f32 %v57, %v295
  %297 = vmatprep.mubr.f32.mxu0 0.0
  %298 = vmatmul.mubr.f32.gmra.mrb[0].mxu0 %v85
  %v299 = vpop.f32.mrb[0].mxu0
  %v300 = vadd.f32 %v53, %v299
  %v301 = vpop.f32.mrb[0].mxu0
  %v302 = vadd.f32 %v57, %v301
  %303 = vmatprep.mubr.f32.mxu0 0.0
  %304 = vmatmul.mubr.f32.gmra.mrb[0].mxu0 %v88
  %v305 = vpop.f32.mrb[0].mxu0
  %v306 = vadd.f32 %v53, %v305
  %v307 = vpop.f32.mrb[0].mxu0
  %v308 = vadd.f32 %v57, %v307
  %309 = vmatprep.mubr.f32.mxu0 0.0
  %310 = vmatmul.mubr.f32.gmra.mrb[0].mxu0 %v91
  %v311 = vpop.f32.mrb[0].mxu0
  %v312 = vadd.f32 %v53, %v311
  %v313 = vpop.f32.mrb[0].mxu0
  %v314 = vadd.f32 %v57, %v313
  %315 = vmatprep.mubr.f32.mxu0 0.0
  %316 = vmatmul.mubr.f32.gmra.mrb[0].mxu0 %v94
  %v317 = vpop.f32.mrb[0].mxu0
  %v318 = vadd.f32 %v53, %v317
  %v319 = vpop.f32.mrb[0].mxu0
  %v320 = vadd.f32 %v57, %v319
  %321 = vmatprep.mubr.f32.mxu0 0.0
  %322 = vmatmul.mubr.f32.gmra.mrb[0].mxu0 %v97
  %v323 = vpop.f32.mrb[0].mxu0
  %v324 = vadd.f32 %v53, %v323
  %v325 = vpop.f32.mrb[0].mxu0
  %v326 = vadd.f32 %v57, %v325
  %327 = vmatprep.mubr.f32.mxu0 0.0
  %328 = vmatmul.mubr.f32.gmra.mrb[0].mxu0 %v100
  %v329 = vpop.f32.mrb[0].mxu0
  %v330 = vadd.f32 %v53, %v329
  %v331 = vpop.f32.mrb[0].mxu0
  %v332 = vadd.f32 %v57, %v331
  %333 = vmatprep.mubr.f32.mxu0 0.0
  %334 = vmatmul.mubr.f32.gmra.mrb[0].mxu0 %v103
  %v335 = vpop.f32.mrb[0].mxu0
  %v336 = vadd.f32 %v53, %v335
  %v337 = vpop.f32.mrb[0].mxu0
  %v338 = vadd.f32 %v57, %v337
  %339 = vdwg.mxu0
  %340 = vst [vmem:[#allocation2] sm:$0xff] %v181
  %341 = vst [vmem:[#allocation2 + $0x8] sm:$0xff] %v183
  %342 = vst [vmem:[#allocation2 + $0x10] sm:$0xff] %v294
  %343 = vst [vmem:[#allocation2 + $0x18] sm:$0xff] %v296
  %344 = vst [vmem:[#allocation2 + $0x20] sm:$0xff] %v187
  %345 = vst [vmem:[#allocation2 + $0x28] sm:$0xff] %v189
  %346 = vst [vmem:[#allocation2 + $0x30] sm:$0xff] %v300
  %347 = vst [vmem:[#allocation2 + $0x38] sm:$0xff] %v302
  %348 = vst [vmem:[#allocation2 + $0x40] sm:$0xff] %v193
  %349 = vst [vmem:[#allocation2 + $0x48] sm:$0xff] %v195
  %350 = vst [vmem:[#allocation2 + $0x50] sm:$0xff] %v306
  %351 = vst [vmem:[#allocation2 + $0x58] sm:$0xff] %v308
  %352 = vst [vmem:[#allocation2 + $0x60] sm:$0xff] %v199
  %353 = vst [vmem:[#allocation2 + $0x68] sm:$0xff] %v201
  %354 = vst [vmem:[#allocation2 + $0x70] sm:$0xff] %v312
  %355 = vst [vmem:[#allocation2 + $0x78] sm:$0xff] %v314
  %356 = vst [vmem:[#allocation2 + $0x80] sm:$0xff] %v205
  %357 = vst [vmem:[#allocation2 + $0x88] sm:$0xff] %v207
  %358 = vst [vmem:[#allocation2 + $0x90] sm:$0xff] %v318
  %359 = vst [vmem:[#allocation2 + $0x98] sm:$0xff] %v320
  %360 = vst [vmem:[#allocation2 + $0xa0] sm:$0xff] %v211
  %361 = vst [vmem:[#allocation2 + $0xa8] sm:$0xff] %v213
  %362 = vst [vmem:[#allocation2 + $0xb0] sm:$0xff] %v324
  %363 = vst [vmem:[#allocation2 + $0xb8] sm:$0xff] %v326
  %364 = vst [vmem:[#allocation2 + $0xc0] sm:$0xff] %v217
  %365 = vst [vmem:[#allocation2 + $0xc8] sm:$0xff] %v219
  %366 = vst [vmem:[#allocation2 + $0xd0] sm:$0xff] %v330
  %367 = vst [vmem:[#allocation2 + $0xd8] sm:$0xff] %v332
  %368 = vst [vmem:[#allocation2 + $0xe0] sm:$0xff] %v223
  %369 = vst [vmem:[#allocation2 + $0xe8] sm:$0xff] %v225
  %370 = vst [vmem:[#allocation2 + $0xf0] sm:$0xff] %v336
  %371 = vst [vmem:[#allocation2 + $0xf8] sm:$0xff] %v338
  %v372 = vld [vmem:[#allocation2] sm:$0xff]
  %v373 = vld [vmem:[#allocation2 + $0x8] sm:$0xff]
  %v374 = vld [vmem:[#allocation2 + $0x10] sm:$0xff]
  %v375 = vld [vmem:[#allocation2 + $0x18] sm:$0xff]
  %v376 = vld [vmem:[%s2] sm:$0xff]
  %v377 = vld [vmem:[%s2 + $0x8] sm:$0xff]
  %v378 = vld [vmem:[%s2 + $0x10] sm:$0xff]
  %v379 = vld [vmem:[%s2 + $0x18] sm:$0xff]
  %v380 = vld [vmem:[%s2 + $0x20] sm:$0xff]
  %v381 = vld [vmem:[%s2 + $0x28] sm:$0xff]
  %v382 = vld [vmem:[%s2 + $0x30] sm:$0xff]
  %v383 = vld [vmem:[%s2 + $0x38] sm:$0xff]
  %v384 = vld [vmem:[%s2 + $0x40] sm:$0xff]
  %v385 = vld [vmem:[%s2 + $0x48] sm:$0xff]
  %v386 = vld [vmem:[%s2 + $0x50] sm:$0xff]
  %v387 = vld [vmem:[%s2 + $0x58] sm:$0xff]
  %v388 = vld [vmem:[%s2 + $0x60] sm:$0xff]
  %v389 = vld [vmem:[%s2 + $0x68] sm:$0xff]
  %v390 = vld [vmem:[%s2 + $0x70] sm:$0xff]
  %v391 = vld [vmem:[%s2 + $0x78] sm:$0xff]
  %v392 = vld [vmem:[%s2 + $0x80] sm:$0xff]
  %v393 = vld [vmem:[%s2 + $0x88] sm:$0xff]
  %v394 = vld [vmem:[%s2 + $0x90] sm:$0xff]
  %v395 = vld [vmem:[%s2 + $0x98] sm:$0xff]
  %v396 = vld [vmem:[%s2 + $0xa0] sm:$0xff]
  %v397 = vld [vmem:[%s2 + $0xa8] sm:$0xff]
  %v398 = vld [vmem:[%s2 + $0xb0] sm:$0xff]
  %v399 = vld [vmem:[%s2 + $0xb8] sm:$0xff]
  %v400 = vld [vmem:[%s2 + $0xc0] sm:$0xff]
  %v401 = vld [vmem:[%s2 + $0xc8] sm:$0xff]
  %v402 = vld [vmem:[%s2 + $0xd0] sm:$0xff]
  %v403 = vld [vmem:[%s2 + $0xd8] sm:$0xff]
  %v404 = vld [vmem:[%s2 + $0xe0] sm:$0xff]
  %v405 = vld [vmem:[%s2 + $0xe8] sm:$0xff]
  %v406 = vld [vmem:[%s2 + $0xf0] sm:$0xff]
  %v407 = vld [vmem:[%s2 + $0xf8] sm:$0xff]
  %v408 = vld [vmem:[%s2 + $0x100] sm:$0xff]
  %v409 = vld [vmem:[%s2 + $0x108] sm:$0xff]
  %v410 = vld [vmem:[%s2 + $0x110] sm:$0xff]
  %v411 = vld [vmem:[%s2 + $0x118] sm:$0xff]
  %v412 = vld [vmem:[%s2 + $0x120] sm:$0xff]
  %v413 = vld [vmem:[%s2 + $0x128] sm:$0xff]
  %v414 = vld [vmem:[%s2 + $0x130] sm:$0xff]
  %v415 = vld [vmem:[%s2 + $0x138] sm:$0xff]
  %v416 = vld [vmem:[%s2 + $0x140] sm:$0xff]
  %v417 = vld [vmem:[%s2 + $0x148] sm:$0xff]
  %v418 = vld [vmem:[%s2 + $0x150] sm:$0xff]
  %v419 = vld [vmem:[%s2 + $0x158] sm:$0xff]
  %v420 = vld [vmem:[%s2 + $0x160] sm:$0xff]
  %v421 = vld [vmem:[%s2 + $0x168] sm:$0xff]
  %v422 = vld [vmem:[%s2 + $0x170] sm:$0xff]
  %v423 = vld [vmem:[%s2 + $0x178] sm:$0xff]
  %v424 = vld [vmem:[%s2 + $0x180] sm:$0xff]
  %v425 = vld [vmem:[%s2 + $0x188] sm:$0xff]
  %v426 = vld [vmem:[%s2 + $0x190] sm:$0xff]
  %v427 = vld [vmem:[%s2 + $0x198] sm:$0xff]
  %v428 = vld [vmem:[%s2 + $0x1a0] sm:$0xff]
  %v429 = vld [vmem:[%s2 + $0x1a8] sm:$0xff]
  %v430 = vld [vmem:[%s2 + $0x1b0] sm:$0xff]
  %v431 = vld [vmem:[%s2 + $0x1b8] sm:$0xff]
  %v432 = vld [vmem:[%s2 + $0x1c0] sm:$0xff]
  %v433 = vld [vmem:[%s2 + $0x1c8] sm:$0xff]
  %v434 = vld [vmem:[%s2 + $0x1d0] sm:$0xff]
  %v435 = vld [vmem:[%s2 + $0x1d8] sm:$0xff]
  %v436 = vld [vmem:[%s2 + $0x1e0] sm:$0xff]
  %v437 = vld [vmem:[%s2 + $0x1e8] sm:$0xff]
  %v438 = vld [vmem:[%s2 + $0x1f0] sm:$0xff]
  %v439 = vld [vmem:[%s2 + $0x1f8] sm:$0xff]
  %440 = vmatprep.subr.mxu0 %v377
  %441 = vmatpush1.msra.mxu0 %v376
  %442 = vmatprep.subr.mxu0 %v381
  %443 = vmatpush1.msra.mxu0 %v380
  %444 = vmatprep.subr.mxu0 %v385
  %445 = vmatpush1.msra.mxu0 %v384
  %446 = vmatprep.subr.mxu0 %v389
  %447 = vmatpush1.msra.mxu0 %v388
  %448 = vmatprep.subr.mxu0 %v393
  %449 = vmatpush1.msra.mxu0 %v392
  %450 = vmatprep.subr.mxu0 %v397
  %451 = vmatpush1.msra.mxu0 %v396
  %452 = vmatprep.subr.mxu0 %v401
  %453 = vmatpush1.msra.mxu0 %v400
  %454 = vmatprep.subr.mxu0 %v405
  %455 = vmatpush1.msra.mxu0 %v404
  %456 = vmatprep.subr.mxu0 %v409
  %457 = vmatpush1.msra.mxu0 %v408
  %458 = vmatprep.subr.mxu0 %v413
  %459 = vmatpush1.msra.mxu0 %v412
  %460 = vmatprep.subr.mxu0 %v417
  %461 = vmatpush1.msra.mxu0 %v416
  %462 = vmatprep.subr.mxu0 %v421
  %463 = vmatpush1.msra.mxu0 %v420
  %464 = vmatprep.subr.mxu0 %v425
  %465 = vmatpush1.msra.mxu0 %v424
  %466 = vmatprep.subr.mxu0 %v429
  %467 = vmatpush1.msra.mxu0 %v428
  %468 = vmatprep.subr.mxu0 %v433
  %469 = vmatpush1.msra.mxu0 %v432
  %470 = vmatprep.subr.mxu0 %v437
  %471 = vmatpush1.msra.mxu0 %v436
  %472 = vmatprep.subr.mxu0 0.0
  %473 = vmatpush1.msra.mxu0 0.0
  %474 = vmatprep.subr.mxu0 0.0
  %475 = vmatpush1.msra.mxu0 0.0
  %476 = vmatprep.subr.mxu0 0.0
  %477 = vmatpush1.msra.mxu0 0.0
  %478 = vmatprep.subr.mxu0 0.0
  %479 = vmatpush1.msra.mxu0 0.0
  %480 = vmatprep.subr.mxu0 0.0
  %481 = vmatpush1.msra.mxu0 0.0
  %482 = vmatprep.subr.mxu0 0.0
  %483 = vmatpush1.msra.mxu0 0.0
  %484 = vmatprep.subr.mxu0 0.0
  %485 = vmatpush1.msra.mxu0 0.0
  %486 = vmatprep.subr.mxu0 0.0
  %487 = vmatpush1.msra.mxu0 0.0
  %488 = vmatprep.subr.mxu0 0.0
  %489 = vmatpush1.msra.mxu0 0.0
  %490 = vmatprep.subr.mxu0 0.0
  %491 = vmatpush1.msra.mxu0 0.0
  %492 = vmatprep.subr.mxu0 0.0
  %493 = vmatpush1.msra.mxu0 0.0
  %494 = vmatprep.subr.mxu0 0.0
  %495 = vmatpush1.msra.mxu0 0.0
  %496 = vmatprep.subr.mxu0 0.0
  %497 = vmatpush1.msra.mxu0 0.0
  %498 = vmatprep.subr.mxu0 0.0
  %499 = vmatpush1.msra.mxu0 0.0
  %500 = vmatprep.subr.mxu0 0.0
  %501 = vmatpush1.msra.mxu0 0.0
  %502 = vmatprep.subr.mxu0 0.0
  %503 = vmatpush1.msra.mxu0 0.0
  %504 = vmatprep.mubr.f32.mxu0 0.0
  %505 = vmatmul.mubr.f32.gmra.mrb[0].mxu0 0.0
  %v506 = vpop.f32.mrb[0].mxu0
  %v507 = vadd.f32 0.0, %v506
  %v508 = vpop.f32.mrb[0].mxu0
  %v509 = vadd.f32 0.0, %v508
  %510 = vdwg.mxu0
  %511 = vmatprep.subr.mxu0 %v379
  %512 = vmatpush1.msra.mxu0 %v378
  %513 = vmatprep.subr.mxu0 %v383
  %514 = vmatpush1.msra.mxu0 %v382
  %515 = vmatprep.subr.mxu0 %v387
  %516 = vmatpush1.msra.mxu0 %v386
  %517 = vmatprep.subr.mxu0 %v391
  %518 = vmatpush1.msra.mxu0 %v390
  %519 = vmatprep.subr.mxu0 %v395
  %520 = vmatpush1.msra.mxu0 %v394
  %521 = vmatprep.subr.mxu0 %v399
  %522 = vmatpush1.msra.mxu0 %v398
  %523 = vmatprep.subr.mxu0 %v403
  %524 = vmatpush1.msra.mxu0 %v402
  %525 = vmatprep.subr.mxu0 %v407
  %526 = vmatpush1.msra.mxu0 %v406
  %527 = vmatprep.subr.mxu0 %v411
  %528 = vmatpush1.msra.mxu0 %v410
  %529 = vmatprep.subr.mxu0 %v415
  %530 = vmatpush1.msra.mxu0 %v414
  %531 = vmatprep.subr.mxu0 %v419
  %532 = vmatpush1.msra.mxu0 %v418
  %533 = vmatprep.subr.mxu0 %v423
  %534 = vmatpush1.msra.mxu0 %v422
  %535 = vmatprep.subr.mxu0 %v427
  %536 = vmatpush1.msra.mxu0 %v426
  %537 = vmatprep.subr.mxu0 %v431
  %538 = vmatpush1.msra.mxu0 %v430
  %539 = vmatprep.subr.mxu0 %v435
  %540 = vmatpush1.msra.mxu0 %v434
  %541 = vmatprep.subr.mxu0 %v439
  %542 = vmatpush1.msra.mxu0 %v438
  %543 = vmatprep.subr.mxu0 0.0
  %544 = vmatpush1.msra.mxu0 0.0
  %545 = vmatprep.subr.mxu0 0.0
  %546 = vmatpush1.msra.mxu0 0.0
  %547 = vmatprep.subr.mxu0 0.0
  %548 = vmatpush1.msra.mxu0 0.0
  %549 = vmatprep.subr.mxu0 0.0
  %550 = vmatpush1.msra.mxu0 0.0
  %551 = vmatprep.subr.mxu0 0.0
  %552 = vmatpush1.msra.mxu0 0.0
  %553 = vmatprep.subr.mxu0 0.0
  %554 = vmatpush1.msra.mxu0 0.0
  %555 = vmatprep.subr.mxu0 0.0
  %556 = vmatpush1.msra.mxu0 0.0
  %557 = vmatprep.subr.mxu0 0.0
  %558 = vmatpush1.msra.mxu0 0.0
  %559 = vmatprep.subr.mxu0 0.0
  %560 = vmatpush1.msra.mxu0 0.0
  %561 = vmatprep.subr.mxu0 0.0
  %562 = vmatpush1.msra.mxu0 0.0
  %563 = vmatprep.subr.mxu0 0.0
  %564 = vmatpush1.msra.mxu0 0.0
  %565 = vmatprep.subr.mxu0 0.0
  %566 = vmatpush1.msra.mxu0 0.0
  %567 = vmatprep.subr.mxu0 0.0
  %568 = vmatpush1.msra.mxu0 0.0
  %569 = vmatprep.subr.mxu0 0.0
  %570 = vmatpush1.msra.mxu0 0.0
  %571 = vmatprep.subr.mxu0 0.0
  %572 = vmatpush1.msra.mxu0 0.0
  %573 = vmatprep.subr.mxu0 0.0
  %574 = vmatpush1.msra.mxu0 0.0
  %575 = vmatprep.mubr.f32.mxu0 0.0
  %576 = vmatmul.mubr.f32.gmra.mrb[0].mxu0 0.0
  %v577 = vpop.f32.mrb[0].mxu0
  %v578 = vadd.f32 0.0, %v577
  %v579 = vpop.f32.mrb[0].mxu0
  %v580 = vadd.f32 0.0, %v579
  %581 = vdwg.mxu0
  %v582 = vadd.f32 %v372, %v507
  %v583 = vadd.f32 %v373, %v509
  %v584 = vadd.f32 %v374, %v578
  %v585 = vadd.f32 %v375, %v580
  %v586 = vxor.u32 %v582, 2147483648
  %v587 = vmul.f32 %v586, 1.442695
  %v588 = vpow.pop %v587
  %v589 = vadd.f32 %v588, 1.0
  %v590 = vrcp.pop %v589
  %v591 = vmul.f32 1.0, %v590
  %v592 = vxor.u32 %v583, 2147483648
  %v593 = vmul.f32 %v592, 1.442695
  %v594 = vpow.pop %v593
  %v595 = vadd.f32 %v594, 1.0
  %v596 = vrcp.pop %v595
  %v597 = vmul.f32 1.0, %v596
  %v598 = vtanh.pop %v584
  %v599 = vxor.u32 %v585, 2147483648
  %v600 = vmul.f32 %v599, 1.442695
  %v601 = vpow.pop %v600
  %v602 = vadd.f32 %v601, 1.0
  %v603 = vrcp.pop %v602
  %v604 = vmul.f32 1.0, %v603
  %v605 = vmul.f32 %v597, 0.0
  %v606 = vmul.f32 %v591, %v598
  %v607 = vadd.f32 %v605, %v606
  %v608 = vtanh.pop %v607
  %v609 = vmul.f32 %v604, %v608
  %v610 = vld [vmem:[%s4] sm:$0xff]
  %v611 = vld [vmem:[%s4 + $0x8] sm:$0xff]
  %v612 = vld [vmem:[%s4 + $0x10] sm:$0xff]
  %v613 = vld [vmem:[%s4 + $0x18] sm:$0xff]
  %v614 = vld [vmem:[%s4 + $0x20] sm:$0xff]
  %v615 = vld [vmem:[%s4 + $0x28] sm:$0xff]
  %v616 = vld [vmem:[%s4 + $0x30] sm:$0xff]
  %v617 = vld [vmem:[%s4 + $0x38] sm:$0xff]
  %v618 = vld [vmem:[%s4 + $0x40] sm:$0xff]
  %v619 = vld [vmem:[%s4 + $0x48] sm:$0xff]
  %v620 = vld [vmem:[%s4 + $0x50] sm:$0xff]
  %v621 = vld [vmem:[%s4 + $0x58] sm:$0xff]
  %v622 = vld [vmem:[%s4 + $0x60] sm:$0xff]
  %v623 = vld [vmem:[%s4 + $0x68] sm:$0xff]
  %v624 = vld [vmem:[%s4 + $0x70] sm:$0xff]
  %v625 = vld [vmem:[%s4 + $0x78] sm:$0xff]
  %v626 = vld [vmem:[%s4 + $0x80] sm:$0xff]
  %v627 = vld [vmem:[%s4 + $0x88] sm:$0xff]
  %v628 = vld [vmem:[%s4 + $0x90] sm:$0xff]
  %v629 = vld [vmem:[%s4 + $0x98] sm:$0xff]
  %v630 = vld [vmem:[%s4 + $0xa0] sm:$0xff]
  %v631 = vld [vmem:[%s4 + $0xa8] sm:$0xff]
  %v632 = vld [vmem:[%s4 + $0xb0] sm:$0xff]
  %v633 = vld [vmem:[%s4 + $0xb8] sm:$0xff]
  %v634 = vld [vmem:[%s4 + $0xc0] sm:$0xff]
  %v635 = vld [vmem:[%s4 + $0xc8] sm:$0xff]
  %v636 = vld [vmem:[%s4 + $0xd0] sm:$0xff]
  %v637 = vld [vmem:[%s4 + $0xd8] sm:$0xff]
  %v638 = vld [vmem:[%s4 + $0xe0] sm:$0xff]
  %v639 = vld [vmem:[%s4 + $0xe8] sm:$0xff]
  %v640 = vld [vmem:[%s4 + $0xf0] sm:$0xff]
  %v641 = vld [vmem:[%s4 + $0xf8] sm:$0xff]
  %v642 = vld [vmem:[%s4 + $0x100] sm:$0xff]
  %v643 = vld [vmem:[%s4 + $0x108] sm:$0xff]
  %v644 = vld [vmem:[%s4 + $0x110] sm:$0xff]
  %v645 = vld [vmem:[%s4 + $0x118] sm:$0xff]
  %v646 = vld [vmem:[%s4 + $0x120] sm:$0xff]
  %v647 = vld [vmem:[%s4 + $0x128] sm:$0xff]
  %v648 = vld [vmem:[%s4 + $0x130] sm:$0xff]
  %v649 = vld [vmem:[%s4 + $0x138] sm:$0xff]
  %v650 = vld [vmem:[%s4 + $0x140] sm:$0xff]
  %v651 = vld [vmem:[%s4 + $0x148] sm:$0xff]
  %v652 = vld [vmem:[%s4 + $0x150] sm:$0xff]
  %v653 = vld [vmem:[%s4 + $0x158] sm:$0xff]
  %v654 = vld [vmem:[%s4 + $0x160] sm:$0xff]
  %v655 = vld [vmem:[%s4 + $0x168] sm:$0xff]
  %v656 = vld [vmem:[%s4 + $0x170] sm:$0xff]
  %v657 = vld [vmem:[%s4 + $0x178] sm:$0xff]
  %v658 = vld [vmem:[%s4 + $0x180] sm:$0xff]
  %v659 = vld [vmem:[%s4 + $0x188] sm:$0xff]
  %v660 = vld [vmem:[%s4 + $0x190] sm:$0xff]
  %v661 = vld [vmem:[%s4 + $0x198] sm:$0xff]
  %v662 = vld [vmem:[%s4 + $0x1a0] sm:$0xff]
  %v663 = vld [vmem:[%s4 + $0x1a8] sm:$0xff]
  %v664 = vld [vmem:[%s4 + $0x1b0] sm:$0xff]
  %v665 = vld [vmem:[%s4 + $0x1b8] sm:$0xff]
  %v666 = vld [vmem:[%s4 + $0x1c0] sm:$0xff]
  %v667 = vld [vmem:[%s4 + $0x1c8] sm:$0xff]
  %v668 = vld [vmem:[%s4 + $0x1d0] sm:$0xff]
  %v669 = vld [vmem:[%s4 + $0x1d8] sm:$0xff]
  %v670 = vld [vmem:[%s4 + $0x1e0] sm:$0xff]
  %v671 = vld [vmem:[%s4 + $0x1e8] sm:$0xff]
  %v672 = vld [vmem:[%s4 + $0x1f0] sm:$0xff]
  %v673 = vld [vmem:[%s4 + $0x1f8] sm:$0xff]
  %v674 = vld [vmem:[%s4 + $0x200] sm:$0xff]
  %v675 = vld [vmem:[%s4 + $0x208] sm:$0xff]
  %v676 = vld [vmem:[%s4 + $0x210] sm:$0xff]
  %v677 = vld [vmem:[%s4 + $0x218] sm:$0xff]
  %v678 = vld [vmem:[%s4 + $0x220] sm:$0xff]
  %v679 = vld [vmem:[%s4 + $0x228] sm:$0xff]
  %v680 = vld [vmem:[%s4 + $0x230] sm:$0xff]
  %v681 = vld [vmem:[%s4 + $0x238] sm:$0xff]
  %v682 = vld [vmem:[%s4 + $0x240] sm:$0xff]
  %v683 = vld [vmem:[%s4 + $0x248] sm:$0xff]
  %v684 = vld [vmem:[%s4 + $0x250] sm:$0xff]
  %v685 = vld [vmem:[%s4 + $0x258] sm:$0xff]
  %v686 = vld [vmem:[%s4 + $0x260] sm:$0xff]
  %v687 = vld [vmem:[%s4 + $0x268] sm:$0xff]
  %v688 = vld [vmem:[%s4 + $0x270] sm:$0xff]
  %v689 = vld [vmem:[%s4 + $0x278] sm:$0xff]
  %v690 = vld [vmem:[%s4 + $0x280] sm:$0xff]
  %v691 = vld [vmem:[%s4 + $0x288] sm:$0xff]
  %v692 = vld [vmem:[%s4 + $0x290] sm:$0xff]
  %v693 = vld [vmem:[%s4 + $0x298] sm:$0xff]
  %v694 = vld [vmem:[%s4 + $0x2a0] sm:$0xff]
  %v695 = vld [vmem:[%s4 + $0x2a8] sm:$0xff]
  %v696 = vld [vmem:[%s4 + $0x2b0] sm:$0xff]
  %v697 = vld [vmem:[%s4 + $0x2b8] sm:$0xff]
  %v698 = vld [vmem:[%s4 + $0x2c0] sm:$0xff]
  %v699 = vld [vmem:[%s4 + $0x2c8] sm:$0xff]
  %v700 = vld [vmem:[%s4 + $0x2d0] sm:$0xff]
  %v701 = vld [vmem:[%s4 + $0x2d8] sm:$0xff]
  %v702 = vld [vmem:[%s4 + $0x2e0] sm:$0xff]
  %v703 = vld [vmem:[%s4 + $0x2e8] sm:$0xff]
  %v704 = vld [vmem:[%s4 + $0x2f0] sm:$0xff]
  %v705 = vld [vmem:[%s4 + $0x2f8] sm:$0xff]
  %v706 = vld [vmem:[%s4 + $0x300] sm:$0xff]
  %v707 = vld [vmem:[%s4 + $0x308] sm:$0xff]
  %v708 = vld [vmem:[%s4 + $0x310] sm:$0xff]
  %v709 = vld [vmem:[%s4 + $0x318] sm:$0xff]
  %v710 = vld [vmem:[%s4 + $0x320] sm:$0xff]
  %v711 = vld [vmem:[%s4 + $0x328] sm:$0xff]
  %v712 = vld [vmem:[%s4 + $0x330] sm:$0xff]
  %v713 = vld [vmem:[%s4 + $0x338] sm:$0xff]
  %v714 = vld [vmem:[%s4 + $0x340] sm:$0xff]
  %v715 = vld [vmem:[%s4 + $0x348] sm:$0xff]
  %v716 = vld [vmem:[%s4 + $0x350] sm:$0xff]
  %v717 = vld [vmem:[%s4 + $0x358] sm:$0xff]
  %v718 = vld [vmem:[%s4 + $0x360] sm:$0xff]
  %v719 = vld [vmem:[%s4 + $0x368] sm:$0xff]
  %v720 = vld [vmem:[%s4 + $0x370] sm:$0xff]
  %v721 = vld [vmem:[%s4 + $0x378] sm:$0xff]
  %v722 = vld [vmem:[%s4 + $0x380] sm:$0xff]
  %v723 = vld [vmem:[%s4 + $0x388] sm:$0xff]
  %v724 = vld [vmem:[%s4 + $0x390] sm:$0xff]
  %v725 = vld [vmem:[%s4 + $0x398] sm:$0xff]
  %v726 = vld [vmem:[%s4 + $0x3a0] sm:$0xff]
  %v727 = vld [vmem:[%s4 + $0x3a8] sm:$0xff]
  %v728 = vld [vmem:[%s4 + $0x3b0] sm:$0xff]
  %v729 = vld [vmem:[%s4 + $0x3b8] sm:$0xff]
  %v730 = vld [vmem:[%s4 + $0x3c0] sm:$0xff]
  %v731 = vld [vmem:[%s4 + $0x3c8] sm:$0xff]
  %v732 = vld [vmem:[%s4 + $0x3d0] sm:$0xff]
  %v733 = vld [vmem:[%s4 + $0x3d8] sm:$0xff]
  %v734 = vld [vmem:[%s4 + $0x3e0] sm:$0xff]
  %v735 = vld [vmem:[%s4 + $0x3e8] sm:$0xff]
  %v736 = vld [vmem:[%s4 + $0x3f0] sm:$0xff]
  %v737 = vld [vmem:[%s4 + $0x3f8] sm:$0xff]
  %v738 = vld [vmem:[%s5] sm:$0xf]
  %v740 = vlaneseq
  %v741 = vshrl.u32 %v740, 7
  %v742 = vsub.s32 0, %v741
  %v743 = vrot.slane %v738, %v742
  %v744 = vlaneseq
  %v745 = vshrl.u32 %v744, 7
  %v746 = vsub.s32 1, %v745
  %v747 = vrot.slane %v738, %v746
  %v748 = vlaneseq
  %v749 = vshrl.u32 %v748, 7
  %v750 = vsub.s32 2, %v749
  %v751 = vrot.slane %v738, %v750
  %v752 = vlaneseq
  %v753 = vshrl.u32 %v752, 7
  %v754 = vsub.s32 3, %v753
  %v755 = vrot.slane %v738, %v754
  %760 = vmatprep.subr.mxu0 %v611
  %761 = vmatpush1.msra.mxu0 %v610
  %762 = vmatprep.subr.mxu0 %v615
  %763 = vmatpush1.msra.mxu0 %v614
  %764 = vmatprep.subr.mxu0 %v619
  %765 = vmatpush1.msra.mxu0 %v618
  %766 = vmatprep.subr.mxu0 %v623
  %767 = vmatpush1.msra.mxu0 %v622
  %768 = vmatprep.subr.mxu0 %v627
  %769 = vmatpush1.msra.mxu0 %v626
  %770 = vmatprep.subr.mxu0 %v631
  %771 = vmatpush1.msra.mxu0 %v630
  %772 = vmatprep.subr.mxu0 %v635
  %773 = vmatpush1.msra.mxu0 %v634
  %774 = vmatprep.subr.mxu0 %v639
  %775 = vmatpush1.msra.mxu0 %v638
  %776 = vmatprep.subr.mxu0 %v643
  %777 = vmatpush1.msra.mxu0 %v642
  %778 = vmatprep.subr.mxu0 %v647
  %779 = vmatpush1.msra.mxu0 %v646
  %780 = vmatprep.subr.mxu0 %v651
  %781 = vmatpush1.msra.mxu0 %v650
  %782 = vmatprep.subr.mxu0 %v655
  %783 = vmatpush1.msra.mxu0 %v654
  %784 = vmatprep.subr.mxu0 %v659
  %785 = vmatpush1.msra.mxu0 %v658
  %786 = vmatprep.subr.mxu0 %v663
  %787 = vmatpush1.msra.mxu0 %v662
  %788 = vmatprep.subr.mxu0 %v667
  %789 = vmatpush1.msra.mxu0 %v666
  %790 = vmatprep.subr.mxu0 %v671
  %791 = vmatpush1.msra.mxu0 %v670
  %792 = vmatprep.subr.mxu0 %v675
  %793 = vmatpush1.msra.mxu0 %v674
  %794 = vmatprep.subr.mxu0 %v679
  %795 = vmatpush1.msra.mxu0 %v678
  %796 = vmatprep.subr.mxu0 %v683
  %797 = vmatpush1.msra.mxu0 %v682
  %798 = vmatprep.subr.mxu0 %v687
  %799 = vmatpush1.msra.mxu0 %v686
  %800 = vmatprep.subr.mxu0 %v691
  %801 = vmatpush1.msra.mxu0 %v690
  %802 = vmatprep.subr.mxu0 %v695
  %803 = vmatpush1.msra.mxu0 %v694
  %804 = vmatprep.subr.mxu0 %v699
  %805 = vmatpush1.msra.mxu0 %v698
  %806 = vmatprep.subr.mxu0 %v703
  %807 = vmatpush1.msra.mxu0 %v702
  %808 = vmatprep.subr.mxu0 %v707
  %809 = vmatpush1.msra.mxu0 %v706
  %810 = vmatprep.subr.mxu0 %v711
  %811 = vmatpush1.msra.mxu0 %v710
  %812 = vmatprep.subr.mxu0 %v715
  %813 = vmatpush1.msra.mxu0 %v714
  %814 = vmatprep.subr.mxu0 %v719
  %815 = vmatpush1.msra.mxu0 %v718
  %816 = vmatprep.subr.mxu0 %v723
  %817 = vmatpush1.msra.mxu0 %v722
  %818 = vmatprep.subr.mxu0 %v727
  %819 = vmatpush1.msra.mxu0 %v726
  %820 = vmatprep.subr.mxu0 %v731
  %821 = vmatpush1.msra.mxu0 %v730
  %822 = vmatprep.subr.mxu0 %v735
  %823 = vmatpush1.msra.mxu0 %v734
  %824 = vmatprep.mubr.f32.mxu0 0.0
  %825 = vmatmul.mubr.f32.gmra.mrb[0].mxu0 %v609
  %v826 = vpop.f32.mrb[0].mxu0
  %v827 = vadd.f32 %v743, %v826
  %v828 = vpop.f32.mrb[0].mxu0
  %v829 = vadd.f32 %v747, %v828
  %830 = vdwg.mxu0
  %831 = vmatprep.subr.mxu0 %v613
  %832 = vmatpush1.msra.mxu0 %v612
  %833 = vmatprep.subr.mxu0 %v617
  %834 = vmatpush1.msra.mxu0 %v616
  %835 = vmatprep.subr.mxu0 %v621
  %836 = vmatpush1.msra.mxu0 %v620
  %837 = vmatprep.subr.mxu0 %v625
  %838 = vmatpush1.msra.mxu0 %v624
  %839 = vmatprep.subr.mxu0 %v629
  %840 = vmatpush1.msra.mxu0 %v628
  %841 = vmatprep.subr.mxu0 %v633
  %842 = vmatpush1.msra.mxu0 %v632
  %843 = vmatprep.subr.mxu0 %v637
  %844 = vmatpush1.msra.mxu0 %v636
  %845 = vmatprep.subr.mxu0 %v641
  %846 = vmatpush1.msra.mxu0 %v640
  %847 = vmatprep.subr.mxu0 %v645
  %848 = vmatpush1.msra.mxu0 %v644
  %849 = vmatprep.subr.mxu0 %v649
  %850 = vmatpush1.msra.mxu0 %v648
  %851 = vmatprep.subr.mxu0 %v653
  %852 = vmatpush1.msra.mxu0 %v652
  %853 = vmatprep.subr.mxu0 %v657
  %854 = vmatpush1.msra.mxu0 %v656
  %855 = vmatprep.subr.mxu0 %v661
  %856 = vmatpush1.msra.mxu0 %v660
  %857 = vmatprep.subr.mxu0 %v665
  %858 = vmatpush1.msra.mxu0 %v664
  %859 = vmatprep.subr.mxu0 %v669
  %860 = vmatpush1.msra.mxu0 %v668
  %861 = vmatprep.subr.mxu0 %v673
  %862 = vmatpush1.msra.mxu0 %v672
  %863 = vmatprep.subr.mxu0 %v677
  %864 = vmatpush1.msra.mxu0 %v676
  %865 = vmatprep.subr.mxu0 %v681
  %866 = vmatpush1.msra.mxu0 %v680
  %867 = vmatprep.subr.mxu0 %v685
  %868 = vmatpush1.msra.mxu0 %v684
  %869 = vmatprep.subr.mxu0 %v689
  %870 = vmatpush1.msra.mxu0 %v688
  %871 = vmatprep.subr.mxu0 %v693
  %872 = vmatpush1.msra.mxu0 %v692
  %873 = vmatprep.subr.mxu0 %v697
  %874 = vmatpush1.msra.mxu0 %v696
  %875 = vmatprep.subr.mxu0 %v701
  %876 = vmatpush1.msra.mxu0 %v700
  %877 = vmatprep.subr.mxu0 %v705
  %878 = vmatpush1.msra.mxu0 %v704
  %879 = vmatprep.subr.mxu0 %v709
  %880 = vmatpush1.msra.mxu0 %v708
  %881 = vmatprep.subr.mxu0 %v713
  %882 = vmatpush1.msra.mxu0 %v712
  %883 = vmatprep.subr.mxu0 %v717
  %884 = vmatpush1.msra.mxu0 %v716
  %885 = vmatprep.subr.mxu0 %v721
  %886 = vmatpush1.msra.mxu0 %v720
  %887 = vmatprep.subr.mxu0 %v725
  %888 = vmatpush1.msra.mxu0 %v724
  %889 = vmatprep.subr.mxu0 %v729
  %890 = vmatpush1.msra.mxu0 %v728
  %891 = vmatprep.subr.mxu0 %v733
  %892 = vmatpush1.msra.mxu0 %v732
  %893 = vmatprep.subr.mxu0 %v737
  %894 = vmatpush1.msra.mxu0 %v736
  %895 = vmatprep.mubr.f32.mxu0 0.0
  %896 = vmatmul.mubr.f32.gmra.mrb[0].mxu0 %v609
  %v897 = vpop.f32.mrb[0].mxu0
  %v898 = vadd.f32 %v751, %v897
  %v899 = vpop.f32.mrb[0].mxu0
  %v900 = vadd.f32 %v755, %v899
  %901 = vdwg.mxu0
  %v902 = vxor.u32 %v827, 2147483648
  %v903 = vmul.f32 %v902, 1.442695
  %v904 = vpow.pop %v903
  %v905 = vadd.f32 %v904, 1.0
  %v906 = vrcp.pop %v905
  %v907 = vmul.f32 1.0, %v906
  %v908 = vxor.u32 %v829, 2147483648
  %v909 = vmul.f32 %v908, 1.442695
  %v910 = vpow.pop %v909
  %v911 = vadd.f32 %v910, 1.0
  %v912 = vrcp.pop %v911
  %v913 = vmul.f32 1.0, %v912
  %v914 = vtanh.pop %v898
  %v915 = vxor.u32 %v900, 2147483648
  %v916 = vmul.f32 %v915, 1.442695
  %v917 = vpow.pop %v916
  %v918 = vadd.f32 %v917, 1.0
  %v919 = vrcp.pop %v918
  %v920 = vmul.f32 1.0, %v919
  %v921 = vmul.f32 %v913, 0.0
  %v922 = vmul.f32 %v907, %v914
  %v923 = vadd.f32 %v921, %v922
  %v924 = vtanh.pop %v923
  %v925 = vmul.f32 %v920, %v924
  %s926 = smul.u32 1, 4
  %s927 = smul.addr %s926, 8
  %s928 = scalar_lea.vmem [#allocation2], %s927
  %v929 = vld [vmem:[%s928] sm:$0xff]
  %v930 = vld [vmem:[%s928 + $0x8] sm:$0xff]
  %v931 = vld [vmem:[%s928 + $0x10] sm:$0xff]
  %v932 = vld [vmem:[%s928 + $0x18] sm:$0xff]
  %933 = vmatprep.subr.mxu0 %v377
  %934 = vmatpush1.msra.mxu0 %v376
  %935 = vmatprep.subr.mxu0 %v381
  %936 = vmatpush1.msra.mxu0 %v380
  %937 = vmatprep.subr.mxu0 %v385
  %938 = vmatpush1.msra.mxu0 %v384
  %939 = vmatprep.subr.mxu0 %v389
  %940 = vmatpush1.msra.mxu0 %v388
  %941 = vmatprep.subr.mxu0 %v393
  %942 = vmatpush1.msra.mxu0 %v392
  %943 = vmatprep.subr.mxu0 %v397
  %944 = vmatpush1.msra.mxu0 %v396
  %945 = vmatprep.subr.mxu0 %v401
  %946 = vmatpush1.msra.mxu0 %v400
  %947 = vmatprep.subr.mxu0 %v405
  %948 = vmatpush1.msra.mxu0 %v404
  %949 = vmatprep.subr.mxu0 %v409
  %950 = vmatpush1.msra.mxu0 %v408
  %951 = vmatprep.subr.mxu0 %v413
  %952 = vmatpush1.msra.mxu0 %v412
  %953 = vmatprep.subr.mxu0 %v417
  %954 = vmatpush1.msra.mxu0 %v416
  %955 = vmatprep.subr.mxu0 %v421
  %956 = vmatpush1.msra.mxu0 %v420
  %957 = vmatprep.subr.mxu0 %v425
  %958 = vmatpush1.msra.mxu0 %v424
  %959 = vmatprep.subr.mxu0 %v429
  %960 = vmatpush1.msra.mxu0 %v428
  %961 = vmatprep.subr.mxu0 %v433
  %962 = vmatpush1.msra.mxu0 %v432
  %963 = vmatprep.subr.mxu0 %v437
  %964 = vmatpush1.msra.mxu0 %v436
  %965 = vmatprep.subr.mxu0 0.0
  %966 = vmatpush1.msra.mxu0 0.0
  %967 = vmatprep.subr.mxu0 0.0
  %968 = vmatpush1.msra.mxu0 0.0
  %969 = vmatprep.subr.mxu0 0.0
  %970 = vmatpush1.msra.mxu0 0.0
  %971 = vmatprep.subr.mxu0 0.0
  %972 = vmatpush1.msra.mxu0 0.0
  %973 = vmatprep.subr.mxu0 0.0
  %974 = vmatpush1.msra.mxu0 0.0
  %975 = vmatprep.subr.mxu0 0.0
  %976 = vmatpush1.msra.mxu0 0.0
  %977 = vmatprep.subr.mxu0 0.0
  %978 = vmatpush1.msra.mxu0 0.0
  %979 = vmatprep.subr.mxu0 0.0
  %980 = vmatpush1.msra.mxu0 0.0
  %981 = vmatprep.subr.mxu0 0.0
  %982 = vmatpush1.msra.mxu0 0.0
  %983 = vmatprep.subr.mxu0 0.0
  %984 = vmatpush1.msra.mxu0 0.0
  %985 = vmatprep.subr.mxu0 0.0
  %986 = vmatpush1.msra.mxu0 0.0
  %987 = vmatprep.subr.mxu0 0.0
  %988 = vmatpush1.msra.mxu0 0.0
  %989 = vmatprep.subr.mxu0 0.0
  %990 = vmatpush1.msra.mxu0 0.0
  %991 = vmatprep.subr.mxu0 0.0
  %992 = vmatpush1.msra.mxu0 0.0
  %993 = vmatprep.subr.mxu0 0.0
  %994 = vmatpush1.msra.mxu0 0.0
  %995 = vmatprep.subr.mxu0 0.0
  %996 = vmatpush1.msra.mxu0 0.0
  %997 = vmatprep.mubr.f32.mxu0 0.0
  %998 = vmatmul.mubr.f32.gmra.mrb[0].mxu0 %v609
  %v999 = vpop.f32.mrb[0].mxu0
  %v1000 = vadd.f32 0.0, %v999
  %v1001 = vpop.f32.mrb[0].mxu0
  %v1002 = vadd.f32 0.0, %v1001
  %1003 = vdwg.mxu0
  %1004 = vmatprep.subr.mxu0 %v379
  %1005 = vmatpush1.msra.mxu0 %v378
  %1006 = vmatprep.subr.mxu0 %v383
  %1007 = vmatpush1.msra.mxu0 %v382
  %1008 = vmatprep.subr.mxu0 %v387
  %1009 = vmatpush1.msra.mxu0 %v386
  %1010 = vmatprep.subr.mxu0 %v391
  %1011 = vmatpush1.msra.mxu0 %v390
  %1012 = vmatprep.subr.mxu0 %v395
  %1013 = vmatpush1.msra.mxu0 %v394
  %1014 = vmatprep.subr.mxu0 %v399
  %1015 = vmatpush1.msra.mxu0 %v398
  %1016 = vmatprep.subr.mxu0 %v403
  %1017 = vmatpush1.msra.mxu0 %v402
  %1018 = vmatprep.subr.mxu0 %v407
  %1019 = vmatpush1.msra.mxu0 %v406
  %1020 = vmatprep.subr.mxu0 %v411
  %1021 = vmatpush1.msra.mxu0 %v410
  %1022 = vmatprep.subr.mxu0 %v415
  %1023 = vmatpush1.msra.mxu0 %v414
  %1024 = vmatprep.subr.mxu0 %v419
  %1025 = vmatpush1.msra.mxu0 %v418
  %1026 = vmatprep.subr.mxu0 %v423
  %1027 = vmatpush1.msra.mxu0 %v422
  %1028 = vmatprep.subr.mxu0 %v427
  %1029 = vmatpush1.msra.mxu0 %v426
  %1030 = vmatprep.subr.mxu0 %v431
  %1031 = vmatpush1.msra.mxu0 %v430
  %1032 = vmatprep.subr.mxu0 %v435
  %1033 = vmatpush1.msra.mxu0 %v434
  %1034 = vmatprep.subr.mxu0 %v439
  %1035 = vmatpush1.msra.mxu0 %v438
  %1036 = vmatprep.subr.mxu0 0.0
  %1037 = vmatpush1.msra.mxu0 0.0
  %1038 = vmatprep.subr.mxu0 0.0
  %1039 = vmatpush1.msra.mxu0 0.0
  %1040 = vmatprep.subr.mxu0 0.0
  %1041 = vmatpush1.msra.mxu0 0.0
  %1042 = vmatprep.subr.mxu0 0.0
  %1043 = vmatpush1.msra.mxu0 0.0
  %1044 = vmatprep.subr.mxu0 0.0
  %1045 = vmatpush1.msra.mxu0 0.0
  %1046 = vmatprep.subr.mxu0 0.0
  %1047 = vmatpush1.msra.mxu0 0.0
  %1048 = vmatprep.subr.mxu0 0.0
  %1049 = vmatpush1.msra.mxu0 0.0
  %1050 = vmatprep.subr.mxu0 0.0
  %1051 = vmatpush1.msra.mxu0 0.0
  %1052 = vmatprep.subr.mxu0 0.0
  %1053 = vmatpush1.msra.mxu0 0.0
  %1054 = vmatprep.subr.mxu0 0.0
  %1055 = vmatpush1.msra.mxu0 0.0
  %1056 = vmatprep.subr.mxu0 0.0
  %1057 = vmatpush1.msra.mxu0 0.0
  %1058 = vmatprep.subr.mxu0 0.0
  %1059 = vmatpush1.msra.mxu0 0.0
  %1060 = vmatprep.subr.mxu0 0.0
  %1061 = vmatpush1.msra.mxu0 0.0
  %1062 = vmatprep.subr.mxu0 0.0
  %1063 = vmatpush1.msra.mxu0 0.0
  %1064 = vmatprep.subr.mxu0 0.0
  %1065 = vmatpush1.msra.mxu0 0.0
  %1066 = vmatprep.subr.mxu0 0.0
  %1067 = vmatpush1.msra.mxu0 0.0
  %1068 = vmatprep.mubr.f32.mxu0 0.0
  %1069 = vmatmul.mubr.f32.gmra.mrb[0].mxu0 %v609
  %v1070 = vpop.f32.mrb[0].mxu0
  %v1071 = vadd.f32 0.0, %v1070
  %v1072 = vpop.f32.mrb[0].mxu0
  %v1073 = vadd.f32 0.0, %v1072
  %1074 = vdwg.mxu0
  %v1075 = vadd.f32 %v929, %v1000
  %v1076 = vadd.f32 %v930, %v1002
  %v1077 = vadd.f32 %v931, %v1071
  %v1078 = vadd.f32 %v932, %v1073
  %v1079 = vxor.u32 %v1075, 2147483648
  %v1080 = vmul.f32 %v1079, 1.442695
  %v1081 = vpow.pop %v1080
  %v1082 = vadd.f32 %v1081, 1.0
  %v1083 = vrcp.pop %v1082
  %v1084 = vmul.f32 1.0, %v1083
  %v1085 = vxor.u32 %v1076, 2147483648
  %v1086 = vmul.f32 %v1085, 1.442695
  %v1087 = vpow.pop %v1086
  %v1088 = vadd.f32 %v1087, 1.0
  %v1089 = vrcp.pop %v1088
  %v1090 = vmul.f32 1.0, %v1089
  %v1091 = vtanh.pop %v1077
  %v1092 = vxor.u32 %v1078, 2147483648
  %v1093 = vmul.f32 %v1092, 1.442695
  %v1094 = vpow.pop %v1093
  %v1095 = vadd.f32 %v1094, 1.0
  %v1096 = vrcp.pop %v1095
  %v1097 = vmul.f32 1.0, %v1096
  %v1098 = vmul.f32 %v1090, %v607
  %v1099 = vmul.f32 %v1084, %v1091
  %v1100 = vadd.f32 %v1098, %v1099
  %v1101 = vtanh.pop %v1100
  %v1102 = vmul.f32 %v1097, %v1101
  %1103 = vmatprep.subr.mxu0 %v611
  %1104 = vmatpush1.msra.mxu0 %v610
  %1105 = vmatprep.subr.mxu0 %v615
  %1106 = vmatpush1.msra.mxu0 %v614
  %1107 = vmatprep.subr.mxu0 %v619
  %1108 = vmatpush1.msra.mxu0 %v618
  %1109 = vmatprep.subr.mxu0 %v623
  %1110 = vmatpush1.msra.mxu0 %v622
  %1111 = vmatprep.subr.mxu0 %v627
  %1112 = vmatpush1.msra.mxu0 %v626
  %1113 = vmatprep.subr.mxu0 %v631
  %1114 = vmatpush1.msra.mxu0 %v630
  %1115 = vmatprep.subr.mxu0 %v635
  %1116 = vmatpush1.msra.mxu0 %v634
  %1117 = vmatprep.subr.mxu0 %v639
  %1118 = vmatpush1.msra.mxu0 %v638
  %1119 = vmatprep.subr.mxu0 %v643
  %1120 = vmatpush1.msra.mxu0 %v642
  %1121 = vmatprep.subr.mxu0 %v647
  %1122 = vmatpush1.msra.mxu0 %v646
  %1123 = vmatprep.subr.mxu0 %v651
  %1124 = vmatpush1.msra.mxu0 %v650
  %1125 = vmatprep.subr.mxu0 %v655
  %1126 = vmatpush1.msra.mxu0 %v654
  %1127 = vmatprep.subr.mxu0 %v659
  %1128 = vmatpush1.msra.mxu0 %v658
  %1129 = vmatprep.subr.mxu0 %v663
  %1130 = vmatpush1.msra.mxu0 %v662
  %1131 = vmatprep.subr.mxu0 %v667
  %1132 = vmatpush1.msra.mxu0 %v666
  %1133 = vmatprep.subr.mxu0 %v671
  %1134 = vmatpush1.msra.mxu0 %v670
  %1135 = vmatprep.subr.mxu0 %v675
  %1136 = vmatpush1.msra.mxu0 %v674
  %1137 = vmatprep.subr.mxu0 %v679
  %1138 = vmatpush1.msra.mxu0 %v678
  %1139 = vmatprep.subr.mxu0 %v683
  %1140 = vmatpush1.msra.mxu0 %v682
  %1141 = vmatprep.subr.mxu0 %v687
  %1142 = vmatpush1.msra.mxu0 %v686
  %1143 = vmatprep.subr.mxu0 %v691
  %1144 = vmatpush1.msra.mxu0 %v690
  %1145 = vmatprep.subr.mxu0 %v695
  %1146 = vmatpush1.msra.mxu0 %v694
  %1147 = vmatprep.subr.mxu0 %v699
  %1148 = vmatpush1.msra.mxu0 %v698
  %1149 = vmatprep.subr.mxu0 %v703
  %1150 = vmatpush1.msra.mxu0 %v702
  %1151 = vmatprep.subr.mxu0 %v707
  %1152 = vmatpush1.msra.mxu0 %v706
  %1153 = vmatprep.subr.mxu0 %v711
  %1154 = vmatpush1.msra.mxu0 %v710
  %1155 = vmatprep.subr.mxu0 %v715
  %1156 = vmatpush1.msra.mxu0 %v714
  %1157 = vmatprep.subr.mxu0 %v719
  %1158 = vmatpush1.msra.mxu0 %v718
  %1159 = vmatprep.subr.mxu0 %v723
  %1160 = vmatpush1.msra.mxu0 %v722
  %1161 = vmatprep.subr.mxu0 %v727
  %1162 = vmatpush1.msra.mxu0 %v726
  %1163 = vmatprep.subr.mxu0 %v731
  %1164 = vmatpush1.msra.mxu0 %v730
  %1165 = vmatprep.subr.mxu0 %v735
  %1166 = vmatpush1.msra.mxu0 %v734
  %1167 = vmatprep.mubr.f32.mxu0 %v925
  %1168 = vmatmul.mubr.f32.gmra.mrb[0].mxu0 %v1102
  %v1169 = vpop.f32.mrb[0].mxu0
  %v1170 = vadd.f32 %v743, %v1169
  %v1171 = vpop.f32.mrb[0].mxu0
  %v1172 = vadd.f32 %v747, %v1171
  %1173 = vdwg.mxu0
  %1174 = vmatprep.subr.mxu0 %v613
  %1175 = vmatpush1.msra.mxu0 %v612
  %1176 = vmatprep.subr.mxu0 %v617
  %1177 = vmatpush1.msra.mxu0 %v616
  %1178 = vmatprep.subr.mxu0 %v621
  %1179 = vmatpush1.msra.mxu0 %v620
  %1180 = vmatprep.subr.mxu0 %v625
  %1181 = vmatpush1.msra.mxu0 %v624
  %1182 = vmatprep.subr.mxu0 %v629
  %1183 = vmatpush1.msra.mxu0 %v628
  %1184 = vmatprep.subr.mxu0 %v633
  %1185 = vmatpush1.msra.mxu0 %v632
  %1186 = vmatprep.subr.mxu0 %v637
  %1187 = vmatpush1.msra.mxu0 %v636
  %1188 = vmatprep.subr.mxu0 %v641
  %1189 = vmatpush1.msra.mxu0 %v640
  %1190 = vmatprep.subr.mxu0 %v645
  %1191 = vmatpush1.msra.mxu0 %v644
  %1192 = vmatprep.subr.mxu0 %v649
  %1193 = vmatpush1.msra.mxu0 %v648
  %1194 = vmatprep.subr.mxu0 %v653
  %1195 = vmatpush1.msra.mxu0 %v652
  %1196 = vmatprep.subr.mxu0 %v657
  %1197 = vmatpush1.msra.mxu0 %v656
  %1198 = vmatprep.subr.mxu0 %v661
  %1199 = vmatpush1.msra.mxu0 %v660
  %1200 = vmatprep.subr.mxu0 %v665
  %1201 = vmatpush1.msra.mxu0 %v664
  %1202 = vmatprep.subr.mxu0 %v669
  %1203 = vmatpush1.msra.mxu0 %v668
  %1204 = vmatprep.subr.mxu0 %v673
  %1205 = vmatpush1.msra.mxu0 %v672
  %1206 = vmatprep.subr.mxu0 %v677
  %1207 = vmatpush1.msra.mxu0 %v676
  %1208 = vmatprep.subr.mxu0 %v681
  %1209 = vmatpush1.msra.mxu0 %v680
  %1210 = vmatprep.subr.mxu0 %v685
  %1211 = vmatpush1.msra.mxu0 %v684
  %1212 = vmatprep.subr.mxu0 %v689
  %1213 = vmatpush1.msra.mxu0 %v688
  %1214 = vmatprep.subr.mxu0 %v693
  %1215 = vmatpush1.msra.mxu0 %v692
  %1216 = vmatprep.subr.mxu0 %v697
  %1217 = vmatpush1.msra.mxu0 %v696
  %1218 = vmatprep.subr.mxu0 %v701
  %1219 = vmatpush1.msra.mxu0 %v700
  %1220 = vmatprep.subr.mxu0 %v705
  %1221 = vmatpush1.msra.mxu0 %v704
  %1222 = vmatprep.subr.mxu0 %v709
  %1223 = vmatpush1.msra.mxu0 %v708
  %1224 = vmatprep.subr.mxu0 %v713
  %1225 = vmatpush1.msra.mxu0 %v712
  %1226 = vmatprep.subr.mxu0 %v717
  %1227 = vmatpush1.msra.mxu0 %v716
  %1228 = vmatprep.subr.mxu0 %v721
  %1229 = vmatpush1.msra.mxu0 %v720
  %1230 = vmatprep.subr.mxu0 %v725
  %1231 = vmatpush1.msra.mxu0 %v724
  %1232 = vmatprep.subr.mxu0 %v729
  %1233 = vmatpush1.msra.mxu0 %v728
  %1234 = vmatprep.subr.mxu0 %v733
  %1235 = vmatpush1.msra.mxu0 %v732
  %1236 = vmatprep.subr.mxu0 %v737
  %1237 = vmatpush1.msra.mxu0 %v736
  %1238 = vmatprep.mubr.f32.mxu0 %v925
  %1239 = vmatmul.mubr.f32.gmra.mrb[0].mxu0 %v1102
  %v1240 = vpop.f32.mrb[0].mxu0
  %v1241 = vadd.f32 %v751, %v1240
  %v1242 = vpop.f32.mrb[0].mxu0
  %v1243 = vadd.f32 %v755, %v1242
  %1244 = vdwg.mxu0
  %v1245 = vxor.u32 %v1170, 2147483648
  %v1246 = vmul.f32 %v1245, 1.442695
  %v1247 = vpow.pop %v1246
  %v1248 = vadd.f32 %v1247, 1.0
  %v1249 = vrcp.pop %v1248
  %v1250 = vmul.f32 1.0, %v1249
  %v1251 = vxor.u32 %v1172, 2147483648
  %v1252 = vmul.f32 %v1251, 1.442695
  %v1253 = vpow.pop %v1252
  %v1254 = vadd.f32 %v1253, 1.0
  %v1255 = vrcp.pop %v1254
  %v1256 = vmul.f32 1.0, %v1255
  %v1257 = vtanh.pop %v1241
  %v1258 = vxor.u32 %v1243, 2147483648
  %v1259 = vmul.f32 %v1258, 1.442695
  %v1260 = vpow.pop %v1259
  %v1261 = vadd.f32 %v1260, 1.0
  %v1262 = vrcp.pop %v1261
  %v1263 = vmul.f32 1.0, %v1262
  %v1264 = vmul.f32 %v1256, %v923
  %v1265 = vmul.f32 %v1250, %v1257
  %v1266 = vadd.f32 %v1264, %v1265
  %v1267 = vtanh.pop %v1266
  %v1268 = vmul.f32 %v1263, %v1267
  %s1269 = smul.u32 2, 4
  %s1270 = smul.addr %s1269, 8
  %s1271 = scalar_lea.vmem [#allocation2], %s1270
  %v1272 = vld [vmem:[%s1271] sm:$0xff]
  %v1273 = vld [vmem:[%s1271 + $0x8] sm:$0xff]
  %v1274 = vld [vmem:[%s1271 + $0x10] sm:$0xff]
  %v1275 = vld [vmem:[%s1271 + $0x18] sm:$0xff]
  %1276 = vmatprep.subr.mxu0 %v377
  %1277 = vmatpush1.msra.mxu0 %v376
  %1278 = vmatprep.subr.mxu0 %v381
  %1279 = vmatpush1.msra.mxu0 %v380
  %1280 = vmatprep.subr.mxu0 %v385
  %1281 = vmatpush1.msra.mxu0 %v384
  %1282 = vmatprep.subr.mxu0 %v389
  %1283 = vmatpush1.msra.mxu0 %v388
  %1284 = vmatprep.subr.mxu0 %v393
  %1285 = vmatpush1.msra.mxu0 %v392
  %1286 = vmatprep.subr.mxu0 %v397
  %1287 = vmatpush1.msra.mxu0 %v396
  %1288 = vmatprep.subr.mxu0 %v401
  %1289 = vmatpush1.msra.mxu0 %v400
  %1290 = vmatprep.subr.mxu0 %v405
  %1291 = vmatpush1.msra.mxu0 %v404
  %1292 = vmatprep.subr.mxu0 %v409
  %1293 = vmatpush1.msra.mxu0 %v408
  %1294 = vmatprep.subr.mxu0 %v413
  %1295 = vmatpush1.msra.mxu0 %v412
  %1296 = vmatprep.subr.mxu0 %v417
  %1297 = vmatpush1.msra.mxu0 %v416
  %1298 = vmatprep.subr.mxu0 %v421
  %1299 = vmatpush1.msra.mxu0 %v420
  %1300 = vmatprep.subr.mxu0 %v425
  %1301 = vmatpush1.msra.mxu0 %v424
  %1302 = vmatprep.subr.mxu0 %v429
  %1303 = vmatpush1.msra.mxu0 %v428
  %1304 = vmatprep.subr.mxu0 %v433
  %1305 = vmatpush1.msra.mxu0 %v432
  %1306 = vmatprep.subr.mxu0 %v437
  %1307 = vmatpush1.msra.mxu0 %v436
  %1308 = vmatprep.subr.mxu0 0.0
  %1309 = vmatpush1.msra.mxu0 0.0
  %1310 = vmatprep.subr.mxu0 0.0
  %1311 = vmatpush1.msra.mxu0 0.0
  %1312 = vmatprep.subr.mxu0 0.0
  %1313 = vmatpush1.msra.mxu0 0.0
  %1314 = vmatprep.subr.mxu0 0.0
  %1315 = vmatpush1.msra.mxu0 0.0
  %1316 = vmatprep.subr.mxu0 0.0
  %1317 = vmatpush1.msra.mxu0 0.0
  %1318 = vmatprep.subr.mxu0 0.0
  %1319 = vmatpush1.msra.mxu0 0.0
  %1320 = vmatprep.subr.mxu0 0.0
  %1321 = vmatpush1.msra.mxu0 0.0
  %1322 = vmatprep.subr.mxu0 0.0
  %1323 = vmatpush1.msra.mxu0 0.0
  %1324 = vmatprep.subr.mxu0 0.0
  %1325 = vmatpush1.msra.mxu0 0.0
  %1326 = vmatprep.subr.mxu0 0.0
  %1327 = vmatpush1.msra.mxu0 0.0
  %1328 = vmatprep.subr.mxu0 0.0
  %1329 = vmatpush1.msra.mxu0 0.0
  %1330 = vmatprep.subr.mxu0 0.0
  %1331 = vmatpush1.msra.mxu0 0.0
  %1332 = vmatprep.subr.mxu0 0.0
  %1333 = vmatpush1.msra.mxu0 0.0
  %1334 = vmatprep.subr.mxu0 0.0
  %1335 = vmatpush1.msra.mxu0 0.0
  %1336 = vmatprep.subr.mxu0 0.0
  %1337 = vmatpush1.msra.mxu0 0.0
  %1338 = vmatprep.subr.mxu0 0.0
  %1339 = vmatpush1.msra.mxu0 0.0
  %1340 = vmatprep.mubr.f32.mxu0 0.0
  %1341 = vmatmul.mubr.f32.gmra.mrb[0].mxu0 %v1102
  %v1342 = vpop.f32.mrb[0].mxu0
  %v1343 = vadd.f32 0.0, %v1342
  %v1344 = vpop.f32.mrb[0].mxu0
  %v1345 = vadd.f32 0.0, %v1344
  %1346 = vdwg.mxu0
  %1347 = vmatprep.subr.mxu0 %v379
  %1348 = vmatpush1.msra.mxu0 %v378
  %1349 = vmatprep.subr.mxu0 %v383
  %1350 = vmatpush1.msra.mxu0 %v382
  %1351 = vmatprep.subr.mxu0 %v387
  %1352 = vmatpush1.msra.mxu0 %v386
  %1353 = vmatprep.subr.mxu0 %v391
  %1354 = vmatpush1.msra.mxu0 %v390
  %1355 = vmatprep.subr.mxu0 %v395
  %1356 = vmatpush1.msra.mxu0 %v394
  %1357 = vmatprep.subr.mxu0 %v399
  %1358 = vmatpush1.msra.mxu0 %v398
  %1359 = vmatprep.subr.mxu0 %v403
  %1360 = vmatpush1.msra.mxu0 %v402
  %1361 = vmatprep.subr.mxu0 %v407
  %1362 = vmatpush1.msra.mxu0 %v406
  %1363 = vmatprep.subr.mxu0 %v411
  %1364 = vmatpush1.msra.mxu0 %v410
  %1365 = vmatprep.subr.mxu0 %v415
  %1366 = vmatpush1.msra.mxu0 %v414
  %1367 = vmatprep.subr.mxu0 %v419
  %1368 = vmatpush1.msra.mxu0 %v418
  %1369 = vmatprep.subr.mxu0 %v423
  %1370 = vmatpush1.msra.mxu0 %v422
  %1371 = vmatprep.subr.mxu0 %v427
  %1372 = vmatpush1.msra.mxu0 %v426
  %1373 = vmatprep.subr.mxu0 %v431
  %1374 = vmatpush1.msra.mxu0 %v430
  %1375 = vmatprep.subr.mxu0 %v435
  %1376 = vmatpush1.msra.mxu0 %v434
  %1377 = vmatprep.subr.mxu0 %v439
  %1378 = vmatpush1.msra.mxu0 %v438
  %1379 = vmatprep.subr.mxu0 0.0
  %1380 = vmatpush1.msra.mxu0 0.0
  %1381 = vmatprep.subr.mxu0 0.0
  %1382 = vmatpush1.msra.mxu0 0.0
  %1383 = vmatprep.subr.mxu0 0.0
  %1384 = vmatpush1.msra.mxu0 0.0
  %1385 = vmatprep.subr.mxu0 0.0
  %1386 = vmatpush1.msra.mxu0 0.0
  %1387 = vmatprep.subr.mxu0 0.0
  %1388 = vmatpush1.msra.mxu0 0.0
  %1389 = vmatprep.subr.mxu0 0.0
  %1390 = vmatpush1.msra.mxu0 0.0
  %1391 = vmatprep.subr.mxu0 0.0
  %1392 = vmatpush1.msra.mxu0 0.0
  %1393 = vmatprep.subr.mxu0 0.0
  %1394 = vmatpush1.msra.mxu0 0.0
  %1395 = vmatprep.subr.mxu0 0.0
  %1396 = vmatpush1.msra.mxu0 0.0
  %1397 = vmatprep.subr.mxu0 0.0
  %1398 = vmatpush1.msra.mxu0 0.0
  %1399 = vmatprep.subr.mxu0 0.0
  %1400 = vmatpush1.msra.mxu0 0.0
  %1401 = vmatprep.subr.mxu0 0.0
  %1402 = vmatpush1.msra.mxu0 0.0
  %1403 = vmatprep.subr.mxu0 0.0
  %1404 = vmatpush1.msra.mxu0 0.0
  %1405 = vmatprep.subr.mxu0 0.0
  %1406 = vmatpush1.msra.mxu0 0.0
  %1407 = vmatprep.subr.mxu0 0.0
  %1408 = vmatpush1.msra.mxu0 0.0
  %1409 = vmatprep.subr.mxu0 0.0
  %1410 = vmatpush1.msra.mxu0 0.0
  %1411 = vmatprep.mubr.f32.mxu0 0.0
  %1412 = vmatmul.mubr.f32.gmra.mrb[0].mxu0 %v1102
  %v1413 = vpop.f32.mrb[0].mxu0
  %v1414 = vadd.f32 0.0, %v1413
  %v1415 = vpop.f32.mrb[0].mxu0
  %v1416 = vadd.f32 0.0, %v1415
  %1417 = vdwg.mxu0
  %v1418 = vadd.f32 %v1272, %v1343
  %v1419 = vadd.f32 %v1273, %v1345
  %v1420 = vadd.f32 %v1274, %v1414
  %v1421 = vadd.f32 %v1275, %v1416
  %v1422 = vxor.u32 %v1418, 2147483648
  %v1423 = vmul.f32 %v1422, 1.442695
  %v1424 = vpow.pop %v1423
  %v1425 = vadd.f32 %v1424, 1.0
  %v1426 = vrcp.pop %v1425
  %v1427 = vmul.f32 1.0, %v1426
  %v1428 = vxor.u32 %v1419, 2147483648
  %v1429 = vmul.f32 %v1428, 1.442695
  %v1430 = vpow.pop %v1429
  %v1431 = vadd.f32 %v1430, 1.0
  %v1432 = vrcp.pop %v1431
  %v1433 = vmul.f32 1.0, %v1432
  %v1434 = vtanh.pop %v1420
  %v1435 = vxor.u32 %v1421, 2147483648
  %v1436 = vmul.f32 %v1435, 1.442695
  %v1437 = vpow.pop %v1436
  %v1438 = vadd.f32 %v1437, 1.0
  %v1439 = vrcp.pop %v1438
  %v1440 = vmul.f32 1.0, %v1439
  %v1441 = vmul.f32 %v1433, %v1100
  %v1442 = vmul.f32 %v1427, %v1434
  %v1443 = vadd.f32 %v1441, %v1442
  %v1444 = vtanh.pop %v1443
  %v1445 = vmul.f32 %v1440, %v1444
  %1446 = vmatprep.subr.mxu0 %v611
  %1447 = vmatpush1.msra.mxu0 %v610
  %1448 = vmatprep.subr.mxu0 %v615
  %1449 = vmatpush1.msra.mxu0 %v614
  %1450 = vmatprep.subr.mxu0 %v619
  %1451 = vmatpush1.msra.mxu0 %v618
  %1452 = vmatprep.subr.mxu0 %v623
  %1453 = vmatpush1.msra.mxu0 %v622
  %1454 = vmatprep.subr.mxu0 %v627
  %1455 = vmatpush1.msra.mxu0 %v626
  %1456 = vmatprep.subr.mxu0 %v631
  %1457 = vmatpush1.msra.mxu0 %v630
  %1458 = vmatprep.subr.mxu0 %v635
  %1459 = vmatpush1.msra.mxu0 %v634
  %1460 = vmatprep.subr.mxu0 %v639
  %1461 = vmatpush1.msra.mxu0 %v638
  %1462 = vmatprep.subr.mxu0 %v643
  %1463 = vmatpush1.msra.mxu0 %v642
  %1464 = vmatprep.subr.mxu0 %v647
  %1465 = vmatpush1.msra.mxu0 %v646
  %1466 = vmatprep.subr.mxu0 %v651
  %1467 = vmatpush1.msra.mxu0 %v650
  %1468 = vmatprep.subr.mxu0 %v655
  %1469 = vmatpush1.msra.mxu0 %v654
  %1470 = vmatprep.subr.mxu0 %v659
  %1471 = vmatpush1.msra.mxu0 %v658
  %1472 = vmatprep.subr.mxu0 %v663
  %1473 = vmatpush1.msra.mxu0 %v662
  %1474 = vmatprep.subr.mxu0 %v667
  %1475 = vmatpush1.msra.mxu0 %v666
  %1476 = vmatprep.subr.mxu0 %v671
  %1477 = vmatpush1.msra.mxu0 %v670
  %1478 = vmatprep.subr.mxu0 %v675
  %1479 = vmatpush1.msra.mxu0 %v674
  %1480 = vmatprep.subr.mxu0 %v679
  %1481 = vmatpush1.msra.mxu0 %v678
  %1482 = vmatprep.subr.mxu0 %v683
  %1483 = vmatpush1.msra.mxu0 %v682
  %1484 = vmatprep.subr.mxu0 %v687
  %1485 = vmatpush1.msra.mxu0 %v686
  %1486 = vmatprep.subr.mxu0 %v691
  %1487 = vmatpush1.msra.mxu0 %v690
  %1488 = vmatprep.subr.mxu0 %v695
  %1489 = vmatpush1.msra.mxu0 %v694
  %1490 = vmatprep.subr.mxu0 %v699
  %1491 = vmatpush1.msra.mxu0 %v698
  %1492 = vmatprep.subr.mxu0 %v703
  %1493 = vmatpush1.msra.mxu0 %v702
  %1494 = vmatprep.subr.mxu0 %v707
  %1495 = vmatpush1.msra.mxu0 %v706
  %1496 = vmatprep.subr.mxu0 %v711
  %1497 = vmatpush1.msra.mxu0 %v710
  %1498 = vmatprep.subr.mxu0 %v715
  %1499 = vmatpush1.msra.mxu0 %v714
  %1500 = vmatprep.subr.mxu0 %v719
  %1501 = vmatpush1.msra.mxu0 %v718
  %1502 = vmatprep.subr.mxu0 %v723
  %1503 = vmatpush1.msra.mxu0 %v722
  %1504 = vmatprep.subr.mxu0 %v727
  %1505 = vmatpush1.msra.mxu0 %v726
  %1506 = vmatprep.subr.mxu0 %v731
  %1507 = vmatpush1.msra.mxu0 %v730
  %1508 = vmatprep.subr.mxu0 %v735
  %1509 = vmatpush1.msra.mxu0 %v734
  %1510 = vmatprep.mubr.f32.mxu0 %v1268
  %1511 = vmatmul.mubr.f32.gmra.mrb[0].mxu0 %v1445
  %v1512 = vpop.f32.mrb[0].mxu0
  %v1513 = vadd.f32 %v743, %v1512
  %v1514 = vpop.f32.mrb[0].mxu0
  %v1515 = vadd.f32 %v747, %v1514
  %1516 = vdwg.mxu0
  %1517 = vmatprep.subr.mxu0 %v613
  %1518 = vmatpush1.msra.mxu0 %v612
  %1519 = vmatprep.subr.mxu0 %v617
  %1520 = vmatpush1.msra.mxu0 %v616
  %1521 = vmatprep.subr.mxu0 %v621
  %1522 = vmatpush1.msra.mxu0 %v620
  %1523 = vmatprep.subr.mxu0 %v625
  %1524 = vmatpush1.msra.mxu0 %v624
  %1525 = vmatprep.subr.mxu0 %v629
  %1526 = vmatpush1.msra.mxu0 %v628
  %1527 = vmatprep.subr.mxu0 %v633
  %1528 = vmatpush1.msra.mxu0 %v632
  %1529 = vmatprep.subr.mxu0 %v637
  %1530 = vmatpush1.msra.mxu0 %v636
  %1531 = vmatprep.subr.mxu0 %v641
  %1532 = vmatpush1.msra.mxu0 %v640
  %1533 = vmatprep.subr.mxu0 %v645
  %1534 = vmatpush1.msra.mxu0 %v644
  %1535 = vmatprep.subr.mxu0 %v649
  %1536 = vmatpush1.msra.mxu0 %v648
  %1537 = vmatprep.subr.mxu0 %v653
  %1538 = vmatpush1.msra.mxu0 %v652
  %1539 = vmatprep.subr.mxu0 %v657
  %1540 = vmatpush1.msra.mxu0 %v656
  %1541 = vmatprep.subr.mxu0 %v661
  %1542 = vmatpush1.msra.mxu0 %v660
  %1543 = vmatprep.subr.mxu0 %v665
  %1544 = vmatpush1.msra.mxu0 %v664
  %1545 = vmatprep.subr.mxu0 %v669
  %1546 = vmatpush1.msra.mxu0 %v668
  %1547 = vmatprep.subr.mxu0 %v673
  %1548 = vmatpush1.msra.mxu0 %v672
  %1549 = vmatprep.subr.mxu0 %v677
  %1550 = vmatpush1.msra.mxu0 %v676
  %1551 = vmatprep.subr.mxu0 %v681
  %1552 = vmatpush1.msra.mxu0 %v680
  %1553 = vmatprep.subr.mxu0 %v685
  %1554 = vmatpush1.msra.mxu0 %v684
  %1555 = vmatprep.subr.mxu0 %v689
  %1556 = vmatpush1.msra.mxu0 %v688
  %1557 = vmatprep.subr.mxu0 %v693
  %1558 = vmatpush1.msra.mxu0 %v692
  %1559 = vmatprep.subr.mxu0 %v697
  %1560 = vmatpush1.msra.mxu0 %v696
  %1561 = vmatprep.subr.mxu0 %v701
  %1562 = vmatpush1.msra.mxu0 %v700
  %1563 = vmatprep.subr.mxu0 %v705
  %1564 = vmatpush1.msra.mxu0 %v704
  %1565 = vmatprep.subr.mxu0 %v709
  %1566 = vmatpush1.msra.mxu0 %v708
  %1567 = vmatprep.subr.mxu0 %v713
  %1568 = vmatpush1.msra.mxu0 %v712
  %1569 = vmatprep.subr.mxu0 %v717
  %1570 = vmatpush1.msra.mxu0 %v716
  %1571 = vmatprep.subr.mxu0 %v721
  %1572 = vmatpush1.msra.mxu0 %v720
  %1573 = vmatprep.subr.mxu0 %v725
  %1574 = vmatpush1.msra.mxu0 %v724
  %1575 = vmatprep.subr.mxu0 %v729
  %1576 = vmatpush1.msra.mxu0 %v728
  %1577 = vmatprep.subr.mxu0 %v733
  %1578 = vmatpush1.msra.mxu0 %v732
  %1579 = vmatprep.subr.mxu0 %v737
  %1580 = vmatpush1.msra.mxu0 %v736
  %1581 = vmatprep.mubr.f32.mxu0 %v1268
  %1582 = vmatmul.mubr.f32.gmra.mrb[0].mxu0 %v1445
  %v1583 = vpop.f32.mrb[0].mxu0
  %v1584 = vadd.f32 %v751, %v1583
  %v1585 = vpop.f32.mrb[0].mxu0
  %v1586 = vadd.f32 %v755, %v1585
  %1587 = vdwg.mxu0
  %v1588 = vxor.u32 %v1513, 2147483648
  %v1589 = vmul.f32 %v1588, 1.442695
  %v1590 = vpow.pop %v1589
  %v1591 = vadd.f32 %v1590, 1.0
  %v1592 = vrcp.pop %v1591
  %v1593 = vmul.f32 1.0, %v1592
  %v1594 = vxor.u32 %v1515, 2147483648
  %v1595 = vmul.f32 %v1594, 1.442695
  %v1596 = vpow.pop %v1595
  %v1597 = vadd.f32 %v1596, 1.0
  %v1598 = vrcp.pop %v1597
  %v1599 = vmul.f32 1.0, %v1598
  %v1600 = vtanh.pop %v1584
  %v1601 = vxor.u32 %v1586, 2147483648
  %v1602 = vmul.f32 %v1601, 1.442695
  %v1603 = vpow.pop %v1602
  %v1604 = vadd.f32 %v1603, 1.0
  %v1605 = vrcp.pop %v1604
  %v1606 = vmul.f32 1.0, %v1605
  %v1607 = vmul.f32 %v1599, %v1266
  %v1608 = vmul.f32 %v1593, %v1600
  %v1609 = vadd.f32 %v1607, %v1608
  %v1610 = vtanh.pop %v1609
  %v1611 = vmul.f32 %v1606, %v1610
  %s1612 = smul.u32 3, 4
  %s1613 = smul.addr %s1612, 8
  %s1614 = scalar_lea.vmem [#allocation2], %s1613
  %v1615 = vld [vmem:[%s1614] sm:$0xff]
  %v1616 = vld [vmem:[%s1614 + $0x8] sm:$0xff]
  %v1617 = vld [vmem:[%s1614 + $0x10] sm:$0xff]
  %v1618 = vld [vmem:[%s1614 + $0x18] sm:$0xff]
  %1619 = vmatprep.subr.mxu0 %v377
  %1620 = vmatpush1.msra.mxu0 %v376
  %1621 = vmatprep.subr.mxu0 %v381
  %1622 = vmatpush1.msra.mxu0 %v380
  %1623 = vmatprep.subr.mxu0 %v385
  %1624 = vmatpush1.msra.mxu0 %v384
  %1625 = vmatprep.subr.mxu0 %v389
  %1626 = vmatpush1.msra.mxu0 %v388
  %1627 = vmatprep.subr.mxu0 %v393
  %1628 = vmatpush1.msra.mxu0 %v392
  %1629 = vmatprep.subr.mxu0 %v397
  %1630 = vmatpush1.msra.mxu0 %v396
  %1631 = vmatprep.subr.mxu0 %v401
  %1632 = vmatpush1.msra.mxu0 %v400
  %1633 = vmatprep.subr.mxu0 %v405
  %1634 = vmatpush1.msra.mxu0 %v404
  %1635 = vmatprep.subr.mxu0 %v409
  %1636 = vmatpush1.msra.mxu0 %v408
  %1637 = vmatprep.subr.mxu0 %v413
  %1638 = vmatpush1.msra.mxu0 %v412
  %1639 = vmatprep.subr.mxu0 %v417
  %1640 = vmatpush1.msra.mxu0 %v416
  %1641 = vmatprep.subr.mxu0 %v421
  %1642 = vmatpush1.msra.mxu0 %v420
  %1643 = vmatprep.subr.mxu0 %v425
  %1644 = vmatpush1.msra.mxu0 %v424
  %1645 = vmatprep.subr.mxu0 %v429
  %1646 = vmatpush1.msra.mxu0 %v428
  %1647 = vmatprep.subr.mxu0 %v433
  %1648 = vmatpush1.msra.mxu0 %v432
  %1649 = vmatprep.subr.mxu0 %v437
  %1650 = vmatpush1.msra.mxu0 %v436
  %1651 = vmatprep.subr.mxu0 0.0
  %1652 = vmatpush1.msra.mxu0 0.0
  %1653 = vmatprep.subr.mxu0 0.0
  %1654 = vmatpush1.msra.mxu0 0.0
  %1655 = vmatprep.subr.mxu0 0.0
  %1656 = vmatpush1.msra.mxu0 0.0
  %1657 = vmatprep.subr.mxu0 0.0
  %1658 = vmatpush1.msra.mxu0 0.0
  %1659 = vmatprep.subr.mxu0 0.0
  %1660 = vmatpush1.msra.mxu0 0.0
  %1661 = vmatprep.subr.mxu0 0.0
  %1662 = vmatpush1.msra.mxu0 0.0
  %1663 = vmatprep.subr.mxu0 0.0
  %1664 = vmatpush1.msra.mxu0 0.0
  %1665 = vmatprep.subr.mxu0 0.0
  %1666 = vmatpush1.msra.mxu0 0.0
  %1667 = vmatprep.subr.mxu0 0.0
  %1668 = vmatpush1.msra.mxu0 0.0
  %1669 = vmatprep.subr.mxu0 0.0
  %1670 = vmatpush1.msra.mxu0 0.0
  %1671 = vmatprep.subr.mxu0 0.0
  %1672 = vmatpush1.msra.mxu0 0.0
  %1673 = vmatprep.subr.mxu0 0.0
  %1674 = vmatpush1.msra.mxu0 0.0
  %1675 = vmatprep.subr.mxu0 0.0
  %1676 = vmatpush1.msra.mxu0 0.0
  %1677 = vmatprep.subr.mxu0 0.0
  %1678 = vmatpush1.msra.mxu0 0.0
  %1679 = vmatprep.subr.mxu0 0.0
  %1680 = vmatpush1.msra.mxu0 0.0
  %1681 = vmatprep.subr.mxu0 0.0
  %1682 = vmatpush1.msra.mxu0 0.0
  %1683 = vmatprep.mubr.f32.mxu0 0.0
  %1684 = vmatmul.mubr.f32.gmra.mrb[0].mxu0 %v1445
  %v1685 = vpop.f32.mrb[0].mxu0
  %v1686 = vadd.f32 0.0, %v1685
  %v1687 = vpop.f32.mrb[0].mxu0
  %v1688 = vadd.f32 0.0, %v1687
  %1689 = vdwg.mxu0
  %1690 = vmatprep.subr.mxu0 %v379
  %1691 = vmatpush1.msra.mxu0 %v378
  %1692 = vmatprep.subr.mxu0 %v383
  %1693 = vmatpush1.msra.mxu0 %v382
  %1694 = vmatprep.subr.mxu0 %v387
  %1695 = vmatpush1.msra.mxu0 %v386
  %1696 = vmatprep.subr.mxu0 %v391
  %1697 = vmatpush1.msra.mxu0 %v390
  %1698 = vmatprep.subr.mxu0 %v395
  %1699 = vmatpush1.msra.mxu0 %v394
  %1700 = vmatprep.subr.mxu0 %v399
  %1701 = vmatpush1.msra.mxu0 %v398
  %1702 = vmatprep.subr.mxu0 %v403
  %1703 = vmatpush1.msra.mxu0 %v402
  %1704 = vmatprep.subr.mxu0 %v407
  %1705 = vmatpush1.msra.mxu0 %v406
  %1706 = vmatprep.subr.mxu0 %v411
  %1707 = vmatpush1.msra.mxu0 %v410
  %1708 = vmatprep.subr.mxu0 %v415
  %1709 = vmatpush1.msra.mxu0 %v414
  %1710 = vmatprep.subr.mxu0 %v419
  %1711 = vmatpush1.msra.mxu0 %v418
  %1712 = vmatprep.subr.mxu0 %v423
  %1713 = vmatpush1.msra.mxu0 %v422
  %1714 = vmatprep.subr.mxu0 %v427
  %1715 = vmatpush1.msra.mxu0 %v426
  %1716 = vmatprep.subr.mxu0 %v431
  %1717 = vmatpush1.msra.mxu0 %v430
  %1718 = vmatprep.subr.mxu0 %v435
  %1719 = vmatpush1.msra.mxu0 %v434
  %1720 = vmatprep.subr.mxu0 %v439
  %1721 = vmatpush1.msra.mxu0 %v438
  %1722 = vmatprep.subr.mxu0 0.0
  %1723 = vmatpush1.msra.mxu0 0.0
  %1724 = vmatprep.subr.mxu0 0.0
  %1725 = vmatpush1.msra.mxu0 0.0
  %1726 = vmatprep.subr.mxu0 0.0
  %1727 = vmatpush1.msra.mxu0 0.0
  %1728 = vmatprep.subr.mxu0 0.0
  %1729 = vmatpush1.msra.mxu0 0.0
  %1730 = vmatprep.subr.mxu0 0.0
  %1731 = vmatpush1.msra.mxu0 0.0
  %1732 = vmatprep.subr.mxu0 0.0
  %1733 = vmatpush1.msra.mxu0 0.0
  %1734 = vmatprep.subr.mxu0 0.0
  %1735 = vmatpush1.msra.mxu0 0.0
  %1736 = vmatprep.subr.mxu0 0.0
  %1737 = vmatpush1.msra.mxu0 0.0
  %1738 = vmatprep.subr.mxu0 0.0
  %1739 = vmatpush1.msra.mxu0 0.0
  %1740 = vmatprep.subr.mxu0 0.0
  %1741 = vmatpush1.msra.mxu0 0.0
  %1742 = vmatprep.subr.mxu0 0.0
  %1743 = vmatpush1.msra.mxu0 0.0
  %1744 = vmatprep.subr.mxu0 0.0
  %1745 = vmatpush1.msra.mxu0 0.0
  %1746 = vmatprep.subr.mxu0 0.0
  %1747 = vmatpush1.msra.mxu0 0.0
  %1748 = vmatprep.subr.mxu0 0.0
  %1749 = vmatpush1.msra.mxu0 0.0
  %1750 = vmatprep.subr.mxu0 0.0
  %1751 = vmatpush1.msra.mxu0 0.0
  %1752 = vmatprep.subr.mxu0 0.0
  %1753 = vmatpush1.msra.mxu0 0.0
  %1754 = vmatprep.mubr.f32.mxu0 0.0
  %1755 = vmatmul.mubr.f32.gmra.mrb[0].mxu0 %v1445
  %v1756 = vpop.f32.mrb[0].mxu0
  %v1757 = vadd.f32 0.0, %v1756
  %v1758 = vpop.f32.mrb[0].mxu0
  %v1759 = vadd.f32 0.0, %v1758
  %1760 = vdwg.mxu0
  %v1761 = vadd.f32 %v1615, %v1686
  %v1762 = vadd.f32 %v1616, %v1688
  %v1763 = vadd.f32 %v1617, %v1757
  %v1764 = vadd.f32 %v1618, %v1759
  %v1765 = vxor.u32 %v1761, 2147483648
  %v1766 = vmul.f32 %v1765, 1.442695
  %v1767 = vpow.pop %v1766
  %v1768 = vadd.f32 %v1767, 1.0
  %v1769 = vrcp.pop %v1768
  %v1770 = vmul.f32 1.0, %v1769
  %v1771 = vxor.u32 %v1762, 2147483648
  %v1772 = vmul.f32 %v1771, 1.442695
  %v1773 = vpow.pop %v1772
  %v1774 = vadd.f32 %v1773, 1.0
  %v1775 = vrcp.pop %v1774
  %v1776 = vmul.f32 1.0, %v1775
  %v1777 = vtanh.pop %v1763
  %v1778 = vxor.u32 %v1764, 2147483648
  %v1779 = vmul.f32 %v1778, 1.442695
  %v1780 = vpow.pop %v1779
  %v1781 = vadd.f32 %v1780, 1.0
  %v1782 = vrcp.pop %v1781
  %v1783 = vmul.f32 1.0, %v1782
  %v1784 = vmul.f32 %v1776, %v1443
  %v1785 = vmul.f32 %v1770, %v1777
  %v1786 = vadd.f32 %v1784, %v1785
  %v1787 = vtanh.pop %v1786
  %v1788 = vmul.f32 %v1783, %v1787
  %1789 = vmatprep.subr.mxu0 %v611
  %1790 = vmatpush1.msra.mxu0 %v610
  %1791 = vmatprep.subr.mxu0 %v615
  %1792 = vmatpush1.msra.mxu0 %v614
  %1793 = vmatprep.subr.mxu0 %v619
  %1794 = vmatpush1.msra.mxu0 %v618
  %1795 = vmatprep.subr.mxu0 %v623
  %1796 = vmatpush1.msra.mxu0 %v622
  %1797 = vmatprep.subr.mxu0 %v627
  %1798 = vmatpush1.msra.mxu0 %v626
  %1799 = vmatprep.subr.mxu0 %v631
  %1800 = vmatpush1.msra.mxu0 %v630
  %1801 = vmatprep.subr.mxu0 %v635
  %1802 = vmatpush1.msra.mxu0 %v634
  %1803 = vmatprep.subr.mxu0 %v639
  %1804 = vmatpush1.msra.mxu0 %v638
  %1805 = vmatprep.subr.mxu0 %v643
  %1806 = vmatpush1.msra.mxu0 %v642
  %1807 = vmatprep.subr.mxu0 %v647
  %1808 = vmatpush1.msra.mxu0 %v646
  %1809 = vmatprep.subr.mxu0 %v651
  %1810 = vmatpush1.msra.mxu0 %v650
  %1811 = vmatprep.subr.mxu0 %v655
  %1812 = vmatpush1.msra.mxu0 %v654
  %1813 = vmatprep.subr.mxu0 %v659
  %1814 = vmatpush1.msra.mxu0 %v658
  %1815 = vmatprep.subr.mxu0 %v663
  %1816 = vmatpush1.msra.mxu0 %v662
  %1817 = vmatprep.subr.mxu0 %v667
  %1818 = vmatpush1.msra.mxu0 %v666
  %1819 = vmatprep.subr.mxu0 %v671
  %1820 = vmatpush1.msra.mxu0 %v670
  %1821 = vmatprep.subr.mxu0 %v675
  %1822 = vmatpush1.msra.mxu0 %v674
  %1823 = vmatprep.subr.mxu0 %v679
  %1824 = vmatpush1.msra.mxu0 %v678
  %1825 = vmatprep.subr.mxu0 %v683
  %1826 = vmatpush1.msra.mxu0 %v682
  %1827 = vmatprep.subr.mxu0 %v687
  %1828 = vmatpush1.msra.mxu0 %v686
  %1829 = vmatprep.subr.mxu0 %v691
  %1830 = vmatpush1.msra.mxu0 %v690
  %1831 = vmatprep.subr.mxu0 %v695
  %1832 = vmatpush1.msra.mxu0 %v694
  %1833 = vmatprep.subr.mxu0 %v699
  %1834 = vmatpush1.msra.mxu0 %v698
  %1835 = vmatprep.subr.mxu0 %v703
  %1836 = vmatpush1.msra.mxu0 %v702
  %1837 = vmatprep.subr.mxu0 %v707
  %1838 = vmatpush1.msra.mxu0 %v706
  %1839 = vmatprep.subr.mxu0 %v711
  %1840 = vmatpush1.msra.mxu0 %v710
  %1841 = vmatprep.subr.mxu0 %v715
  %1842 = vmatpush1.msra.mxu0 %v714
  %1843 = vmatprep.subr.mxu0 %v719
  %1844 = vmatpush1.msra.mxu0 %v718
  %1845 = vmatprep.subr.mxu0 %v723
  %1846 = vmatpush1.msra.mxu0 %v722
  %1847 = vmatprep.subr.mxu0 %v727
  %1848 = vmatpush1.msra.mxu0 %v726
  %1849 = vmatprep.subr.mxu0 %v731
  %1850 = vmatpush1.msra.mxu0 %v730
  %1851 = vmatprep.subr.mxu0 %v735
  %1852 = vmatpush1.msra.mxu0 %v734
  %1853 = vmatprep.mubr.f32.mxu0 %v1611
  %1854 = vmatmul.mubr.f32.gmra.mrb[0].mxu0 %v1788
  %v1855 = vpop.f32.mrb[0].mxu0
  %v1856 = vadd.f32 %v743, %v1855
  %v1857 = vpop.f32.mrb[0].mxu0
  %v1858 = vadd.f32 %v747, %v1857
  %1859 = vdwg.mxu0
  %1860 = vmatprep.subr.mxu0 %v613
  %1861 = vmatpush1.msra.mxu0 %v612
  %1862 = vmatprep.subr.mxu0 %v617
  %1863 = vmatpush1.msra.mxu0 %v616
  %1864 = vmatprep.subr.mxu0 %v621
  %1865 = vmatpush1.msra.mxu0 %v620
  %1866 = vmatprep.subr.mxu0 %v625
  %1867 = vmatpush1.msra.mxu0 %v624
  %1868 = vmatprep.subr.mxu0 %v629
  %1869 = vmatpush1.msra.mxu0 %v628
  %1870 = vmatprep.subr.mxu0 %v633
  %1871 = vmatpush1.msra.mxu0 %v632
  %1872 = vmatprep.subr.mxu0 %v637
  %1873 = vmatpush1.msra.mxu0 %v636
  %1874 = vmatprep.subr.mxu0 %v641
  %1875 = vmatpush1.msra.mxu0 %v640
  %1876 = vmatprep.subr.mxu0 %v645
  %1877 = vmatpush1.msra.mxu0 %v644
  %1878 = vmatprep.subr.mxu0 %v649
  %1879 = vmatpush1.msra.mxu0 %v648
  %1880 = vmatprep.subr.mxu0 %v653
  %1881 = vmatpush1.msra.mxu0 %v652
  %1882 = vmatprep.subr.mxu0 %v657
  %1883 = vmatpush1.msra.mxu0 %v656
  %1884 = vmatprep.subr.mxu0 %v661
  %1885 = vmatpush1.msra.mxu0 %v660
  %1886 = vmatprep.subr.mxu0 %v665
  %1887 = vmatpush1.msra.mxu0 %v664
  %1888 = vmatprep.subr.mxu0 %v669
  %1889 = vmatpush1.msra.mxu0 %v668
  %1890 = vmatprep.subr.mxu0 %v673
  %1891 = vmatpush1.msra.mxu0 %v672
  %1892 = vmatprep.subr.mxu0 %v677
  %1893 = vmatpush1.msra.mxu0 %v676
  %1894 = vmatprep.subr.mxu0 %v681
  %1895 = vmatpush1.msra.mxu0 %v680
  %1896 = vmatprep.subr.mxu0 %v685
  %1897 = vmatpush1.msra.mxu0 %v684
  %1898 = vmatprep.subr.mxu0 %v689
  %1899 = vmatpush1.msra.mxu0 %v688
  %1900 = vmatprep.subr.mxu0 %v693
  %1901 = vmatpush1.msra.mxu0 %v692
  %1902 = vmatprep.subr.mxu0 %v697
  %1903 = vmatpush1.msra.mxu0 %v696
  %1904 = vmatprep.subr.mxu0 %v701
  %1905 = vmatpush1.msra.mxu0 %v700
  %1906 = vmatprep.subr.mxu0 %v705
  %1907 = vmatpush1.msra.mxu0 %v704
  %1908 = vmatprep.subr.mxu0 %v709
  %1909 = vmatpush1.msra.mxu0 %v708
  %1910 = vmatprep.subr.mxu0 %v713
  %1911 = vmatpush1.msra.mxu0 %v712
  %1912 = vmatprep.subr.mxu0 %v717
  %1913 = vmatpush1.msra.mxu0 %v716
  %1914 = vmatprep.subr.mxu0 %v721
  %1915 = vmatpush1.msra.mxu0 %v720
  %1916 = vmatprep.subr.mxu0 %v725
  %1917 = vmatpush1.msra.mxu0 %v724
  %1918 = vmatprep.subr.mxu0 %v729
  %1919 = vmatpush1.msra.mxu0 %v728
  %1920 = vmatprep.subr.mxu0 %v733
  %1921 = vmatpush1.msra.mxu0 %v732
  %1922 = vmatprep.subr.mxu0 %v737
  %1923 = vmatpush1.msra.mxu0 %v736
  %1924 = vmatprep.mubr.f32.mxu0 %v1611
  %1925 = vmatmul.mubr.f32.gmra.mrb[0].mxu0 %v1788
  %v1926 = vpop.f32.mrb[0].mxu0
  %v1927 = vadd.f32 %v751, %v1926
  %v1928 = vpop.f32.mrb[0].mxu0
  %v1929 = vadd.f32 %v755, %v1928
  %1930 = vdwg.mxu0
  %v1931 = vxor.u32 %v1856, 2147483648
  %v1932 = vmul.f32 %v1931, 1.442695
  %v1933 = vpow.pop %v1932
  %v1934 = vadd.f32 %v1933, 1.0
  %v1935 = vrcp.pop %v1934
  %v1936 = vmul.f32 1.0, %v1935
  %v1937 = vxor.u32 %v1858, 2147483648
  %v1938 = vmul.f32 %v1937, 1.442695
  %v1939 = vpow.pop %v1938
  %v1940 = vadd.f32 %v1939, 1.0
  %v1941 = vrcp.pop %v1940
  %v1942 = vmul.f32 1.0, %v1941
  %v1943 = vtanh.pop %v1927
  %v1944 = vxor.u32 %v1929, 2147483648
  %v1945 = vmul.f32 %v1944, 1.442695
  %v1946 = vpow.pop %v1945
  %v1947 = vadd.f32 %v1946, 1.0
  %v1948 = vrcp.pop %v1947
  %v1949 = vmul.f32 1.0, %v1948
  %v1950 = vmul.f32 %v1942, %v1609
  %v1951 = vmul.f32 %v1936, %v1943
  %v1952 = vadd.f32 %v1950, %v1951
  %v1953 = vtanh.pop %v1952
  %v1954 = vmul.f32 %v1949, %v1953
  %s1955 = smul.u32 4, 4
  %s1956 = smul.addr %s1955, 8
  %s1957 = scalar_lea.vmem [#allocation2], %s1956
  %v1958 = vld [vmem:[%s1957] sm:$0xff]
  %v1959 = vld [vmem:[%s1957 + $0x8] sm:$0xff]
  %v1960 = vld [vmem:[%s1957 + $0x10] sm:$0xff]
  %v1961 = vld [vmem:[%s1957 + $0x18] sm:$0xff]
  %1962 = vmatprep.subr.mxu0 %v377
  %1963 = vmatpush1.msra.mxu0 %v376
  %1964 = vmatprep.subr.mxu0 %v381
  %1965 = vmatpush1.msra.mxu0 %v380
  %1966 = vmatprep.subr.mxu0 %v385
  %1967 = vmatpush1.msra.mxu0 %v384
  %1968 = vmatprep.subr.mxu0 %v389
  %1969 = vmatpush1.msra.mxu0 %v388
  %1970 = vmatprep.subr.mxu0 %v393
  %1971 = vmatpush1.msra.mxu0 %v392
  %1972 = vmatprep.subr.mxu0 %v397
  %1973 = vmatpush1.msra.mxu0 %v396
  %1974 = vmatprep.subr.mxu0 %v401
  %1975 = vmatpush1.msra.mxu0 %v400
  %1976 = vmatprep.subr.mxu0 %v405
  %1977 = vmatpush1.msra.mxu0 %v404
  %1978 = vmatprep.subr.mxu0 %v409
  %1979 = vmatpush1.msra.mxu0 %v408
  %1980 = vmatprep.subr.mxu0 %v413
  %1981 = vmatpush1.msra.mxu0 %v412
  %1982 = vmatprep.subr.mxu0 %v417
  %1983 = vmatpush1.msra.mxu0 %v416
  %1984 = vmatprep.subr.mxu0 %v421
  %1985 = vmatpush1.msra.mxu0 %v420
  %1986 = vmatprep.subr.mxu0 %v425
  %1987 = vmatpush1.msra.mxu0 %v424
  %1988 = vmatprep.subr.mxu0 %v429
  %1989 = vmatpush1.msra.mxu0 %v428
  %1990 = vmatprep.subr.mxu0 %v433
  %1991 = vmatpush1.msra.mxu0 %v432
  %1992 = vmatprep.subr.mxu0 %v437
  %1993 = vmatpush1.msra.mxu0 %v436
  %1994 = vmatprep.subr.mxu0 0.0
  %1995 = vmatpush1.msra.mxu0 0.0
  %1996 = vmatprep.subr.mxu0 0.0
  %1997 = vmatpush1.msra.mxu0 0.0
  %1998 = vmatprep.subr.mxu0 0.0
  %1999 = vmatpush1.msra.mxu0 0.0
  %2000 = vmatprep.subr.mxu0 0.0
  %2001 = vmatpush1.msra.mxu0 0.0
  %2002 = vmatprep.subr.mxu0 0.0
  %2003 = vmatpush1.msra.mxu0 0.0
  %2004 = vmatprep.subr.mxu0 0.0
  %2005 = vmatpush1.msra.mxu0 0.0
  %2006 = vmatprep.subr.mxu0 0.0
  %2007 = vmatpush1.msra.mxu0 0.0
  %2008 = vmatprep.subr.mxu0 0.0
  %2009 = vmatpush1.msra.mxu0 0.0
  %2010 = vmatprep.subr.mxu0 0.0
  %2011 = vmatpush1.msra.mxu0 0.0
  %2012 = vmatprep.subr.mxu0 0.0
  %2013 = vmatpush1.msra.mxu0 0.0
  %2014 = vmatprep.subr.mxu0 0.0
  %2015 = vmatpush1.msra.mxu0 0.0
  %2016 = vmatprep.subr.mxu0 0.0
  %2017 = vmatpush1.msra.mxu0 0.0
  %2018 = vmatprep.subr.mxu0 0.0
  %2019 = vmatpush1.msra.mxu0 0.0
  %2020 = vmatprep.subr.mxu0 0.0
  %2021 = vmatpush1.msra.mxu0 0.0
  %2022 = vmatprep.subr.mxu0 0.0
  %2023 = vmatpush1.msra.mxu0 0.0
  %2024 = vmatprep.subr.mxu0 0.0
  %2025 = vmatpush1.msra.mxu0 0.0
  %2026 = vmatprep.mubr.f32.mxu0 0.0
  %2027 = vmatmul.mubr.f32.gmra.mrb[0].mxu0 %v1788
  %v2028 = vpop.f32.mrb[0].mxu0
  %v2029 = vadd.f32 0.0, %v2028
  %v2030 = vpop.f32.mrb[0].mxu0
  %v2031 = vadd.f32 0.0, %v2030
  %2032 = vdwg.mxu0
  %2033 = vmatprep.subr.mxu0 %v379
  %2034 = vmatpush1.msra.mxu0 %v378
  %2035 = vmatprep.subr.mxu0 %v383
  %2036 = vmatpush1.msra.mxu0 %v382
  %2037 = vmatprep.subr.mxu0 %v387
  %2038 = vmatpush1.msra.mxu0 %v386
  %2039 = vmatprep.subr.mxu0 %v391
  %2040 = vmatpush1.msra.mxu0 %v390
  %2041 = vmatprep.subr.mxu0 %v395
  %2042 = vmatpush1.msra.mxu0 %v394
  %2043 = vmatprep.subr.mxu0 %v399
  %2044 = vmatpush1.msra.mxu0 %v398
  %2045 = vmatprep.subr.mxu0 %v403
  %2046 = vmatpush1.msra.mxu0 %v402
  %2047 = vmatprep.subr.mxu0 %v407
  %2048 = vmatpush1.msra.mxu0 %v406
  %2049 = vmatprep.subr.mxu0 %v411
  %2050 = vmatpush1.msra.mxu0 %v410
  %2051 = vmatprep.subr.mxu0 %v415
  %2052 = vmatpush1.msra.mxu0 %v414
  %2053 = vmatprep.subr.mxu0 %v419
  %2054 = vmatpush1.msra.mxu0 %v418
  %2055 = vmatprep.subr.mxu0 %v423
  %2056 = vmatpush1.msra.mxu0 %v422
  %2057 = vmatprep.subr.mxu0 %v427
  %2058 = vmatpush1.msra.mxu0 %v426
  %2059 = vmatprep.subr.mxu0 %v431
  %2060 = vmatpush1.msra.mxu0 %v430
  %2061 = vmatprep.subr.mxu0 %v435
  %2062 = vmatpush1.msra.mxu0 %v434
  %2063 = vmatprep.subr.mxu0 %v439
  %2064 = vmatpush1.msra.mxu0 %v438
  %2065 = vmatprep.subr.mxu0 0.0
  %2066 = vmatpush1.msra.mxu0 0.0
  %2067 = vmatprep.subr.mxu0 0.0
  %2068 = vmatpush1.msra.mxu0 0.0
  %2069 = vmatprep.subr.mxu0 0.0
  %2070 = vmatpush1.msra.mxu0 0.0
  %2071 = vmatprep.subr.mxu0 0.0
  %2072 = vmatpush1.msra.mxu0 0.0
  %2073 = vmatprep.subr.mxu0 0.0
  %2074 = vmatpush1.msra.mxu0 0.0
  %2075 = vmatprep.subr.mxu0 0.0
  %2076 = vmatpush1.msra.mxu0 0.0
  %2077 = vmatprep.subr.mxu0 0.0
  %2078 = vmatpush1.msra.mxu0 0.0
  %2079 = vmatprep.subr.mxu0 0.0
  %2080 = vmatpush1.msra.mxu0 0.0
  %2081 = vmatprep.subr.mxu0 0.0
  %2082 = vmatpush1.msra.mxu0 0.0
  %2083 = vmatprep.subr.mxu0 0.0
  %2084 = vmatpush1.msra.mxu0 0.0
  %2085 = vmatprep.subr.mxu0 0.0
  %2086 = vmatpush1.msra.mxu0 0.0
  %2087 = vmatprep.subr.mxu0 0.0
  %2088 = vmatpush1.msra.mxu0 0.0
  %2089 = vmatprep.subr.mxu0 0.0
  %2090 = vmatpush1.msra.mxu0 0.0
  %2091 = vmatprep.subr.mxu0 0.0
  %2092 = vmatpush1.msra.mxu0 0.0
  %2093 = vmatprep.subr.mxu0 0.0
  %2094 = vmatpush1.msra.mxu0 0.0
  %2095 = vmatprep.subr.mxu0 0.0
  %2096 = vmatpush1.msra.mxu0 0.0
  %2097 = vmatprep.mubr.f32.mxu0 0.0
  %2098 = vmatmul.mubr.f32.gmra.mrb[0].mxu0 %v1788
  %v2099 = vpop.f32.mrb[0].mxu0
  %v2100 = vadd.f32 0.0, %v2099
  %v2101 = vpop.f32.mrb[0].mxu0
  %v2102 = vadd.f32 0.0, %v2101
  %2103 = vdwg.mxu0
  %v2104 = vadd.f32 %v1958, %v2029
  %v2105 = vadd.f32 %v1959, %v2031
  %v2106 = vadd.f32 %v1960, %v2100
  %v2107 = vadd.f32 %v1961, %v2102
  %v2108 = vxor.u32 %v2104, 2147483648
  %v2109 = vmul.f32 %v2108, 1.442695
  %v2110 = vpow.pop %v2109
  %v2111 = vadd.f32 %v2110, 1.0
  %v2112 = vrcp.pop %v2111
  %v2113 = vmul.f32 1.0, %v2112
  %v2114 = vxor.u32 %v2105, 2147483648
  %v2115 = vmul.f32 %v2114, 1.442695
  %v2116 = vpow.pop %v2115
  %v2117 = vadd.f32 %v2116, 1.0
  %v2118 = vrcp.pop %v2117
  %v2119 = vmul.f32 1.0, %v2118
  %v2120 = vtanh.pop %v2106
  %v2121 = vxor.u32 %v2107, 2147483648
  %v2122 = vmul.f32 %v2121, 1.442695
  %v2123 = vpow.pop %v2122
  %v2124 = vadd.f32 %v2123, 1.0
  %v2125 = vrcp.pop %v2124
  %v2126 = vmul.f32 1.0, %v2125
  %v2127 = vmul.f32 %v2119, %v1786
  %v2128 = vmul.f32 %v2113, %v2120
  %v2129 = vadd.f32 %v2127, %v2128
  %v2130 = vtanh.pop %v2129
  %v2131 = vmul.f32 %v2126, %v2130
  %2132 = vmatprep.subr.mxu0 %v611
  %2133 = vmatpush1.msra.mxu0 %v610
  %2134 = vmatprep.subr.mxu0 %v615
  %2135 = vmatpush1.msra.mxu0 %v614
  %2136 = vmatprep.subr.mxu0 %v619
  %2137 = vmatpush1.msra.mxu0 %v618
  %2138 = vmatprep.subr.mxu0 %v623
  %2139 = vmatpush1.msra.mxu0 %v622
  %2140 = vmatprep.subr.mxu0 %v627
  %2141 = vmatpush1.msra.mxu0 %v626
  %2142 = vmatprep.subr.mxu0 %v631
  %2143 = vmatpush1.msra.mxu0 %v630
  %2144 = vmatprep.subr.mxu0 %v635
  %2145 = vmatpush1.msra.mxu0 %v634
  %2146 = vmatprep.subr.mxu0 %v639
  %2147 = vmatpush1.msra.mxu0 %v638
  %2148 = vmatprep.subr.mxu0 %v643
  %2149 = vmatpush1.msra.mxu0 %v642
  %2150 = vmatprep.subr.mxu0 %v647
  %2151 = vmatpush1.msra.mxu0 %v646
  %2152 = vmatprep.subr.mxu0 %v651
  %2153 = vmatpush1.msra.mxu0 %v650
  %2154 = vmatprep.subr.mxu0 %v655
  %2155 = vmatpush1.msra.mxu0 %v654
  %2156 = vmatprep.subr.mxu0 %v659
  %2157 = vmatpush1.msra.mxu0 %v658
  %2158 = vmatprep.subr.mxu0 %v663
  %2159 = vmatpush1.msra.mxu0 %v662
  %2160 = vmatprep.subr.mxu0 %v667
  %2161 = vmatpush1.msra.mxu0 %v666
  %2162 = vmatprep.subr.mxu0 %v671
  %2163 = vmatpush1.msra.mxu0 %v670
  %2164 = vmatprep.subr.mxu0 %v675
  %2165 = vmatpush1.msra.mxu0 %v674
  %2166 = vmatprep.subr.mxu0 %v679
  %2167 = vmatpush1.msra.mxu0 %v678
  %2168 = vmatprep.subr.mxu0 %v683
  %2169 = vmatpush1.msra.mxu0 %v682
  %2170 = vmatprep.subr.mxu0 %v687
  %2171 = vmatpush1.msra.mxu0 %v686
  %2172 = vmatprep.subr.mxu0 %v691
  %2173 = vmatpush1.msra.mxu0 %v690
  %2174 = vmatprep.subr.mxu0 %v695
  %2175 = vmatpush1.msra.mxu0 %v694
  %2176 = vmatprep.subr.mxu0 %v699
  %2177 = vmatpush1.msra.mxu0 %v698
  %2178 = vmatprep.subr.mxu0 %v703
  %2179 = vmatpush1.msra.mxu0 %v702
  %2180 = vmatprep.subr.mxu0 %v707
  %2181 = vmatpush1.msra.mxu0 %v706
  %2182 = vmatprep.subr.mxu0 %v711
  %2183 = vmatpush1.msra.mxu0 %v710
  %2184 = vmatprep.subr.mxu0 %v715
  %2185 = vmatpush1.msra.mxu0 %v714
  %2186 = vmatprep.subr.mxu0 %v719
  %2187 = vmatpush1.msra.mxu0 %v718
  %2188 = vmatprep.subr.mxu0 %v723
  %2189 = vmatpush1.msra.mxu0 %v722
  %2190 = vmatprep.subr.mxu0 %v727
  %2191 = vmatpush1.msra.mxu0 %v726
  %2192 = vmatprep.subr.mxu0 %v731
  %2193 = vmatpush1.msra.mxu0 %v730
  %2194 = vmatprep.subr.mxu0 %v735
  %2195 = vmatpush1.msra.mxu0 %v734
  %2196 = vmatprep.mubr.f32.mxu0 %v1954
  %2197 = vmatmul.mubr.f32.gmra.mrb[0].mxu0 %v2131
  %v2198 = vpop.f32.mrb[0].mxu0
  %v2199 = vadd.f32 %v743, %v2198
  %v2200 = vpop.f32.mrb[0].mxu0
  %v2201 = vadd.f32 %v747, %v2200
  %2202 = vdwg.mxu0
  %2203 = vmatprep.subr.mxu0 %v613
  %2204 = vmatpush1.msra.mxu0 %v612
  %2205 = vmatprep.subr.mxu0 %v617
  %2206 = vmatpush1.msra.mxu0 %v616
  %2207 = vmatprep.subr.mxu0 %v621
  %2208 = vmatpush1.msra.mxu0 %v620
  %2209 = vmatprep.subr.mxu0 %v625
  %2210 = vmatpush1.msra.mxu0 %v624
  %2211 = vmatprep.subr.mxu0 %v629
  %2212 = vmatpush1.msra.mxu0 %v628
  %2213 = vmatprep.subr.mxu0 %v633
  %2214 = vmatpush1.msra.mxu0 %v632
  %2215 = vmatprep.subr.mxu0 %v637
  %2216 = vmatpush1.msra.mxu0 %v636
  %2217 = vmatprep.subr.mxu0 %v641
  %2218 = vmatpush1.msra.mxu0 %v640
  %2219 = vmatprep.subr.mxu0 %v645
  %2220 = vmatpush1.msra.mxu0 %v644
  %2221 = vmatprep.subr.mxu0 %v649
  %2222 = vmatpush1.msra.mxu0 %v648
  %2223 = vmatprep.subr.mxu0 %v653
  %2224 = vmatpush1.msra.mxu0 %v652
  %2225 = vmatprep.subr.mxu0 %v657
  %2226 = vmatpush1.msra.mxu0 %v656
  %2227 = vmatprep.subr.mxu0 %v661
  %2228 = vmatpush1.msra.mxu0 %v660
  %2229 = vmatprep.subr.mxu0 %v665
  %2230 = vmatpush1.msra.mxu0 %v664
  %2231 = vmatprep.subr.mxu0 %v669
  %2232 = vmatpush1.msra.mxu0 %v668
  %2233 = vmatprep.subr.mxu0 %v673
  %2234 = vmatpush1.msra.mxu0 %v672
  %2235 = vmatprep.subr.mxu0 %v677
  %2236 = vmatpush1.msra.mxu0 %v676
  %2237 = vmatprep.subr.mxu0 %v681
  %2238 = vmatpush1.msra.mxu0 %v680
  %2239 = vmatprep.subr.mxu0 %v685
  %2240 = vmatpush1.msra.mxu0 %v684
  %2241 = vmatprep.subr.mxu0 %v689
  %2242 = vmatpush1.msra.mxu0 %v688
  %2243 = vmatprep.subr.mxu0 %v693
  %2244 = vmatpush1.msra.mxu0 %v692
  %2245 = vmatprep.subr.mxu0 %v697
  %2246 = vmatpush1.msra.mxu0 %v696
  %2247 = vmatprep.subr.mxu0 %v701
  %2248 = vmatpush1.msra.mxu0 %v700
  %2249 = vmatprep.subr.mxu0 %v705
  %2250 = vmatpush1.msra.mxu0 %v704
  %2251 = vmatprep.subr.mxu0 %v709
  %2252 = vmatpush1.msra.mxu0 %v708
  %2253 = vmatprep.subr.mxu0 %v713
  %2254 = vmatpush1.msra.mxu0 %v712
  %2255 = vmatprep.subr.mxu0 %v717
  %2256 = vmatpush1.msra.mxu0 %v716
  %2257 = vmatprep.subr.mxu0 %v721
  %2258 = vmatpush1.msra.mxu0 %v720
  %2259 = vmatprep.subr.mxu0 %v725
  %2260 = vmatpush1.msra.mxu0 %v724
  %2261 = vmatprep.subr.mxu0 %v729
  %2262 = vmatpush1.msra.mxu0 %v728
  %2263 = vmatprep.subr.mxu0 %v733
  %2264 = vmatpush1.msra.mxu0 %v732
  %2265 = vmatprep.subr.mxu0 %v737
  %2266 = vmatpush1.msra.mxu0 %v736
  %2267 = vmatprep.mubr.f32.mxu0 %v1954
  %2268 = vmatmul.mubr.f32.gmra.mrb[0].mxu0 %v2131
  %v2269 = vpop.f32.mrb[0].mxu0
  %v2270 = vadd.f32 %v751, %v2269
  %v2271 = vpop.f32.mrb[0].mxu0
  %v2272 = vadd.f32 %v755, %v2271
  %2273 = vdwg.mxu0
  %v2274 = vxor.u32 %v2199, 2147483648
  %v2275 = vmul.f32 %v2274, 1.442695
  %v2276 = vpow.pop %v2275
  %v2277 = vadd.f32 %v2276, 1.0
  %v2278 = vrcp.pop %v2277
  %v2279 = vmul.f32 1.0, %v2278
  %v2280 = vxor.u32 %v2201, 2147483648
  %v2281 = vmul.f32 %v2280, 1.442695
  %v2282 = vpow.pop %v2281
  %v2283 = vadd.f32 %v2282, 1.0
  %v2284 = vrcp.pop %v2283
  %v2285 = vmul.f32 1.0, %v2284
  %v2286 = vtanh.pop %v2270
  %v2287 = vxor.u32 %v2272, 2147483648
  %v2288 = vmul.f32 %v2287, 1.442695
  %v2289 = vpow.pop %v2288
  %v2290 = vadd.f32 %v2289, 1.0
  %v2291 = vrcp.pop %v2290
  %v2292 = vmul.f32 1.0, %v2291
  %v2293 = vmul.f32 %v2285, %v1952
  %v2294 = vmul.f32 %v2279, %v2286
  %v2295 = vadd.f32 %v2293, %v2294
  %v2296 = vtanh.pop %v2295
  %v2297 = vmul.f32 %v2292, %v2296
  %s2298 = smul.u32 5, 4
  %s2299 = smul.addr %s2298, 8
  %s2300 = scalar_lea.vmem [#allocation2], %s2299
  %v2301 = vld [vmem:[%s2300] sm:$0xff]
  %v2302 = vld [vmem:[%s2300 + $0x8] sm:$0xff]
  %v2303 = vld [vmem:[%s2300 + $0x10] sm:$0xff]
  %v2304 = vld [vmem:[%s2300 + $0x18] sm:$0xff]
  %2305 = vmatprep.subr.mxu0 %v377
  %2306 = vmatpush1.msra.mxu0 %v376
  %2307 = vmatprep.subr.mxu0 %v381
  %2308 = vmatpush1.msra.mxu0 %v380
  %2309 = vmatprep.subr.mxu0 %v385
  %2310 = vmatpush1.msra.mxu0 %v384
  %2311 = vmatprep.subr.mxu0 %v389
  %2312 = vmatpush1.msra.mxu0 %v388
  %2313 = vmatprep.subr.mxu0 %v393
  %2314 = vmatpush1.msra.mxu0 %v392
  %2315 = vmatprep.subr.mxu0 %v397
  %2316 = vmatpush1.msra.mxu0 %v396
  %2317 = vmatprep.subr.mxu0 %v401
  %2318 = vmatpush1.msra.mxu0 %v400
  %2319 = vmatprep.subr.mxu0 %v405
  %2320 = vmatpush1.msra.mxu0 %v404
  %2321 = vmatprep.subr.mxu0 %v409
  %2322 = vmatpush1.msra.mxu0 %v408
  %2323 = vmatprep.subr.mxu0 %v413
  %2324 = vmatpush1.msra.mxu0 %v412
  %2325 = vmatprep.subr.mxu0 %v417
  %2326 = vmatpush1.msra.mxu0 %v416
  %2327 = vmatprep.subr.mxu0 %v421
  %2328 = vmatpush1.msra.mxu0 %v420
  %2329 = vmatprep.subr.mxu0 %v425
  %2330 = vmatpush1.msra.mxu0 %v424
  %2331 = vmatprep.subr.mxu0 %v429
  %2332 = vmatpush1.msra.mxu0 %v428
  %2333 = vmatprep.subr.mxu0 %v433
  %2334 = vmatpush1.msra.mxu0 %v432
  %2335 = vmatprep.subr.mxu0 %v437
  %2336 = vmatpush1.msra.mxu0 %v436
  %2337 = vmatprep.subr.mxu0 0.0
  %2338 = vmatpush1.msra.mxu0 0.0
  %2339 = vmatprep.subr.mxu0 0.0
  %2340 = vmatpush1.msra.mxu0 0.0
  %2341 = vmatprep.subr.mxu0 0.0
  %2342 = vmatpush1.msra.mxu0 0.0
  %2343 = vmatprep.subr.mxu0 0.0
  %2344 = vmatpush1.msra.mxu0 0.0
  %2345 = vmatprep.subr.mxu0 0.0
  %2346 = vmatpush1.msra.mxu0 0.0
  %2347 = vmatprep.subr.mxu0 0.0
  %2348 = vmatpush1.msra.mxu0 0.0
  %2349 = vmatprep.subr.mxu0 0.0
  %2350 = vmatpush1.msra.mxu0 0.0
  %2351 = vmatprep.subr.mxu0 0.0
  %2352 = vmatpush1.msra.mxu0 0.0
  %2353 = vmatprep.subr.mxu0 0.0
  %2354 = vmatpush1.msra.mxu0 0.0
  %2355 = vmatprep.subr.mxu0 0.0
  %2356 = vmatpush1.msra.mxu0 0.0
  %2357 = vmatprep.subr.mxu0 0.0
  %2358 = vmatpush1.msra.mxu0 0.0
  %2359 = vmatprep.subr.mxu0 0.0
  %2360 = vmatpush1.msra.mxu0 0.0
  %2361 = vmatprep.subr.mxu0 0.0
  %2362 = vmatpush1.msra.mxu0 0.0
  %2363 = vmatprep.subr.mxu0 0.0
  %2364 = vmatpush1.msra.mxu0 0.0
  %2365 = vmatprep.subr.mxu0 0.0
  %2366 = vmatpush1.msra.mxu0 0.0
  %2367 = vmatprep.subr.mxu0 0.0
  %2368 = vmatpush1.msra.mxu0 0.0
  %2369 = vmatprep.mubr.f32.mxu0 0.0
  %2370 = vmatmul.mubr.f32.gmra.mrb[0].mxu0 %v2131
  %v2371 = vpop.f32.mrb[0].mxu0
  %v2372 = vadd.f32 0.0, %v2371
  %v2373 = vpop.f32.mrb[0].mxu0
  %v2374 = vadd.f32 0.0, %v2373
  %2375 = vdwg.mxu0
  %2376 = vmatprep.subr.mxu0 %v379
  %2377 = vmatpush1.msra.mxu0 %v378
  %2378 = vmatprep.subr.mxu0 %v383
  %2379 = vmatpush1.msra.mxu0 %v382
  %2380 = vmatprep.subr.mxu0 %v387
  %2381 = vmatpush1.msra.mxu0 %v386
  %2382 = vmatprep.subr.mxu0 %v391
  %2383 = vmatpush1.msra.mxu0 %v390
  %2384 = vmatprep.subr.mxu0 %v395
  %2385 = vmatpush1.msra.mxu0 %v394
  %2386 = vmatprep.subr.mxu0 %v399
  %2387 = vmatpush1.msra.mxu0 %v398
  %2388 = vmatprep.subr.mxu0 %v403
  %2389 = vmatpush1.msra.mxu0 %v402
  %2390 = vmatprep.subr.mxu0 %v407
  %2391 = vmatpush1.msra.mxu0 %v406
  %2392 = vmatprep.subr.mxu0 %v411
  %2393 = vmatpush1.msra.mxu0 %v410
  %2394 = vmatprep.subr.mxu0 %v415
  %2395 = vmatpush1.msra.mxu0 %v414
  %2396 = vmatprep.subr.mxu0 %v419
  %2397 = vmatpush1.msra.mxu0 %v418
  %2398 = vmatprep.subr.mxu0 %v423
  %2399 = vmatpush1.msra.mxu0 %v422
  %2400 = vmatprep.subr.mxu0 %v427
  %2401 = vmatpush1.msra.mxu0 %v426
  %2402 = vmatprep.subr.mxu0 %v431
  %2403 = vmatpush1.msra.mxu0 %v430
  %2404 = vmatprep.subr.mxu0 %v435
  %2405 = vmatpush1.msra.mxu0 %v434
  %2406 = vmatprep.subr.mxu0 %v439
  %2407 = vmatpush1.msra.mxu0 %v438
  %2408 = vmatprep.subr.mxu0 0.0
  %2409 = vmatpush1.msra.mxu0 0.0
  %2410 = vmatprep.subr.mxu0 0.0
  %2411 = vmatpush1.msra.mxu0 0.0
  %2412 = vmatprep.subr.mxu0 0.0
  %2413 = vmatpush1.msra.mxu0 0.0
  %2414 = vmatprep.subr.mxu0 0.0
  %2415 = vmatpush1.msra.mxu0 0.0
  %2416 = vmatprep.subr.mxu0 0.0
  %2417 = vmatpush1.msra.mxu0 0.0
  %2418 = vmatprep.subr.mxu0 0.0
  %2419 = vmatpush1.msra.mxu0 0.0
  %2420 = vmatprep.subr.mxu0 0.0
  %2421 = vmatpush1.msra.mxu0 0.0
  %2422 = vmatprep.subr.mxu0 0.0
  %2423 = vmatpush1.msra.mxu0 0.0
  %2424 = vmatprep.subr.mxu0 0.0
  %2425 = vmatpush1.msra.mxu0 0.0
  %2426 = vmatprep.subr.mxu0 0.0
  %2427 = vmatpush1.msra.mxu0 0.0
  %2428 = vmatprep.subr.mxu0 0.0
  %2429 = vmatpush1.msra.mxu0 0.0
  %2430 = vmatprep.subr.mxu0 0.0
  %2431 = vmatpush1.msra.mxu0 0.0
  %2432 = vmatprep.subr.mxu0 0.0
  %2433 = vmatpush1.msra.mxu0 0.0
  %2434 = vmatprep.subr.mxu0 0.0
  %2435 = vmatpush1.msra.mxu0 0.0
  %2436 = vmatprep.subr.mxu0 0.0
  %2437 = vmatpush1.msra.mxu0 0.0
  %2438 = vmatprep.subr.mxu0 0.0
  %2439 = vmatpush1.msra.mxu0 0.0
  %2440 = vmatprep.mubr.f32.mxu0 0.0
  %2441 = vmatmul.mubr.f32.gmra.mrb[0].mxu0 %v2131
  %v2442 = vpop.f32.mrb[0].mxu0
  %v2443 = vadd.f32 0.0, %v2442
  %v2444 = vpop.f32.mrb[0].mxu0
  %v2445 = vadd.f32 0.0, %v2444
  %2446 = vdwg.mxu0
  %v2447 = vadd.f32 %v2301, %v2372
  %v2448 = vadd.f32 %v2302, %v2374
  %v2449 = vadd.f32 %v2303, %v2443
  %v2450 = vadd.f32 %v2304, %v2445
  %v2451 = vxor.u32 %v2447, 2147483648
  %v2452 = vmul.f32 %v2451, 1.442695
  %v2453 = vpow.pop %v2452
  %v2454 = vadd.f32 %v2453, 1.0
  %v2455 = vrcp.pop %v2454
  %v2456 = vmul.f32 1.0, %v2455
  %v2457 = vxor.u32 %v2448, 2147483648
  %v2458 = vmul.f32 %v2457, 1.442695
  %v2459 = vpow.pop %v2458
  %v2460 = vadd.f32 %v2459, 1.0
  %v2461 = vrcp.pop %v2460
  %v2462 = vmul.f32 1.0, %v2461
  %v2463 = vtanh.pop %v2449
  %v2464 = vxor.u32 %v2450, 2147483648
  %v2465 = vmul.f32 %v2464, 1.442695
  %v2466 = vpow.pop %v2465
  %v2467 = vadd.f32 %v2466, 1.0
  %v2468 = vrcp.pop %v2467
  %v2469 = vmul.f32 1.0, %v2468
  %v2470 = vmul.f32 %v2462, %v2129
  %v2471 = vmul.f32 %v2456, %v2463
  %v2472 = vadd.f32 %v2470, %v2471
  %v2473 = vtanh.pop %v2472
  %v2474 = vmul.f32 %v2469, %v2473
  %2475 = vmatprep.subr.mxu0 %v611
  %2476 = vmatpush1.msra.mxu0 %v610
  %2477 = vmatprep.subr.mxu0 %v615
  %2478 = vmatpush1.msra.mxu0 %v614
  %2479 = vmatprep.subr.mxu0 %v619
  %2480 = vmatpush1.msra.mxu0 %v618
  %2481 = vmatprep.subr.mxu0 %v623
  %2482 = vmatpush1.msra.mxu0 %v622
  %2483 = vmatprep.subr.mxu0 %v627
  %2484 = vmatpush1.msra.mxu0 %v626
  %2485 = vmatprep.subr.mxu0 %v631
  %2486 = vmatpush1.msra.mxu0 %v630
  %2487 = vmatprep.subr.mxu0 %v635
  %2488 = vmatpush1.msra.mxu0 %v634
  %2489 = vmatprep.subr.mxu0 %v639
  %2490 = vmatpush1.msra.mxu0 %v638
  %2491 = vmatprep.subr.mxu0 %v643
  %2492 = vmatpush1.msra.mxu0 %v642
  %2493 = vmatprep.subr.mxu0 %v647
  %2494 = vmatpush1.msra.mxu0 %v646
  %2495 = vmatprep.subr.mxu0 %v651
  %2496 = vmatpush1.msra.mxu0 %v650
  %2497 = vmatprep.subr.mxu0 %v655
  %2498 = vmatpush1.msra.mxu0 %v654
  %2499 = vmatprep.subr.mxu0 %v659
  %2500 = vmatpush1.msra.mxu0 %v658
  %2501 = vmatprep.subr.mxu0 %v663
  %2502 = vmatpush1.msra.mxu0 %v662
  %2503 = vmatprep.subr.mxu0 %v667
  %2504 = vmatpush1.msra.mxu0 %v666
  %2505 = vmatprep.subr.mxu0 %v671
  %2506 = vmatpush1.msra.mxu0 %v670
  %2507 = vmatprep.subr.mxu0 %v675
  %2508 = vmatpush1.msra.mxu0 %v674
  %2509 = vmatprep.subr.mxu0 %v679
  %2510 = vmatpush1.msra.mxu0 %v678
  %2511 = vmatprep.subr.mxu0 %v683
  %2512 = vmatpush1.msra.mxu0 %v682
  %2513 = vmatprep.subr.mxu0 %v687
  %2514 = vmatpush1.msra.mxu0 %v686
  %2515 = vmatprep.subr.mxu0 %v691
  %2516 = vmatpush1.msra.mxu0 %v690
  %2517 = vmatprep.subr.mxu0 %v695
  %2518 = vmatpush1.msra.mxu0 %v694
  %2519 = vmatprep.subr.mxu0 %v699
  %2520 = vmatpush1.msra.mxu0 %v698
  %2521 = vmatprep.subr.mxu0 %v703
  %2522 = vmatpush1.msra.mxu0 %v702
  %2523 = vmatprep.subr.mxu0 %v707
  %2524 = vmatpush1.msra.mxu0 %v706
  %2525 = vmatprep.subr.mxu0 %v711
  %2526 = vmatpush1.msra.mxu0 %v710
  %2527 = vmatprep.subr.mxu0 %v715
  %2528 = vmatpush1.msra.mxu0 %v714
  %2529 = vmatprep.subr.mxu0 %v719
  %2530 = vmatpush1.msra.mxu0 %v718
  %2531 = vmatprep.subr.mxu0 %v723
  %2532 = vmatpush1.msra.mxu0 %v722
  %2533 = vmatprep.subr.mxu0 %v727
  %2534 = vmatpush1.msra.mxu0 %v726
  %2535 = vmatprep.subr.mxu0 %v731
  %2536 = vmatpush1.msra.mxu0 %v730
  %2537 = vmatprep.subr.mxu0 %v735
  %2538 = vmatpush1.msra.mxu0 %v734
  %2539 = vmatprep.mubr.f32.mxu0 %v2297
  %2540 = vmatmul.mubr.f32.gmra.mrb[0].mxu0 %v2474
  %v2541 = vpop.f32.mrb[0].mxu0
  %v2542 = vadd.f32 %v743, %v2541
  %v2543 = vpop.f32.mrb[0].mxu0
  %v2544 = vadd.f32 %v747, %v2543
  %2545 = vdwg.mxu0
  %2546 = vmatprep.subr.mxu0 %v613
  %2547 = vmatpush1.msra.mxu0 %v612
  %2548 = vmatprep.subr.mxu0 %v617
  %2549 = vmatpush1.msra.mxu0 %v616
  %2550 = vmatprep.subr.mxu0 %v621
  %2551 = vmatpush1.msra.mxu0 %v620
  %2552 = vmatprep.subr.mxu0 %v625
  %2553 = vmatpush1.msra.mxu0 %v624
  %2554 = vmatprep.subr.mxu0 %v629
  %2555 = vmatpush1.msra.mxu0 %v628
  %2556 = vmatprep.subr.mxu0 %v633
  %2557 = vmatpush1.msra.mxu0 %v632
  %2558 = vmatprep.subr.mxu0 %v637
  %2559 = vmatpush1.msra.mxu0 %v636
  %2560 = vmatprep.subr.mxu0 %v641
  %2561 = vmatpush1.msra.mxu0 %v640
  %2562 = vmatprep.subr.mxu0 %v645
  %2563 = vmatpush1.msra.mxu0 %v644
  %2564 = vmatprep.subr.mxu0 %v649
  %2565 = vmatpush1.msra.mxu0 %v648
  %2566 = vmatprep.subr.mxu0 %v653
  %2567 = vmatpush1.msra.mxu0 %v652
  %2568 = vmatprep.subr.mxu0 %v657
  %2569 = vmatpush1.msra.mxu0 %v656
  %2570 = vmatprep.subr.mxu0 %v661
  %2571 = vmatpush1.msra.mxu0 %v660
  %2572 = vmatprep.subr.mxu0 %v665
  %2573 = vmatpush1.msra.mxu0 %v664
  %2574 = vmatprep.subr.mxu0 %v669
  %2575 = vmatpush1.msra.mxu0 %v668
  %2576 = vmatprep.subr.mxu0 %v673
  %2577 = vmatpush1.msra.mxu0 %v672
  %2578 = vmatprep.subr.mxu0 %v677
  %2579 = vmatpush1.msra.mxu0 %v676
  %2580 = vmatprep.subr.mxu0 %v681
  %2581 = vmatpush1.msra.mxu0 %v680
  %2582 = vmatprep.subr.mxu0 %v685
  %2583 = vmatpush1.msra.mxu0 %v684
  %2584 = vmatprep.subr.mxu0 %v689
  %2585 = vmatpush1.msra.mxu0 %v688
  %2586 = vmatprep.subr.mxu0 %v693
  %2587 = vmatpush1.msra.mxu0 %v692
  %2588 = vmatprep.subr.mxu0 %v697
  %2589 = vmatpush1.msra.mxu0 %v696
  %2590 = vmatprep.subr.mxu0 %v701
  %2591 = vmatpush1.msra.mxu0 %v700
  %2592 = vmatprep.subr.mxu0 %v705
  %2593 = vmatpush1.msra.mxu0 %v704
  %2594 = vmatprep.subr.mxu0 %v709
  %2595 = vmatpush1.msra.mxu0 %v708
  %2596 = vmatprep.subr.mxu0 %v713
  %2597 = vmatpush1.msra.mxu0 %v712
  %2598 = vmatprep.subr.mxu0 %v717
  %2599 = vmatpush1.msra.mxu0 %v716
  %2600 = vmatprep.subr.mxu0 %v721
  %2601 = vmatpush1.msra.mxu0 %v720
  %2602 = vmatprep.subr.mxu0 %v725
  %2603 = vmatpush1.msra.mxu0 %v724
  %2604 = vmatprep.subr.mxu0 %v729
  %2605 = vmatpush1.msra.mxu0 %v728
  %2606 = vmatprep.subr.mxu0 %v733
  %2607 = vmatpush1.msra.mxu0 %v732
  %2608 = vmatprep.subr.mxu0 %v737
  %2609 = vmatpush1.msra.mxu0 %v736
  %2610 = vmatprep.mubr.f32.mxu0 %v2297
  %2611 = vmatmul.mubr.f32.gmra.mrb[0].mxu0 %v2474
  %v2612 = vpop.f32.mrb[0].mxu0
  %v2613 = vadd.f32 %v751, %v2612
  %v2614 = vpop.f32.mrb[0].mxu0
  %v2615 = vadd.f32 %v755, %v2614
  %2616 = vdwg.mxu0
  %v2617 = vxor.u32 %v2542, 2147483648
  %v2618 = vmul.f32 %v2617, 1.442695
  %v2619 = vpow.pop %v2618
  %v2620 = vadd.f32 %v2619, 1.0
  %v2621 = vrcp.pop %v2620
  %v2622 = vmul.f32 1.0, %v2621
  %v2623 = vxor.u32 %v2544, 2147483648
  %v2624 = vmul.f32 %v2623, 1.442695
  %v2625 = vpow.pop %v2624
  %v2626 = vadd.f32 %v2625, 1.0
  %v2627 = vrcp.pop %v2626
  %v2628 = vmul.f32 1.0, %v2627
  %v2629 = vtanh.pop %v2613
  %v2630 = vxor.u32 %v2615, 2147483648
  %v2631 = vmul.f32 %v2630, 1.442695
  %v2632 = vpow.pop %v2631
  %v2633 = vadd.f32 %v2632, 1.0
  %v2634 = vrcp.pop %v2633
  %v2635 = vmul.f32 1.0, %v2634
  %v2636 = vmul.f32 %v2628, %v2295
  %v2637 = vmul.f32 %v2622, %v2629
  %v2638 = vadd.f32 %v2636, %v2637
  %v2639 = vtanh.pop %v2638
  %v2640 = vmul.f32 %v2635, %v2639
  %s2641 = smul.u32 6, 4
  %s2642 = smul.addr %s2641, 8
  %s2643 = scalar_lea.vmem [#allocation2], %s2642
  %v2644 = vld [vmem:[%s2643] sm:$0xff]
  %v2645 = vld [vmem:[%s2643 + $0x8] sm:$0xff]
  %v2646 = vld [vmem:[%s2643 + $0x10] sm:$0xff]
  %v2647 = vld [vmem:[%s2643 + $0x18] sm:$0xff]
  %2648 = vmatprep.subr.mxu0 %v377
  %2649 = vmatpush1.msra.mxu0 %v376
  %2650 = vmatprep.subr.mxu0 %v381
  %2651 = vmatpush1.msra.mxu0 %v380
  %2652 = vmatprep.subr.mxu0 %v385
  %2653 = vmatpush1.msra.mxu0 %v384
  %2654 = vmatprep.subr.mxu0 %v389
  %2655 = vmatpush1.msra.mxu0 %v388
  %2656 = vmatprep.subr.mxu0 %v393
  %2657 = vmatpush1.msra.mxu0 %v392
  %2658 = vmatprep.subr.mxu0 %v397
  %2659 = vmatpush1.msra.mxu0 %v396
  %2660 = vmatprep.subr.mxu0 %v401
  %2661 = vmatpush1.msra.mxu0 %v400
  %2662 = vmatprep.subr.mxu0 %v405
  %2663 = vmatpush1.msra.mxu0 %v404
  %2664 = vmatprep.subr.mxu0 %v409
  %2665 = vmatpush1.msra.mxu0 %v408
  %2666 = vmatprep.subr.mxu0 %v413
  %2667 = vmatpush1.msra.mxu0 %v412
  %2668 = vmatprep.subr.mxu0 %v417
  %2669 = vmatpush1.msra.mxu0 %v416
  %2670 = vmatprep.subr.mxu0 %v421
  %2671 = vmatpush1.msra.mxu0 %v420
  %2672 = vmatprep.subr.mxu0 %v425
  %2673 = vmatpush1.msra.mxu0 %v424
  %2674 = vmatprep.subr.mxu0 %v429
  %2675 = vmatpush1.msra.mxu0 %v428
  %2676 = vmatprep.subr.mxu0 %v433
  %2677 = vmatpush1.msra.mxu0 %v432
  %2678 = vmatprep.subr.mxu0 %v437
  %2679 = vmatpush1.msra.mxu0 %v436
  %2680 = vmatprep.subr.mxu0 0.0
  %2681 = vmatpush1.msra.mxu0 0.0
  %2682 = vmatprep.subr.mxu0 0.0
  %2683 = vmatpush1.msra.mxu0 0.0
  %2684 = vmatprep.subr.mxu0 0.0
  %2685 = vmatpush1.msra.mxu0 0.0
  %2686 = vmatprep.subr.mxu0 0.0
  %2687 = vmatpush1.msra.mxu0 0.0
  %2688 = vmatprep.subr.mxu0 0.0
  %2689 = vmatpush1.msra.mxu0 0.0
  %2690 = vmatprep.subr.mxu0 0.0
  %2691 = vmatpush1.msra.mxu0 0.0
  %2692 = vmatprep.subr.mxu0 0.0
  %2693 = vmatpush1.msra.mxu0 0.0
  %2694 = vmatprep.subr.mxu0 0.0
  %2695 = vmatpush1.msra.mxu0 0.0
  %2696 = vmatprep.subr.mxu0 0.0
  %2697 = vmatpush1.msra.mxu0 0.0
  %2698 = vmatprep.subr.mxu0 0.0
  %2699 = vmatpush1.msra.mxu0 0.0
  %2700 = vmatprep.subr.mxu0 0.0
  %2701 = vmatpush1.msra.mxu0 0.0
  %2702 = vmatprep.subr.mxu0 0.0
  %2703 = vmatpush1.msra.mxu0 0.0
  %2704 = vmatprep.subr.mxu0 0.0
  %2705 = vmatpush1.msra.mxu0 0.0
  %2706 = vmatprep.subr.mxu0 0.0
  %2707 = vmatpush1.msra.mxu0 0.0
  %2708 = vmatprep.subr.mxu0 0.0
  %2709 = vmatpush1.msra.mxu0 0.0
  %2710 = vmatprep.subr.mxu0 0.0
  %2711 = vmatpush1.msra.mxu0 0.0
  %2712 = vmatprep.mubr.f32.mxu0 0.0
  %2713 = vmatmul.mubr.f32.gmra.mrb[0].mxu0 %v2474
  %v2714 = vpop.f32.mrb[0].mxu0
  %v2715 = vadd.f32 0.0, %v2714
  %v2716 = vpop.f32.mrb[0].mxu0
  %v2717 = vadd.f32 0.0, %v2716
  %2718 = vdwg.mxu0
  %2719 = vmatprep.subr.mxu0 %v379
  %2720 = vmatpush1.msra.mxu0 %v378
  %2721 = vmatprep.subr.mxu0 %v383
  %2722 = vmatpush1.msra.mxu0 %v382
  %2723 = vmatprep.subr.mxu0 %v387
  %2724 = vmatpush1.msra.mxu0 %v386
  %2725 = vmatprep.subr.mxu0 %v391
  %2726 = vmatpush1.msra.mxu0 %v390
  %2727 = vmatprep.subr.mxu0 %v395
  %2728 = vmatpush1.msra.mxu0 %v394
  %2729 = vmatprep.subr.mxu0 %v399
  %2730 = vmatpush1.msra.mxu0 %v398
  %2731 = vmatprep.subr.mxu0 %v403
  %2732 = vmatpush1.msra.mxu0 %v402
  %2733 = vmatprep.subr.mxu0 %v407
  %2734 = vmatpush1.msra.mxu0 %v406
  %2735 = vmatprep.subr.mxu0 %v411
  %2736 = vmatpush1.msra.mxu0 %v410
  %2737 = vmatprep.subr.mxu0 %v415
  %2738 = vmatpush1.msra.mxu0 %v414
  %2739 = vmatprep.subr.mxu0 %v419
  %2740 = vmatpush1.msra.mxu0 %v418
  %2741 = vmatprep.subr.mxu0 %v423
  %2742 = vmatpush1.msra.mxu0 %v422
  %2743 = vmatprep.subr.mxu0 %v427
  %2744 = vmatpush1.msra.mxu0 %v426
  %2745 = vmatprep.subr.mxu0 %v431
  %2746 = vmatpush1.msra.mxu0 %v430
  %2747 = vmatprep.subr.mxu0 %v435
  %2748 = vmatpush1.msra.mxu0 %v434
  %2749 = vmatprep.subr.mxu0 %v439
  %2750 = vmatpush1.msra.mxu0 %v438
  %2751 = vmatprep.subr.mxu0 0.0
  %2752 = vmatpush1.msra.mxu0 0.0
  %2753 = vmatprep.subr.mxu0 0.0
  %2754 = vmatpush1.msra.mxu0 0.0
  %2755 = vmatprep.subr.mxu0 0.0
  %2756 = vmatpush1.msra.mxu0 0.0
  %2757 = vmatprep.subr.mxu0 0.0
  %2758 = vmatpush1.msra.mxu0 0.0
  %2759 = vmatprep.subr.mxu0 0.0
  %2760 = vmatpush1.msra.mxu0 0.0
  %2761 = vmatprep.subr.mxu0 0.0
  %2762 = vmatpush1.msra.mxu0 0.0
  %2763 = vmatprep.subr.mxu0 0.0
  %2764 = vmatpush1.msra.mxu0 0.0
  %2765 = vmatprep.subr.mxu0 0.0
  %2766 = vmatpush1.msra.mxu0 0.0
  %2767 = vmatprep.subr.mxu0 0.0
  %2768 = vmatpush1.msra.mxu0 0.0
  %2769 = vmatprep.subr.mxu0 0.0
  %2770 = vmatpush1.msra.mxu0 0.0
  %2771 = vmatprep.subr.mxu0 0.0
  %2772 = vmatpush1.msra.mxu0 0.0
  %2773 = vmatprep.subr.mxu0 0.0
  %2774 = vmatpush1.msra.mxu0 0.0
  %2775 = vmatprep.subr.mxu0 0.0
  %2776 = vmatpush1.msra.mxu0 0.0
  %2777 = vmatprep.subr.mxu0 0.0
  %2778 = vmatpush1.msra.mxu0 0.0
  %2779 = vmatprep.subr.mxu0 0.0
  %2780 = vmatpush1.msra.mxu0 0.0
  %2781 = vmatprep.subr.mxu0 0.0
  %2782 = vmatpush1.msra.mxu0 0.0
  %2783 = vmatprep.mubr.f32.mxu0 0.0
  %2784 = vmatmul.mubr.f32.gmra.mrb[0].mxu0 %v2474
  %v2785 = vpop.f32.mrb[0].mxu0
  %v2786 = vadd.f32 0.0, %v2785
  %v2787 = vpop.f32.mrb[0].mxu0
  %v2788 = vadd.f32 0.0, %v2787
  %2789 = vdwg.mxu0
  %v2790 = vadd.f32 %v2644, %v2715
  %v2791 = vadd.f32 %v2645, %v2717
  %v2792 = vadd.f32 %v2646, %v2786
  %v2793 = vadd.f32 %v2647, %v2788
  %v2794 = vxor.u32 %v2790, 2147483648
  %v2795 = vmul.f32 %v2794, 1.442695
  %v2796 = vpow.pop %v2795
  %v2797 = vadd.f32 %v2796, 1.0
  %v2798 = vrcp.pop %v2797
  %v2799 = vmul.f32 1.0, %v2798
  %v2800 = vxor.u32 %v2791, 2147483648
  %v2801 = vmul.f32 %v2800, 1.442695
  %v2802 = vpow.pop %v2801
  %v2803 = vadd.f32 %v2802, 1.0
  %v2804 = vrcp.pop %v2803
  %v2805 = vmul.f32 1.0, %v2804
  %v2806 = vtanh.pop %v2792
  %v2807 = vxor.u32 %v2793, 2147483648
  %v2808 = vmul.f32 %v2807, 1.442695
  %v2809 = vpow.pop %v2808
  %v2810 = vadd.f32 %v2809, 1.0
  %v2811 = vrcp.pop %v2810
  %v2812 = vmul.f32 1.0, %v2811
  %v2813 = vmul.f32 %v2805, %v2472
  %v2814 = vmul.f32 %v2799, %v2806
  %v2815 = vadd.f32 %v2813, %v2814
  %v2816 = vtanh.pop %v2815
  %v2817 = vmul.f32 %v2812, %v2816
  %2818 = vmatprep.subr.mxu0 %v611
  %2819 = vmatpush1.msra.mxu0 %v610
  %2820 = vmatprep.subr.mxu0 %v615
  %2821 = vmatpush1.msra.mxu0 %v614
  %2822 = vmatprep.subr.mxu0 %v619
  %2823 = vmatpush1.msra.mxu0 %v618
  %2824 = vmatprep.subr.mxu0 %v623
  %2825 = vmatpush1.msra.mxu0 %v622
  %2826 = vmatprep.subr.mxu0 %v627
  %2827 = vmatpush1.msra.mxu0 %v626
  %2828 = vmatprep.subr.mxu0 %v631
  %2829 = vmatpush1.msra.mxu0 %v630
  %2830 = vmatprep.subr.mxu0 %v635
  %2831 = vmatpush1.msra.mxu0 %v634
  %2832 = vmatprep.subr.mxu0 %v639
  %2833 = vmatpush1.msra.mxu0 %v638
  %2834 = vmatprep.subr.mxu0 %v643
  %2835 = vmatpush1.msra.mxu0 %v642
  %2836 = vmatprep.subr.mxu0 %v647
  %2837 = vmatpush1.msra.mxu0 %v646
  %2838 = vmatprep.subr.mxu0 %v651
  %2839 = vmatpush1.msra.mxu0 %v650
  %2840 = vmatprep.subr.mxu0 %v655
  %2841 = vmatpush1.msra.mxu0 %v654
  %2842 = vmatprep.subr.mxu0 %v659
  %2843 = vmatpush1.msra.mxu0 %v658
  %2844 = vmatprep.subr.mxu0 %v663
  %2845 = vmatpush1.msra.mxu0 %v662
  %2846 = vmatprep.subr.mxu0 %v667
  %2847 = vmatpush1.msra.mxu0 %v666
  %2848 = vmatprep.subr.mxu0 %v671
  %2849 = vmatpush1.msra.mxu0 %v670
  %2850 = vmatprep.subr.mxu0 %v675
  %2851 = vmatpush1.msra.mxu0 %v674
  %2852 = vmatprep.subr.mxu0 %v679
  %2853 = vmatpush1.msra.mxu0 %v678
  %2854 = vmatprep.subr.mxu0 %v683
  %2855 = vmatpush1.msra.mxu0 %v682
  %2856 = vmatprep.subr.mxu0 %v687
  %2857 = vmatpush1.msra.mxu0 %v686
  %2858 = vmatprep.subr.mxu0 %v691
  %2859 = vmatpush1.msra.mxu0 %v690
  %2860 = vmatprep.subr.mxu0 %v695
  %2861 = vmatpush1.msra.mxu0 %v694
  %2862 = vmatprep.subr.mxu0 %v699
  %2863 = vmatpush1.msra.mxu0 %v698
  %2864 = vmatprep.subr.mxu0 %v703
  %2865 = vmatpush1.msra.mxu0 %v702
  %2866 = vmatprep.subr.mxu0 %v707
  %2867 = vmatpush1.msra.mxu0 %v706
  %2868 = vmatprep.subr.mxu0 %v711
  %2869 = vmatpush1.msra.mxu0 %v710
  %2870 = vmatprep.subr.mxu0 %v715
  %2871 = vmatpush1.msra.mxu0 %v714
  %2872 = vmatprep.subr.mxu0 %v719
  %2873 = vmatpush1.msra.mxu0 %v718
  %2874 = vmatprep.subr.mxu0 %v723
  %2875 = vmatpush1.msra.mxu0 %v722
  %2876 = vmatprep.subr.mxu0 %v727
  %2877 = vmatpush1.msra.mxu0 %v726
  %2878 = vmatprep.subr.mxu0 %v731
  %2879 = vmatpush1.msra.mxu0 %v730
  %2880 = vmatprep.subr.mxu0 %v735
  %2881 = vmatpush1.msra.mxu0 %v734
  %2882 = vmatprep.mubr.f32.mxu0 %v2640
  %2883 = vmatmul.mubr.f32.gmra.mrb[0].mxu0 %v2817
  %v2884 = vpop.f32.mrb[0].mxu0
  %v2885 = vadd.f32 %v743, %v2884
  %v2886 = vpop.f32.mrb[0].mxu0
  %v2887 = vadd.f32 %v747, %v2886
  %2888 = vdwg.mxu0
  %2889 = vmatprep.subr.mxu0 %v613
  %2890 = vmatpush1.msra.mxu0 %v612
  %2891 = vmatprep.subr.mxu0 %v617
  %2892 = vmatpush1.msra.mxu0 %v616
  %2893 = vmatprep.subr.mxu0 %v621
  %2894 = vmatpush1.msra.mxu0 %v620
  %2895 = vmatprep.subr.mxu0 %v625
  %2896 = vmatpush1.msra.mxu0 %v624
  %2897 = vmatprep.subr.mxu0 %v629
  %2898 = vmatpush1.msra.mxu0 %v628
  %2899 = vmatprep.subr.mxu0 %v633
  %2900 = vmatpush1.msra.mxu0 %v632
  %2901 = vmatprep.subr.mxu0 %v637
  %2902 = vmatpush1.msra.mxu0 %v636
  %2903 = vmatprep.subr.mxu0 %v641
  %2904 = vmatpush1.msra.mxu0 %v640
  %2905 = vmatprep.subr.mxu0 %v645
  %2906 = vmatpush1.msra.mxu0 %v644
  %2907 = vmatprep.subr.mxu0 %v649
  %2908 = vmatpush1.msra.mxu0 %v648
  %2909 = vmatprep.subr.mxu0 %v653
  %2910 = vmatpush1.msra.mxu0 %v652
  %2911 = vmatprep.subr.mxu0 %v657
  %2912 = vmatpush1.msra.mxu0 %v656
  %2913 = vmatprep.subr.mxu0 %v661
  %2914 = vmatpush1.msra.mxu0 %v660
  %2915 = vmatprep.subr.mxu0 %v665
  %2916 = vmatpush1.msra.mxu0 %v664
  %2917 = vmatprep.subr.mxu0 %v669
  %2918 = vmatpush1.msra.mxu0 %v668
  %2919 = vmatprep.subr.mxu0 %v673
  %2920 = vmatpush1.msra.mxu0 %v672
  %2921 = vmatprep.subr.mxu0 %v677
  %2922 = vmatpush1.msra.mxu0 %v676
  %2923 = vmatprep.subr.mxu0 %v681
  %2924 = vmatpush1.msra.mxu0 %v680
  %2925 = vmatprep.subr.mxu0 %v685
  %2926 = vmatpush1.msra.mxu0 %v684
  %2927 = vmatprep.subr.mxu0 %v689
  %2928 = vmatpush1.msra.mxu0 %v688
  %2929 = vmatprep.subr.mxu0 %v693
  %2930 = vmatpush1.msra.mxu0 %v692
  %2931 = vmatprep.subr.mxu0 %v697
  %2932 = vmatpush1.msra.mxu0 %v696
  %2933 = vmatprep.subr.mxu0 %v701
  %2934 = vmatpush1.msra.mxu0 %v700
  %2935 = vmatprep.subr.mxu0 %v705
  %2936 = vmatpush1.msra.mxu0 %v704
  %2937 = vmatprep.subr.mxu0 %v709
  %2938 = vmatpush1.msra.mxu0 %v708
  %2939 = vmatprep.subr.mxu0 %v713
  %2940 = vmatpush1.msra.mxu0 %v712
  %2941 = vmatprep.subr.mxu0 %v717
  %2942 = vmatpush1.msra.mxu0 %v716
  %2943 = vmatprep.subr.mxu0 %v721
  %2944 = vmatpush1.msra.mxu0 %v720
  %2945 = vmatprep.subr.mxu0 %v725
  %2946 = vmatpush1.msra.mxu0 %v724
  %2947 = vmatprep.subr.mxu0 %v729
  %2948 = vmatpush1.msra.mxu0 %v728
  %2949 = vmatprep.subr.mxu0 %v733
  %2950 = vmatpush1.msra.mxu0 %v732
  %2951 = vmatprep.subr.mxu0 %v737
  %2952 = vmatpush1.msra.mxu0 %v736
  %2953 = vmatprep.mubr.f32.mxu0 %v2640
  %2954 = vmatmul.mubr.f32.gmra.mrb[0].mxu0 %v2817
  %v2955 = vpop.f32.mrb[0].mxu0
  %v2956 = vadd.f32 %v751, %v2955
  %v2957 = vpop.f32.mrb[0].mxu0
  %v2958 = vadd.f32 %v755, %v2957
  %2959 = vdwg.mxu0
  %v2960 = vxor.u32 %v2885, 2147483648
  %v2961 = vmul.f32 %v2960, 1.442695
  %v2962 = vpow.pop %v2961
  %v2963 = vadd.f32 %v2962, 1.0
  %v2964 = vrcp.pop %v2963
  %v2965 = vmul.f32 1.0, %v2964
  %v2966 = vxor.u32 %v2887, 2147483648
  %v2967 = vmul.f32 %v2966, 1.442695
  %v2968 = vpow.pop %v2967
  %v2969 = vadd.f32 %v2968, 1.0
  %v2970 = vrcp.pop %v2969
  %v2971 = vmul.f32 1.0, %v2970
  %v2972 = vtanh.pop %v2956
  %v2973 = vxor.u32 %v2958, 2147483648
  %v2974 = vmul.f32 %v2973, 1.442695
  %v2975 = vpow.pop %v2974
  %v2976 = vadd.f32 %v2975, 1.0
  %v2977 = vrcp.pop %v2976
  %v2978 = vmul.f32 1.0, %v2977
  %v2979 = vmul.f32 %v2971, %v2638
  %v2980 = vmul.f32 %v2965, %v2972
  %v2981 = vadd.f32 %v2979, %v2980
  %v2982 = vtanh.pop %v2981
  %v2983 = vmul.f32 %v2978, %v2982
  %s2984 = smul.u32 7, 4
  %s2985 = smul.addr %s2984, 8
  %s2986 = scalar_lea.vmem [#allocation2], %s2985
  %v2987 = vld [vmem:[%s2986] sm:$0xff]
  %v2988 = vld [vmem:[%s2986 + $0x8] sm:$0xff]
  %v2989 = vld [vmem:[%s2986 + $0x10] sm:$0xff]
  %v2990 = vld [vmem:[%s2986 + $0x18] sm:$0xff]
  %2991 = vmatprep.subr.mxu0 %v377
  %2992 = vmatpush1.msra.mxu0 %v376
  %2993 = vmatprep.subr.mxu0 %v381
  %2994 = vmatpush1.msra.mxu0 %v380
  %2995 = vmatprep.subr.mxu0 %v385
  %2996 = vmatpush1.msra.mxu0 %v384
  %2997 = vmatprep.subr.mxu0 %v389
  %2998 = vmatpush1.msra.mxu0 %v388
  %2999 = vmatprep.subr.mxu0 %v393
  %3000 = vmatpush1.msra.mxu0 %v392
  %3001 = vmatprep.subr.mxu0 %v397
  %3002 = vmatpush1.msra.mxu0 %v396
  %3003 = vmatprep.subr.mxu0 %v401
  %3004 = vmatpush1.msra.mxu0 %v400
  %3005 = vmatprep.subr.mxu0 %v405
  %3006 = vmatpush1.msra.mxu0 %v404
  %3007 = vmatprep.subr.mxu0 %v409
  %3008 = vmatpush1.msra.mxu0 %v408
  %3009 = vmatprep.subr.mxu0 %v413
  %3010 = vmatpush1.msra.mxu0 %v412
  %3011 = vmatprep.subr.mxu0 %v417
  %3012 = vmatpush1.msra.mxu0 %v416
  %3013 = vmatprep.subr.mxu0 %v421
  %3014 = vmatpush1.msra.mxu0 %v420
  %3015 = vmatprep.subr.mxu0 %v425
  %3016 = vmatpush1.msra.mxu0 %v424
  %3017 = vmatprep.subr.mxu0 %v429
  %3018 = vmatpush1.msra.mxu0 %v428
  %3019 = vmatprep.subr.mxu0 %v433
  %3020 = vmatpush1.msra.mxu0 %v432
  %3021 = vmatprep.subr.mxu0 %v437
  %3022 = vmatpush1.msra.mxu0 %v436
  %3023 = vmatprep.subr.mxu0 0.0
  %3024 = vmatpush1.msra.mxu0 0.0
  %3025 = vmatprep.subr.mxu0 0.0
  %3026 = vmatpush1.msra.mxu0 0.0
  %3027 = vmatprep.subr.mxu0 0.0
  %3028 = vmatpush1.msra.mxu0 0.0
  %3029 = vmatprep.subr.mxu0 0.0
  %3030 = vmatpush1.msra.mxu0 0.0
  %3031 = vmatprep.subr.mxu0 0.0
  %3032 = vmatpush1.msra.mxu0 0.0
  %3033 = vmatprep.subr.mxu0 0.0
  %3034 = vmatpush1.msra.mxu0 0.0
  %3035 = vmatprep.subr.mxu0 0.0
  %3036 = vmatpush1.msra.mxu0 0.0
  %3037 = vmatprep.subr.mxu0 0.0
  %3038 = vmatpush1.msra.mxu0 0.0
  %3039 = vmatprep.subr.mxu0 0.0
  %3040 = vmatpush1.msra.mxu0 0.0
  %3041 = vmatprep.subr.mxu0 0.0
  %3042 = vmatpush1.msra.mxu0 0.0
  %3043 = vmatprep.subr.mxu0 0.0
  %3044 = vmatpush1.msra.mxu0 0.0
  %3045 = vmatprep.subr.mxu0 0.0
  %3046 = vmatpush1.msra.mxu0 0.0
  %3047 = vmatprep.subr.mxu0 0.0
  %3048 = vmatpush1.msra.mxu0 0.0
  %3049 = vmatprep.subr.mxu0 0.0
  %3050 = vmatpush1.msra.mxu0 0.0
  %3051 = vmatprep.subr.mxu0 0.0
  %3052 = vmatpush1.msra.mxu0 0.0
  %3053 = vmatprep.subr.mxu0 0.0
  %3054 = vmatpush1.msra.mxu0 0.0
  %3055 = vmatprep.mubr.f32.mxu0 0.0
  %3056 = vmatmul.mubr.f32.gmra.mrb[0].mxu0 %v2817
  %v3057 = vpop.f32.mrb[0].mxu0
  %v3058 = vadd.f32 0.0, %v3057
  %v3059 = vpop.f32.mrb[0].mxu0
  %v3060 = vadd.f32 0.0, %v3059
  %3061 = vdwg.mxu0
  %3062 = vmatprep.subr.mxu0 %v379
  %3063 = vmatpush1.msra.mxu0 %v378
  %3064 = vmatprep.subr.mxu0 %v383
  %3065 = vmatpush1.msra.mxu0 %v382
  %3066 = vmatprep.subr.mxu0 %v387
  %3067 = vmatpush1.msra.mxu0 %v386
  %3068 = vmatprep.subr.mxu0 %v391
  %3069 = vmatpush1.msra.mxu0 %v390
  %3070 = vmatprep.subr.mxu0 %v395
  %3071 = vmatpush1.msra.mxu0 %v394
  %3072 = vmatprep.subr.mxu0 %v399
  %3073 = vmatpush1.msra.mxu0 %v398
  %3074 = vmatprep.subr.mxu0 %v403
  %3075 = vmatpush1.msra.mxu0 %v402
  %3076 = vmatprep.subr.mxu0 %v407
  %3077 = vmatpush1.msra.mxu0 %v406
  %3078 = vmatprep.subr.mxu0 %v411
  %3079 = vmatpush1.msra.mxu0 %v410
  %3080 = vmatprep.subr.mxu0 %v415
  %3081 = vmatpush1.msra.mxu0 %v414
  %3082 = vmatprep.subr.mxu0 %v419
  %3083 = vmatpush1.msra.mxu0 %v418
  %3084 = vmatprep.subr.mxu0 %v423
  %3085 = vmatpush1.msra.mxu0 %v422
  %3086 = vmatprep.subr.mxu0 %v427
  %3087 = vmatpush1.msra.mxu0 %v426
  %3088 = vmatprep.subr.mxu0 %v431
  %3089 = vmatpush1.msra.mxu0 %v430
  %3090 = vmatprep.subr.mxu0 %v435
  %3091 = vmatpush1.msra.mxu0 %v434
  %3092 = vmatprep.subr.mxu0 %v439
  %3093 = vmatpush1.msra.mxu0 %v438
  %3094 = vmatprep.subr.mxu0 0.0
  %3095 = vmatpush1.msra.mxu0 0.0
  %3096 = vmatprep.subr.mxu0 0.0
  %3097 = vmatpush1.msra.mxu0 0.0
  %3098 = vmatprep.subr.mxu0 0.0
  %3099 = vmatpush1.msra.mxu0 0.0
  %3100 = vmatprep.subr.mxu0 0.0
  %3101 = vmatpush1.msra.mxu0 0.0
  %3102 = vmatprep.subr.mxu0 0.0
  %3103 = vmatpush1.msra.mxu0 0.0
  %3104 = vmatprep.subr.mxu0 0.0
  %3105 = vmatpush1.msra.mxu0 0.0
  %3106 = vmatprep.subr.mxu0 0.0
  %3107 = vmatpush1.msra.mxu0 0.0
  %3108 = vmatprep.subr.mxu0 0.0
  %3109 = vmatpush1.msra.mxu0 0.0
  %3110 = vmatprep.subr.mxu0 0.0
  %3111 = vmatpush1.msra.mxu0 0.0
  %3112 = vmatprep.subr.mxu0 0.0
  %3113 = vmatpush1.msra.mxu0 0.0
  %3114 = vmatprep.subr.mxu0 0.0
  %3115 = vmatpush1.msra.mxu0 0.0
  %3116 = vmatprep.subr.mxu0 0.0
  %3117 = vmatpush1.msra.mxu0 0.0
  %3118 = vmatprep.subr.mxu0 0.0
  %3119 = vmatpush1.msra.mxu0 0.0
  %3120 = vmatprep.subr.mxu0 0.0
  %3121 = vmatpush1.msra.mxu0 0.0
  %3122 = vmatprep.subr.mxu0 0.0
  %3123 = vmatpush1.msra.mxu0 0.0
  %3124 = vmatprep.subr.mxu0 0.0
  %3125 = vmatpush1.msra.mxu0 0.0
  %3126 = vmatprep.mubr.f32.mxu0 0.0
  %3127 = vmatmul.mubr.f32.gmra.mrb[0].mxu0 %v2817
  %v3128 = vpop.f32.mrb[0].mxu0
  %v3129 = vadd.f32 0.0, %v3128
  %v3130 = vpop.f32.mrb[0].mxu0
  %v3131 = vadd.f32 0.0, %v3130
  %3132 = vdwg.mxu0
  %v3133 = vadd.f32 %v2987, %v3058
  %v3134 = vadd.f32 %v2988, %v3060
  %v3135 = vadd.f32 %v2989, %v3129
  %v3136 = vadd.f32 %v2990, %v3131
  %v3137 = vxor.u32 %v3133, 2147483648
  %v3138 = vmul.f32 %v3137, 1.442695
  %v3139 = vpow.pop %v3138
  %v3140 = vadd.f32 %v3139, 1.0
  %v3141 = vrcp.pop %v3140
  %v3142 = vmul.f32 1.0, %v3141
  %v3143 = vxor.u32 %v3134, 2147483648
  %v3144 = vmul.f32 %v3143, 1.442695
  %v3145 = vpow.pop %v3144
  %v3146 = vadd.f32 %v3145, 1.0
  %v3147 = vrcp.pop %v3146
  %v3148 = vmul.f32 1.0, %v3147
  %v3149 = vtanh.pop %v3135
  %v3150 = vxor.u32 %v3136, 2147483648
  %v3151 = vmul.f32 %v3150, 1.442695
  %v3152 = vpow.pop %v3151
  %v3153 = vadd.f32 %v3152, 1.0
  %v3154 = vrcp.pop %v3153
  %v3155 = vmul.f32 1.0, %v3154
  %v3156 = vmul.f32 %v3148, %v2815
  %v3157 = vmul.f32 %v3142, %v3149
  %v3158 = vadd.f32 %v3156, %v3157
  %v3159 = vtanh.pop %v3158
  %v3160 = vmul.f32 %v3155, %v3159
  %3161 = vmatprep.subr.mxu0 %v611
  %3162 = vmatpush1.msra.mxu0 %v610
  %3163 = vmatprep.subr.mxu0 %v615
  %3164 = vmatpush1.msra.mxu0 %v614
  %3165 = vmatprep.subr.mxu0 %v619
  %3166 = vmatpush1.msra.mxu0 %v618
  %3167 = vmatprep.subr.mxu0 %v623
  %3168 = vmatpush1.msra.mxu0 %v622
  %3169 = vmatprep.subr.mxu0 %v627
  %3170 = vmatpush1.msra.mxu0 %v626
  %3171 = vmatprep.subr.mxu0 %v631
  %3172 = vmatpush1.msra.mxu0 %v630
  %3173 = vmatprep.subr.mxu0 %v635
  %3174 = vmatpush1.msra.mxu0 %v634
  %3175 = vmatprep.subr.mxu0 %v639
  %3176 = vmatpush1.msra.mxu0 %v638
  %3177 = vmatprep.subr.mxu0 %v643
  %3178 = vmatpush1.msra.mxu0 %v642
  %3179 = vmatprep.subr.mxu0 %v647
  %3180 = vmatpush1.msra.mxu0 %v646
  %3181 = vmatprep.subr.mxu0 %v651
  %3182 = vmatpush1.msra.mxu0 %v650
  %3183 = vmatprep.subr.mxu0 %v655
  %3184 = vmatpush1.msra.mxu0 %v654
  %3185 = vmatprep.subr.mxu0 %v659
  %3186 = vmatpush1.msra.mxu0 %v658
  %3187 = vmatprep.subr.mxu0 %v663
  %3188 = vmatpush1.msra.mxu0 %v662
  %3189 = vmatprep.subr.mxu0 %v667
  %3190 = vmatpush1.msra.mxu0 %v666
  %3191 = vmatprep.subr.mxu0 %v671
  %3192 = vmatpush1.msra.mxu0 %v670
  %3193 = vmatprep.subr.mxu0 %v675
  %3194 = vmatpush1.msra.mxu0 %v674
  %3195 = vmatprep.subr.mxu0 %v679
  %3196 = vmatpush1.msra.mxu0 %v678
  %3197 = vmatprep.subr.mxu0 %v683
  %3198 = vmatpush1.msra.mxu0 %v682
  %3199 = vmatprep.subr.mxu0 %v687
  %3200 = vmatpush1.msra.mxu0 %v686
  %3201 = vmatprep.subr.mxu0 %v691
  %3202 = vmatpush1.msra.mxu0 %v690
  %3203 = vmatprep.subr.mxu0 %v695
  %3204 = vmatpush1.msra.mxu0 %v694
  %3205 = vmatprep.subr.mxu0 %v699
  %3206 = vmatpush1.msra.mxu0 %v698
  %3207 = vmatprep.subr.mxu0 %v703
  %3208 = vmatpush1.msra.mxu0 %v702
  %3209 = vmatprep.subr.mxu0 %v707
  %3210 = vmatpush1.msra.mxu0 %v706
  %3211 = vmatprep.subr.mxu0 %v711
  %3212 = vmatpush1.msra.mxu0 %v710
  %3213 = vmatprep.subr.mxu0 %v715
  %3214 = vmatpush1.msra.mxu0 %v714
  %3215 = vmatprep.subr.mxu0 %v719
  %3216 = vmatpush1.msra.mxu0 %v718
  %3217 = vmatprep.subr.mxu0 %v723
  %3218 = vmatpush1.msra.mxu0 %v722
  %3219 = vmatprep.subr.mxu0 %v727
  %3220 = vmatpush1.msra.mxu0 %v726
  %3221 = vmatprep.subr.mxu0 %v731
  %3222 = vmatpush1.msra.mxu0 %v730
  %3223 = vmatprep.subr.mxu0 %v735
  %3224 = vmatpush1.msra.mxu0 %v734
  %3225 = vmatprep.mubr.f32.mxu0 %v2983
  %3226 = vmatmul.mubr.f32.gmra.mrb[0].mxu0 %v3160
  %v3227 = vpop.f32.mrb[0].mxu0
  %v3228 = vadd.f32 %v743, %v3227
  %v3229 = vpop.f32.mrb[0].mxu0
  %v3230 = vadd.f32 %v747, %v3229
  %3231 = vdwg.mxu0
  %3232 = vmatprep.subr.mxu0 %v613
  %3233 = vmatpush1.msra.mxu0 %v612
  %3234 = vmatprep.subr.mxu0 %v617
  %3235 = vmatpush1.msra.mxu0 %v616
  %3236 = vmatprep.subr.mxu0 %v621
  %3237 = vmatpush1.msra.mxu0 %v620
  %3238 = vmatprep.subr.mxu0 %v625
  %3239 = vmatpush1.msra.mxu0 %v624
  %3240 = vmatprep.subr.mxu0 %v629
  %3241 = vmatpush1.msra.mxu0 %v628
  %3242 = vmatprep.subr.mxu0 %v633
  %3243 = vmatpush1.msra.mxu0 %v632
  %3244 = vmatprep.subr.mxu0 %v637
  %3245 = vmatpush1.msra.mxu0 %v636
  %3246 = vmatprep.subr.mxu0 %v641
  %3247 = vmatpush1.msra.mxu0 %v640
  %3248 = vmatprep.subr.mxu0 %v645
  %3249 = vmatpush1.msra.mxu0 %v644
  %3250 = vmatprep.subr.mxu0 %v649
  %3251 = vmatpush1.msra.mxu0 %v648
  %3252 = vmatprep.subr.mxu0 %v653
  %3253 = vmatpush1.msra.mxu0 %v652
  %3254 = vmatprep.subr.mxu0 %v657
  %3255 = vmatpush1.msra.mxu0 %v656
  %3256 = vmatprep.subr.mxu0 %v661
  %3257 = vmatpush1.msra.mxu0 %v660
  %3258 = vmatprep.subr.mxu0 %v665
  %3259 = vmatpush1.msra.mxu0 %v664
  %3260 = vmatprep.subr.mxu0 %v669
  %3261 = vmatpush1.msra.mxu0 %v668
  %3262 = vmatprep.subr.mxu0 %v673
  %3263 = vmatpush1.msra.mxu0 %v672
  %3264 = vmatprep.subr.mxu0 %v677
  %3265 = vmatpush1.msra.mxu0 %v676
  %3266 = vmatprep.subr.mxu0 %v681
  %3267 = vmatpush1.msra.mxu0 %v680
  %3268 = vmatprep.subr.mxu0 %v685
  %3269 = vmatpush1.msra.mxu0 %v684
  %3270 = vmatprep.subr.mxu0 %v689
  %3271 = vmatpush1.msra.mxu0 %v688
  %3272 = vmatprep.subr.mxu0 %v693
  %3273 = vmatpush1.msra.mxu0 %v692
  %3274 = vmatprep.subr.mxu0 %v697
  %3275 = vmatpush1.msra.mxu0 %v696
  %3276 = vmatprep.subr.mxu0 %v701
  %3277 = vmatpush1.msra.mxu0 %v700
  %3278 = vmatprep.subr.mxu0 %v705
  %3279 = vmatpush1.msra.mxu0 %v704
  %3280 = vmatprep.subr.mxu0 %v709
  %3281 = vmatpush1.msra.mxu0 %v708
  %3282 = vmatprep.subr.mxu0 %v713
  %3283 = vmatpush1.msra.mxu0 %v712
  %3284 = vmatprep.subr.mxu0 %v717
  %3285 = vmatpush1.msra.mxu0 %v716
  %3286 = vmatprep.subr.mxu0 %v721
  %3287 = vmatpush1.msra.mxu0 %v720
  %3288 = vmatprep.subr.mxu0 %v725
  %3289 = vmatpush1.msra.mxu0 %v724
  %3290 = vmatprep.subr.mxu0 %v729
  %3291 = vmatpush1.msra.mxu0 %v728
  %3292 = vmatprep.subr.mxu0 %v733
  %3293 = vmatpush1.msra.mxu0 %v732
  %3294 = vmatprep.subr.mxu0 %v737
  %3295 = vmatpush1.msra.mxu0 %v736
  %3296 = vmatprep.mubr.f32.mxu0 %v2983
  %3297 = vmatmul.mubr.f32.gmra.mrb[0].mxu0 %v3160
  %v3298 = vpop.f32.mrb[0].mxu0
  %v3299 = vadd.f32 %v751, %v3298
  %v3300 = vpop.f32.mrb[0].mxu0
  %v3301 = vadd.f32 %v755, %v3300
  %3302 = vdwg.mxu0
  %v3303 = vxor.u32 %v3228, 2147483648
  %v3304 = vmul.f32 %v3303, 1.442695
  %v3305 = vpow.pop %v3304
  %v3306 = vadd.f32 %v3305, 1.0
  %v3307 = vrcp.pop %v3306
  %v3308 = vmul.f32 1.0, %v3307
  %v3309 = vxor.u32 %v3230, 2147483648
  %v3310 = vmul.f32 %v3309, 1.442695
  %v3311 = vpow.pop %v3310
  %v3312 = vadd.f32 %v3311, 1.0
  %v3313 = vrcp.pop %v3312
  %v3314 = vmul.f32 1.0, %v3313
  %v3315 = vtanh.pop %v3299
  %v3316 = vxor.u32 %v3301, 2147483648
  %v3317 = vmul.f32 %v3316, 1.442695
  %v3318 = vpow.pop %v3317
  %v3319 = vadd.f32 %v3318, 1.0
  %v3320 = vrcp.pop %v3319
  %v3321 = vmul.f32 1.0, %v3320
  %v3322 = vmul.f32 %v3314, %v2981
  %v3323 = vmul.f32 %v3308, %v3315
  %v3324 = vadd.f32 %v3322, %v3323
  %v3325 = vtanh.pop %v3324
  %v3326 = vmul.f32 %v3321, %v3325
  %v3327 = vld [vmem:[%s6] sm:$0xff]
  %v3328 = vld [vmem:[%s6 + $0x8] sm:$0xff]
  %v3329 = vld [vmem:[%s6 + $0x10] sm:$0xff]
  %v3330 = vld [vmem:[%s6 + $0x18] sm:$0xff]
  %v3331 = vld [vmem:[%s6 + $0x20] sm:$0xff]
  %v3332 = vld [vmem:[%s6 + $0x28] sm:$0xff]
  %v3333 = vld [vmem:[%s6 + $0x30] sm:$0xff]
  %v3334 = vld [vmem:[%s6 + $0x38] sm:$0xff]
  %v3335 = vld [vmem:[%s6 + $0x40] sm:$0xff]
  %v3336 = vld [vmem:[%s6 + $0x48] sm:$0xff]
  %v3337 = vld [vmem:[%s6 + $0x50] sm:$0xff]
  %v3338 = vld [vmem:[%s6 + $0x58] sm:$0xff]
  %v3339 = vld [vmem:[%s6 + $0x60] sm:$0xff]
  %v3340 = vld [vmem:[%s6 + $0x68] sm:$0xff]
  %v3341 = vld [vmem:[%s6 + $0x70] sm:$0xff]
  %v3342 = vld [vmem:[%s6 + $0x78] sm:$0xff]
  %v3343 = vld [vmem:[#allocation3] sm:$0x1]
  %v3345 = vlaneseq
  %v3346 = vshrl.u32 %v3345, 7
  %v3347 = vsub.s32 0, %v3346
  %v3348 = vrot.slane %v3343, %v3347
  %3350 = vmatprep.subr.mxu0 0.0
  %3351 = vmatpush1.msra.mxu0 %v3327
  %3352 = vmatprep.subr.mxu0 0.0
  %3353 = vmatpush1.msra.mxu0 %v3328
  %3354 = vmatprep.subr.mxu0 0.0
  %3355 = vmatpush1.msra.mxu0 %v3329
  %3356 = vmatprep.subr.mxu0 0.0
  %3357 = vmatpush1.msra.mxu0 %v3330
  %3358 = vmatprep.subr.mxu0 0.0
  %3359 = vmatpush1.msra.mxu0 %v3331
  %3360 = vmatprep.subr.mxu0 0.0
  %3361 = vmatpush1.msra.mxu0 %v3332
  %3362 = vmatprep.subr.mxu0 0.0
  %3363 = vmatpush1.msra.mxu0 %v3333
  %3364 = vmatprep.subr.mxu0 0.0
  %3365 = vmatpush1.msra.mxu0 %v3334
  %3366 = vmatprep.subr.mxu0 0.0
  %3367 = vmatpush1.msra.mxu0 %v3335
  %3368 = vmatprep.subr.mxu0 0.0
  %3369 = vmatpush1.msra.mxu0 %v3336
  %3370 = vmatprep.subr.mxu0 0.0
  %3371 = vmatpush1.msra.mxu0 %v3337
  %3372 = vmatprep.subr.mxu0 0.0
  %3373 = vmatpush1.msra.mxu0 %v3338
  %3374 = vmatprep.subr.mxu0 0.0
  %3375 = vmatpush1.msra.mxu0 %v3339
  %3376 = vmatprep.subr.mxu0 0.0
  %3377 = vmatpush1.msra.mxu0 %v3340
  %3378 = vmatprep.subr.mxu0 0.0
  %3379 = vmatpush1.msra.mxu0 %v3341
  %3380 = vmatprep.subr.mxu0 0.0
  %3381 = vmatpush1.msra.mxu0 %v3342
  %3382 = vmatprep.subr.mxu0 0.0
  %3383 = vmatpush1.msra.mxu0 0.0
  %3384 = vmatprep.subr.mxu0 0.0
  %3385 = vmatpush1.msra.mxu0 0.0
  %3386 = vmatprep.subr.mxu0 0.0
  %3387 = vmatpush1.msra.mxu0 0.0
  %3388 = vmatprep.subr.mxu0 0.0
  %3389 = vmatpush1.msra.mxu0 0.0
  %3390 = vmatprep.subr.mxu0 0.0
  %3391 = vmatpush1.msra.mxu0 0.0
  %3392 = vmatprep.subr.mxu0 0.0
  %3393 = vmatpush1.msra.mxu0 0.0
  %3394 = vmatprep.subr.mxu0 0.0
  %3395 = vmatpush1.msra.mxu0 0.0
  %3396 = vmatprep.subr.mxu0 0.0
  %3397 = vmatpush1.msra.mxu0 0.0
  %3398 = vmatprep.subr.mxu0 0.0
  %3399 = vmatpush1.msra.mxu0 0.0
  %3400 = vmatprep.subr.mxu0 0.0
  %3401 = vmatpush1.msra.mxu0 0.0
  %3402 = vmatprep.subr.mxu0 0.0
  %3403 = vmatpush1.msra.mxu0 0.0
  %3404 = vmatprep.subr.mxu0 0.0
  %3405 = vmatpush1.msra.mxu0 0.0
  %3406 = vmatprep.subr.mxu0 0.0
  %3407 = vmatpush1.msra.mxu0 0.0
  %3408 = vmatprep.subr.mxu0 0.0
  %3409 = vmatpush1.msra.mxu0 0.0
  %3410 = vmatprep.subr.mxu0 0.0
  %3411 = vmatpush1.msra.mxu0 0.0
  %3412 = vmatprep.subr.mxu0 0.0
  %3413 = vmatpush1.msra.mxu0 0.0
  %3414 = vmatprep.mubr.f32.mxu0 0.0
  %3415 = vmatmul.mubr.f32.gmra.mrb[0].mxu0 %v3326
  %v3416 = vpop.f32.mrb[0].mxu0
  %v3417 = vadd.f32 %v3348, %v3416
  %v3418 = vpop.f32.mrb[0].mxu0
  %3419 = vdwg.mxu0
  %vm3420 = vcmask 7168
  %3421 = vst.msk [vmem:[%s8] sm:$0xff] %vm3420, %v3417
  // Predicated region
  $region34: #{tls_lstm_forward.1} parent=0 // pred_check
    _
  $region35: #{tls_lstm_forward.1} parent=0 // pred_check_branch
    %3423 = sbr.rel (0) target = $region37
  $region36: #{tls_lstm_forward.1} parent=0 // pred_region
    _
  $region37: #{tls_lstm_forward.1} parent=0 // pred_fallthru
    _
  // Predicated region
  $region38: #{tls_lstm_forward.1} parent=0 // pred_check
    _
  $region39: #{tls_lstm_forward.1} parent=0 // pred_check_branch
    %3425 = sbr.rel (0) target = $region41
  $region40: #{tls_lstm_forward.1} parent=0 // pred_region
    _
  $region41: #{tls_lstm_forward.1} parent=0 // pred_fallthru
    _

</llo_original>
